<compile_context>
chip_gen: v7x
topology: tpu7x:2x2x1
jax: 0.10.0
libtpu: 0.0.40
codegen_flags: <defaults>
</compile_context>

<pallas_src>
import functools

import jax
import jax.numpy as jnp
from jax.experimental import pallas as pl
from jax.experimental.pallas import tpu as pltpu

KERNEL_SIZE = 3
KVOL = KERNEL_SIZE ** 3  # 27 kernel offsets


# ---------------------------------------------------------------------------
# Fused Pallas kernel: all 6 convs + residual subtract + final add, per batch element
# ---------------------------------------------------------------------------
def _cbp_kernel(x_ext_ref, x_pp_ref, mask_ref,
                w0_ref, w1_ref, w2_ref, w3_ref, w4_ref, w5_ref,
                o_ref, big_buf, small_buf,
                *, wp, p, dp, ext, times):
    """One batch element of CopyBackProjection.

    Refs:
      x_ext_ref : (1, Cin,  Le)  bf16  zero-padded volume, flattened (Dp*Hp*Wp), extended by
                                       lane-aligned zero margins so every shifted window is a
                                       static in-bounds slice.
      x_pp_ref  : (1, Cin,  DP)  f32   x on the padded-plane layout (interior depths only).
      mask_ref  : (1, DP)        bf16  1.0 at in-plane interior voxels, 0.0 at plane borders.
      w*_ref    : (27, Co, Ci)   bf16  conv weights, offset-major (kd, kh, kw).
      o_ref     : (1, Cout, DP)  f32   output, padded-plane layout (borders garbage).
      big_buf   : (Cout, Le)     bf16  VMEM scratch for Cout-wide intermediates.
      small_buf : (Cin,  Le)     bf16  VMEM scratch for Cin-wide intermediates.
    """
    base = ext + p                       # start of the interior-depth region (lane-aligned)
    mask = mask_ref[...]                 # (1, DP)
    x_ext = x_ext_ref[0]                 # (Cin, Le) bf16
    x_pp = x_pp_ref[0]                   # (Cin, DP) f32

    def conv27(src, w_ref, cout_l):
        """3x3x3 conv: 27 shifted static lane-slices, MXU accumulate in f32."""
        acc = jnp.zeros((cout_l, dp), jnp.float32)
        for kd in range(KERNEL_SIZE):
            for kh in range(KERNEL_SIZE):
                for kw in range(KERNEL_SIZE):
                    s = ext + kd * p + (kh - 1) * wp + (kw - 1)
                    acc = acc + jnp.dot(
                        w_ref[kd * 9 + kh * 3 + kw], src[:, s:s + dp],
                        preferred_element_type=jnp.float32)
        return acc

    def store_interior(buf, vals_f32):
        """Zero the garbage plane borders and write into the buffer's interior region."""
        buf[:, base:base + dp] = vals_f32.astype(jnp.bfloat16) * mask

    cin = x_pp.shape[0]
    cout = o_ref.shape[1]

    # All padding / extension regions of the activation buffers must hold zeros.
    big_buf[...] = jnp.zeros_like(big_buf)
    small_buf[...] = jnp.zeros_like(small_buf)

    # Downsample path.  csd0's channel-tiled input (x repeated `times` times) was folded
    # into w0 in the wrapper, so it consumes x directly.
    d0 = conv27(x_ext, w0_ref, cout)                 # csd0
    store_interior(big_buf, d0)
    d1 = conv27(big_buf[...], w1_ref, cin)           # csd1
    store_interior(small_buf, d1)
    d2 = conv27(small_buf[...], w2_ref, cin)         # csd2
    store_interior(small_buf, x_pp - d2)             # residual = x - downsampled

    # Upsample path.
    u0 = conv27(small_buf[...], w3_ref, cin)         # csu0
    store_interior(small_buf, u0)
    u1 = conv27(small_buf[...], w4_ref, cout)        # csu1
    store_interior(big_buf, u1)
    u2 = conv27(big_buf[...], w5_ref, cout)          # csu2

    # out = upsampled + residual   (upsampled = x tiled `times` along channels, kept in f32)
    if times == 1:
        up = x_pp
    else:
        up = jnp.concatenate([x_pp] * times, axis=0)
    o_ref[0] = up + u2


# ---------------------------------------------------------------------------
# Parameters and forward pass
# ---------------------------------------------------------------------------
def init_params(key, in_channels, out_channels):
    """Deterministic synthetic weights; Minkowski kernels are (kernel_volume, Cin, Cout)."""
    keys = jax.random.split(key, 6)

    def mk(k, cin, cout):
        scale = 1.0 / (KVOL * cin) ** 0.5
        return jax.random.normal(k, (KVOL, cin, cout), jnp.float32) * scale

    return dict(
        csd0=mk(keys[0], out_channels, out_channels),
        csd1=mk(keys[1], out_channels, in_channels),
        csd2=mk(keys[2], in_channels, in_channels),
        csu0=mk(keys[3], in_channels, in_channels),
        csu1=mk(keys[4], in_channels, out_channels),
        csu2=mk(keys[5], out_channels, out_channels),
    )


def copy_back_projection(x, params, *, in_channels, out_channels):
    """Forward pass of CopyBackProjection on a dense voxel grid. x: (B, D, H, W, Cin) f32."""
    B, D, H, W, C = x.shape
    assert C == in_channels
    assert out_channels % in_channels == 0
    times = out_channels // in_channels

    Dp, Hp, Wp = D + 2, H + 2, W + 2
    P = Hp * Wp
    DP = D * P

    # Lane-aligned front/back extensions of the flattened padded volume so that
    #  (a) every shifted conv window is an in-bounds static slice and
    #  (b) the interior write region starts at a multiple of 128 lanes.
    ext = (Wp + 1) + (-(Wp + 1 + P)) % 128
    tail = ext + Dp * P + (Wp + 1)
    ext2 = (Wp + 1) + (-tail) % 128
    Le = ext + Dp * P + ext2                       # multiple of 128

    # Channel-major, zero-padded, flattened volume.
    x_cm = jnp.transpose(x, (0, 4, 1, 2, 3))                          # (B, Cin, D, H, W)
    xp = jnp.pad(x_cm, ((0, 0), (0, 0), (1, 1), (1, 1), (1, 1)))      # (B, Cin, Dp, Hp, Wp)
    xf = xp.reshape(B, in_channels, Dp * P)
    x_ext = jnp.pad(xf, ((0, 0), (0, 0), (ext, ext2))).astype(jnp.bfloat16)   # (B, Cin, Le)
    x_pp = xf[:, :, P:P + DP]                                         # (B, Cin, DP) f32

    # In-plane interior mask (zeros at padded-plane borders), same for every depth slice.
    m2d = jnp.pad(jnp.ones((H, W), jnp.bfloat16), ((1, 1), (1, 1)))   # (Hp, Wp)
    mask = jnp.tile(m2d.reshape(-1), (D,)).reshape(1, DP)             # (1, DP) bf16

    # Weights: fold the channel tiling of `upsampled` into csd0 (sum over repeated input
    # channel groups), then transpose every kernel to (27, Cout_l, Cin_l) bf16.
    w0 = params["csd0"].reshape(KVOL, times, in_channels, out_channels).sum(axis=1)

    def prep(w):
        return jnp.transpose(w, (0, 2, 1)).astype(jnp.bfloat16)

    ws = [prep(w0), prep(params["csd1"]), prep(params["csd2"]),
          prep(params["csu0"]), prep(params["csu1"]), prep(params["csu2"])]

    kernel = functools.partial(_cbp_kernel, wp=Wp, p=P, dp=DP, ext=ext, times=times)

    in_specs = [
        pl.BlockSpec((1, in_channels, Le), lambda b: (b, 0, 0)),
        pl.BlockSpec((1, in_channels, DP), lambda b: (b, 0, 0)),
        pl.BlockSpec((1, DP), lambda b: (0, 0)),
    ] + [pl.BlockSpec(w.shape, lambda b: (0, 0, 0)) for w in ws]

    out = pl.pallas_call(
        kernel,
        out_shape=jax.ShapeDtypeStruct((B, out_channels, DP), jnp.float32),
        grid=(B,),
        in_specs=in_specs,
        out_specs=pl.BlockSpec((1, out_channels, DP), lambda b: (b, 0, 0)),
        scratch_shapes=[pltpu.VMEM((out_channels, Le), jnp.bfloat16),
                        pltpu.VMEM((in_channels, Le), jnp.bfloat16)],
        compiler_params=pltpu.CompilerParams(
            dimension_semantics=("parallel",)),
    )(x_ext, x_pp, mask, *ws)

    # Drop the garbage padded-plane borders and return (B, D, H, W, Cout).
    out = out.reshape(B, out_channels, D, Hp, Wp)[:, :, :, 1:H + 1, 1:W + 1]
    return jnp.transpose(out, (0, 2, 3, 4, 1))


if __name__ == "__main__":
    in_channels, out_channels = 4, 8
    B, D, H, W = 2, 8, 8, 8

    key = jax.random.PRNGKey(0)
    kx, kp = jax.random.split(key)
    x = jax.random.normal(kx, (B, D, H, W, in_channels), jnp.float32)
    params = init_params(kp, in_channels, out_channels)

    fwd = jax.jit(
        functools.partial(
            copy_back_projection, in_channels=in_channels, out_channels=out_channels
        )
    )
    out = fwd(x, params)
    jax.block_until_ready(out)
    assert out.shape == (B, D, H, W, out_channels)
    assert out.dtype == jnp.float32
    print("KERNEL_OK")
</pallas_src>

<mosaic_0001>
module attributes {stable_mosaic.version = 11 : i64} {
  func.func @_cbp_kernel(%arg0: i32, %arg1: memref<1x4x1152xbf16, #tpu.memory_space<vmem>>, %arg2: memref<1x4x800xf32, #tpu.memory_space<vmem>>, %arg3: memref<1x800xbf16, #tpu.memory_space<vmem>>, %arg4: memref<27x8x4xbf16, #tpu.memory_space<vmem>>, %arg5: memref<27x4x8xbf16, #tpu.memory_space<vmem>>, %arg6: memref<27x4x4xbf16, #tpu.memory_space<vmem>>, %arg7: memref<27x4x4xbf16, #tpu.memory_space<vmem>>, %arg8: memref<27x8x4xbf16, #tpu.memory_space<vmem>>, %arg9: memref<27x8x8xbf16, #tpu.memory_space<vmem>>, %arg10: memref<1x8x800xf32, #tpu.memory_space<vmem>>, %arg11: memref<8x1152xbf16, #tpu.memory_space<vmem>>, %arg12: memref<4x1152xbf16, #tpu.memory_space<vmem>>) attributes {dimension_semantics = [#tpu.dimension_semantics<parallel>], iteration_bounds = array<i64: 2>, scalar_prefetch = 0 : i64, scratch_operands = 2 : i64, tpu.core_type = #tpu.core_type<tc>, window_params = [{transform_indices = @transform_0, window_bounds = array<i64: 1, 4, 1152>}, {transform_indices = @transform_1, window_bounds = array<i64: 1, 4, 800>}, {pipeline_mode = #tpu.pipeline_mode<synchronous>, transform_indices = @transform_2, window_bounds = array<i64: 1, 800>}, {pipeline_mode = #tpu.pipeline_mode<synchronous>, transform_indices = @transform_3, window_bounds = array<i64: 27, 8, 4>}, {pipeline_mode = #tpu.pipeline_mode<synchronous>, transform_indices = @transform_4, window_bounds = array<i64: 27, 4, 8>}, {pipeline_mode = #tpu.pipeline_mode<synchronous>, transform_indices = @transform_5, window_bounds = array<i64: 27, 4, 4>}, {pipeline_mode = #tpu.pipeline_mode<synchronous>, transform_indices = @transform_6, window_bounds = array<i64: 27, 4, 4>}, {pipeline_mode = #tpu.pipeline_mode<synchronous>, transform_indices = @transform_7, window_bounds = array<i64: 27, 8, 4>}, {pipeline_mode = #tpu.pipeline_mode<synchronous>, transform_indices = @transform_8, window_bounds = array<i64: 27, 8, 8>}, {transform_indices = @transform_9, window_bounds = array<i64: 1, 8, 800>}]} {
    %c0 = arith.constant 0 : index
    %c0_0 = arith.constant 0 : index
    %0 = vector.load %arg3[%c0, %c0_0] : memref<1x800xbf16, #tpu.memory_space<vmem>>, vector<1x800xbf16>
    %c0_1 = arith.constant 0 : index
    %c0_2 = arith.constant 0 : index
    %c0_3 = arith.constant 0 : index
    %1 = vector.load %arg1[%c0_1, %c0_2, %c0_3] : memref<1x4x1152xbf16, #tpu.memory_space<vmem>>, vector<1x4x1152xbf16>
    %2 = vector.shape_cast %1 : vector<1x4x1152xbf16> to vector<4x1152xbf16>
    %c0_4 = arith.constant 0 : index
    %c0_5 = arith.constant 0 : index
    %c0_6 = arith.constant 0 : index
    %3 = vector.load %arg2[%c0_4, %c0_5, %c0_6] : memref<1x4x800xf32, #tpu.memory_space<vmem>>, vector<1x4x800xf32>
    %4 = vector.shape_cast %3 : vector<1x4x800xf32> to vector<4x800xf32>
    %cst = arith.constant 0.000000e+00 : bf16
    %5 = vector.broadcast %cst : bf16 to vector<8x1152xbf16>
    %c0_7 = arith.constant 0 : index
    %c0_8 = arith.constant 0 : index
    %6 = vector.load %arg11[%c0_7, %c0_8] : memref<8x1152xbf16, #tpu.memory_space<vmem>>, vector<8x1152xbf16>
    tpu.vector_store %arg11[%c0_7, %c0_8], %5 {strides = array<i32>} : memref<8x1152xbf16, #tpu.memory_space<vmem>>, vector<8x1152xbf16>,
    %cst_9 = arith.constant 0.000000e+00 : bf16
    %7 = vector.broadcast %cst_9 : bf16 to vector<4x1152xbf16>
    %c0_10 = arith.constant 0 : index
    %c0_11 = arith.constant 0 : index
    %8 = vector.load %arg12[%c0_10, %c0_11] : memref<4x1152xbf16, #tpu.memory_space<vmem>>, vector<4x1152xbf16>
    tpu.vector_store %arg12[%c0_10, %c0_11], %7 {strides = array<i32>} : memref<4x1152xbf16, #tpu.memory_space<vmem>>, vector<4x1152xbf16>,
    %cst_12 = arith.constant 0.000000e+00 : f32
    %9 = vector.broadcast %cst_12 : f32 to vector<8x800xf32>
    %c0_13 = arith.constant 0 : index
    %c0_14 = arith.constant 0 : index
    %c0_15 = arith.constant 0 : index
    %10 = vector.load %arg4[%c0_13, %c0_14, %c0_15] : memref<27x8x4xbf16, #tpu.memory_space<vmem>>, vector<1x8x4xbf16>
    %11 = vector.shape_cast %10 : vector<1x8x4xbf16> to vector<8x4xbf16>
    %12 = vector.extract_strided_slice %2 {offsets = [0, 17], sizes = [4, 800], strides = [1, 1]} : vector<4x1152xbf16> to vector<4x800xbf16>
    %cst_16 = arith.constant dense<0.000000e+00> : vector<8x800xf32>
    %13 = tpu.matmul %11, %12, %cst_16 {dimension_numbers = #tpu.dot_dimension_numbers<[1], [0], [0], [1], [0, 0, 1, 1], [], []>} : vector<8x4xbf16>, vector<4x800xbf16>, vector<8x800xf32> -> vector<8x800xf32>
    %14 = arith.addf %9, %13 : vector<8x800xf32>
    %c1 = arith.constant 1 : index
    %c0_17 = arith.constant 0 : index
    %c0_18 = arith.constant 0 : index
    %15 = vector.load %arg4[%c1, %c0_17, %c0_18] : memref<27x8x4xbf16, #tpu.memory_space<vmem>>, vector<1x8x4xbf16>
    %16 = vector.shape_cast %15 : vector<1x8x4xbf16> to vector<8x4xbf16>
    %17 = vector.extract_strided_slice %2 {offsets = [0, 18], sizes = [4, 800], strides = [1, 1]} : vector<4x1152xbf16> to vector<4x800xbf16>
    %cst_19 = arith.constant dense<0.000000e+00> : vector<8x800xf32>
    %18 = tpu.matmul %16, %17, %cst_19 {dimension_numbers = #tpu.dot_dimension_numbers<[1], [0], [0], [1], [0, 0, 1, 1], [], []>} : vector<8x4xbf16>, vector<4x800xbf16>, vector<8x800xf32> -> vector<8x800xf32>
    %19 = arith.addf %14, %18 : vector<8x800xf32>
    %c2 = arith.constant 2 : index
    %c0_20 = arith.constant 0 : index
    %c0_21 = arith.constant 0 : index
    %20 = vector.load %arg4[%c2, %c0_20, %c0_21] : memref<27x8x4xbf16, #tpu.memory_space<vmem>>, vector<1x8x4xbf16>
    %21 = vector.shape_cast %20 : vector<1x8x4xbf16> to vector<8x4xbf16>
    %22 = vector.extract_strided_slice %2 {offsets = [0, 19], sizes = [4, 800], strides = [1, 1]} : vector<4x1152xbf16> to vector<4x800xbf16>
    %cst_22 = arith.constant dense<0.000000e+00> : vector<8x800xf32>
    %23 = tpu.matmul %21, %22, %cst_22 {dimension_numbers = #tpu.dot_dimension_numbers<[1], [0], [0], [1], [0, 0, 1, 1], [], []>} : vector<8x4xbf16>, vector<4x800xbf16>, vector<8x800xf32> -> vector<8x800xf32>
    %24 = arith.addf %19, %23 : vector<8x800xf32>
    %c3 = arith.constant 3 : index
    %c0_23 = arith.constant 0 : index
    %c0_24 = arith.constant 0 : index
    %25 = vector.load %arg4[%c3, %c0_23, %c0_24] : memref<27x8x4xbf16, #tpu.memory_space<vmem>>, vector<1x8x4xbf16>
    %26 = vector.shape_cast %25 : vector<1x8x4xbf16> to vector<8x4xbf16>
    %27 = vector.extract_strided_slice %2 {offsets = [0, 27], sizes = [4, 800], strides = [1, 1]} : vector<4x1152xbf16> to vector<4x800xbf16>
    %cst_25 = arith.constant dense<0.000000e+00> : vector<8x800xf32>
    %28 = tpu.matmul %26, %27, %cst_25 {dimension_numbers = #tpu.dot_dimension_numbers<[1], [0], [0], [1], [0, 0, 1, 1], [], []>} : vector<8x4xbf16>, vector<4x800xbf16>, vector<8x800xf32> -> vector<8x800xf32>
    %29 = arith.addf %24, %28 : vector<8x800xf32>
    %c4 = arith.constant 4 : index
    %c0_26 = arith.constant 0 : index
    %c0_27 = arith.constant 0 : index
    %30 = vector.load %arg4[%c4, %c0_26, %c0_27] : memref<27x8x4xbf16, #tpu.memory_space<vmem>>, vector<1x8x4xbf16>
    %31 = vector.shape_cast %30 : vector<1x8x4xbf16> to vector<8x4xbf16>
    %32 = vector.extract_strided_slice %2 {offsets = [0, 28], sizes = [4, 800], strides = [1, 1]} : vector<4x1152xbf16> to vector<4x800xbf16>
    %cst_28 = arith.constant dense<0.000000e+00> : vector<8x800xf32>
    %33 = tpu.matmul %31, %32, %cst_28 {dimension_numbers = #tpu.dot_dimension_numbers<[1], [0], [0], [1], [0, 0, 1, 1], [], []>} : vector<8x4xbf16>, vector<4x800xbf16>, vector<8x800xf32> -> vector<8x800xf32>
    %34 = arith.addf %29, %33 : vector<8x800xf32>
    %c5 = arith.constant 5 : index
    %c0_29 = arith.constant 0 : index
    %c0_30 = arith.constant 0 : index
    %35 = vector.load %arg4[%c5, %c0_29, %c0_30] : memref<27x8x4xbf16, #tpu.memory_space<vmem>>, vector<1x8x4xbf16>
    %36 = vector.shape_cast %35 : vector<1x8x4xbf16> to vector<8x4xbf16>
    %37 = vector.extract_strided_slice %2 {offsets = [0, 29], sizes = [4, 800], strides = [1, 1]} : vector<4x1152xbf16> to vector<4x800xbf16>
    %cst_31 = arith.constant dense<0.000000e+00> : vector<8x800xf32>
    %38 = tpu.matmul %36, %37, %cst_31 {dimension_numbers = #tpu.dot_dimension_numbers<[1], [0], [0], [1], [0, 0, 1, 1], [], []>} : vector<8x4xbf16>, vector<4x800xbf16>, vector<8x800xf32> -> vector<8x800xf32>
    %39 = arith.addf %34, %38 : vector<8x800xf32>
    %c6 = arith.constant 6 : index
    %c0_32 = arith.constant 0 : index
    %c0_33 = arith.constant 0 : index
    %40 = vector.load %arg4[%c6, %c0_32, %c0_33] : memref<27x8x4xbf16, #tpu.memory_space<vmem>>, vector<1x8x4xbf16>
    %41 = vector.shape_cast %40 : vector<1x8x4xbf16> to vector<8x4xbf16>
    %42 = vector.extract_strided_slice %2 {offsets = [0, 37], sizes = [4, 800], strides = [1, 1]} : vector<4x1152xbf16> to vector<4x800xbf16>
    %cst_34 = arith.constant dense<0.000000e+00> : vector<8x800xf32>
    %43 = tpu.matmul %41, %42, %cst_34 {dimension_numbers = #tpu.dot_dimension_numbers<[1], [0], [0], [1], [0, 0, 1, 1], [], []>} : vector<8x4xbf16>, vector<4x800xbf16>, vector<8x800xf32> -> vector<8x800xf32>
    %44 = arith.addf %39, %43 : vector<8x800xf32>
    %c7 = arith.constant 7 : index
    %c0_35 = arith.constant 0 : index
    %c0_36 = arith.constant 0 : index
    %45 = vector.load %arg4[%c7, %c0_35, %c0_36] : memref<27x8x4xbf16, #tpu.memory_space<vmem>>, vector<1x8x4xbf16>
    %46 = vector.shape_cast %45 : vector<1x8x4xbf16> to vector<8x4xbf16>
    %47 = vector.extract_strided_slice %2 {offsets = [0, 38], sizes = [4, 800], strides = [1, 1]} : vector<4x1152xbf16> to vector<4x800xbf16>
    %cst_37 = arith.constant dense<0.000000e+00> : vector<8x800xf32>
    %48 = tpu.matmul %46, %47, %cst_37 {dimension_numbers = #tpu.dot_dimension_numbers<[1], [0], [0], [1], [0, 0, 1, 1], [], []>} : vector<8x4xbf16>, vector<4x800xbf16>, vector<8x800xf32> -> vector<8x800xf32>
    %49 = arith.addf %44, %48 : vector<8x800xf32>
    %c8 = arith.constant 8 : index
    %c0_38 = arith.constant 0 : index
    %c0_39 = arith.constant 0 : index
    %50 = vector.load %arg4[%c8, %c0_38, %c0_39] : memref<27x8x4xbf16, #tpu.memory_space<vmem>>, vector<1x8x4xbf16>
    %51 = vector.shape_cast %50 : vector<1x8x4xbf16> to vector<8x4xbf16>
    %52 = vector.extract_strided_slice %2 {offsets = [0, 39], sizes = [4, 800], strides = [1, 1]} : vector<4x1152xbf16> to vector<4x800xbf16>
    %cst_40 = arith.constant dense<0.000000e+00> : vector<8x800xf32>
    %53 = tpu.matmul %51, %52, %cst_40 {dimension_numbers = #tpu.dot_dimension_numbers<[1], [0], [0], [1], [0, 0, 1, 1], [], []>} : vector<8x4xbf16>, vector<4x800xbf16>, vector<8x800xf32> -> vector<8x800xf32>
    %54 = arith.addf %49, %53 : vector<8x800xf32>
    %c9 = arith.constant 9 : index
    %c0_41 = arith.constant 0 : index
    %c0_42 = arith.constant 0 : index
    %55 = vector.load %arg4[%c9, %c0_41, %c0_42] : memref<27x8x4xbf16, #tpu.memory_space<vmem>>, vector<1x8x4xbf16>
    %56 = vector.shape_cast %55 : vector<1x8x4xbf16> to vector<8x4xbf16>
    %57 = vector.extract_strided_slice %2 {offsets = [0, 117], sizes = [4, 800], strides = [1, 1]} : vector<4x1152xbf16> to vector<4x800xbf16>
    %cst_43 = arith.constant dense<0.000000e+00> : vector<8x800xf32>
    %58 = tpu.matmul %56, %57, %cst_43 {dimension_numbers = #tpu.dot_dimension_numbers<[1], [0], [0], [1], [0, 0, 1, 1], [], []>} : vector<8x4xbf16>, vector<4x800xbf16>, vector<8x800xf32> -> vector<8x800xf32>
    %59 = arith.addf %54, %58 : vector<8x800xf32>
    %c10 = arith.constant 10 : index
    %c0_44 = arith.constant 0 : index
    %c0_45 = arith.constant 0 : index
    %60 = vector.load %arg4[%c10, %c0_44, %c0_45] : memref<27x8x4xbf16, #tpu.memory_space<vmem>>, vector<1x8x4xbf16>
    %61 = vector.shape_cast %60 : vector<1x8x4xbf16> to vector<8x4xbf16>
    %62 = vector.extract_strided_slice %2 {offsets = [0, 118], sizes = [4, 800], strides = [1, 1]} : vector<4x1152xbf16> to vector<4x800xbf16>
    %cst_46 = arith.constant dense<0.000000e+00> : vector<8x800xf32>
    %63 = tpu.matmul %61, %62, %cst_46 {dimension_numbers = #tpu.dot_dimension_numbers<[1], [0], [0], [1], [0, 0, 1, 1], [], []>} : vector<8x4xbf16>, vector<4x800xbf16>, vector<8x800xf32> -> vector<8x800xf32>
    %64 = arith.addf %59, %63 : vector<8x800xf32>
    %c11 = arith.constant 11 : index
    %c0_47 = arith.constant 0 : index
    %c0_48 = arith.constant 0 : index
    %65 = vector.load %arg4[%c11, %c0_47, %c0_48] : memref<27x8x4xbf16, #tpu.memory_space<vmem>>, vector<1x8x4xbf16>
    %66 = vector.shape_cast %65 : vector<1x8x4xbf16> to vector<8x4xbf16>
    %67 = vector.extract_strided_slice %2 {offsets = [0, 119], sizes = [4, 800], strides = [1, 1]} : vector<4x1152xbf16> to vector<4x800xbf16>
    %cst_49 = arith.constant dense<0.000000e+00> : vector<8x800xf32>
    %68 = tpu.matmul %66, %67, %cst_49 {dimension_numbers = #tpu.dot_dimension_numbers<[1], [0], [0], [1], [0, 0, 1, 1], [], []>} : vector<8x4xbf16>, vector<4x800xbf16>, vector<8x800xf32> -> vector<8x800xf32>
    %69 = arith.addf %64, %68 : vector<8x800xf32>
    %c12 = arith.constant 12 : index
    %c0_50 = arith.constant 0 : index
    %c0_51 = arith.constant 0 : index
    %70 = vector.load %arg4[%c12, %c0_50, %c0_51] : memref<27x8x4xbf16, #tpu.memory_space<vmem>>, vector<1x8x4xbf16>
    %71 = vector.shape_cast %70 : vector<1x8x4xbf16> to vector<8x4xbf16>
    %72 = vector.extract_strided_slice %2 {offsets = [0, 127], sizes = [4, 800], strides = [1, 1]} : vector<4x1152xbf16> to vector<4x800xbf16>
    %cst_52 = arith.constant dense<0.000000e+00> : vector<8x800xf32>
    %73 = tpu.matmul %71, %72, %cst_52 {dimension_numbers = #tpu.dot_dimension_numbers<[1], [0], [0], [1], [0, 0, 1, 1], [], []>} : vector<8x4xbf16>, vector<4x800xbf16>, vector<8x800xf32> -> vector<8x800xf32>
    %74 = arith.addf %69, %73 : vector<8x800xf32>
    %c13 = arith.constant 13 : index
    %c0_53 = arith.constant 0 : index
    %c0_54 = arith.constant 0 : index
    %75 = vector.load %arg4[%c13, %c0_53, %c0_54] : memref<27x8x4xbf16, #tpu.memory_space<vmem>>, vector<1x8x4xbf16>
    %76 = vector.shape_cast %75 : vector<1x8x4xbf16> to vector<8x4xbf16>
    %77 = vector.extract_strided_slice %2 {offsets = [0, 128], sizes = [4, 800], strides = [1, 1]} : vector<4x1152xbf16> to vector<4x800xbf16>
    %cst_55 = arith.constant dense<0.000000e+00> : vector<8x800xf32>
    %78 = tpu.matmul %76, %77, %cst_55 {dimension_numbers = #tpu.dot_dimension_numbers<[1], [0], [0], [1], [0, 0, 1, 1], [], []>} : vector<8x4xbf16>, vector<4x800xbf16>, vector<8x800xf32> -> vector<8x800xf32>
    %79 = arith.addf %74, %78 : vector<8x800xf32>
    %c14 = arith.constant 14 : index
    %c0_56 = arith.constant 0 : index
    %c0_57 = arith.constant 0 : index
    %80 = vector.load %arg4[%c14, %c0_56, %c0_57] : memref<27x8x4xbf16, #tpu.memory_space<vmem>>, vector<1x8x4xbf16>
    %81 = vector.shape_cast %80 : vector<1x8x4xbf16> to vector<8x4xbf16>
    %82 = vector.extract_strided_slice %2 {offsets = [0, 129], sizes = [4, 800], strides = [1, 1]} : vector<4x1152xbf16> to vector<4x800xbf16>
    %cst_58 = arith.constant dense<0.000000e+00> : vector<8x800xf32>
    %83 = tpu.matmul %81, %82, %cst_58 {dimension_numbers = #tpu.dot_dimension_numbers<[1], [0], [0], [1], [0, 0, 1, 1], [], []>} : vector<8x4xbf16>, vector<4x800xbf16>, vector<8x800xf32> -> vector<8x800xf32>
    %84 = arith.addf %79, %83 : vector<8x800xf32>
    %c15 = arith.constant 15 : index
    %c0_59 = arith.constant 0 : index
    %c0_60 = arith.constant 0 : index
    %85 = vector.load %arg4[%c15, %c0_59, %c0_60] : memref<27x8x4xbf16, #tpu.memory_space<vmem>>, vector<1x8x4xbf16>
    %86 = vector.shape_cast %85 : vector<1x8x4xbf16> to vector<8x4xbf16>
    %87 = vector.extract_strided_slice %2 {offsets = [0, 137], sizes = [4, 800], strides = [1, 1]} : vector<4x1152xbf16> to vector<4x800xbf16>
    %cst_61 = arith.constant dense<0.000000e+00> : vector<8x800xf32>
    %88 = tpu.matmul %86, %87, %cst_61 {dimension_numbers = #tpu.dot_dimension_numbers<[1], [0], [0], [1], [0, 0, 1, 1], [], []>} : vector<8x4xbf16>, vector<4x800xbf16>, vector<8x800xf32> -> vector<8x800xf32>
    %89 = arith.addf %84, %88 : vector<8x800xf32>
    %c16 = arith.constant 16 : index
    %c0_62 = arith.constant 0 : index
    %c0_63 = arith.constant 0 : index
    %90 = vector.load %arg4[%c16, %c0_62, %c0_63] : memref<27x8x4xbf16, #tpu.memory_space<vmem>>, vector<1x8x4xbf16>
    %91 = vector.shape_cast %90 : vector<1x8x4xbf16> to vector<8x4xbf16>
    %92 = vector.extract_strided_slice %2 {offsets = [0, 138], sizes = [4, 800], strides = [1, 1]} : vector<4x1152xbf16> to vector<4x800xbf16>
    %cst_64 = arith.constant dense<0.000000e+00> : vector<8x800xf32>
    %93 = tpu.matmul %91, %92, %cst_64 {dimension_numbers = #tpu.dot_dimension_numbers<[1], [0], [0], [1], [0, 0, 1, 1], [], []>} : vector<8x4xbf16>, vector<4x800xbf16>, vector<8x800xf32> -> vector<8x800xf32>
    %94 = arith.addf %89, %93 : vector<8x800xf32>
    %c17 = arith.constant 17 : index
    %c0_65 = arith.constant 0 : index
    %c0_66 = arith.constant 0 : index
    %95 = vector.load %arg4[%c17, %c0_65, %c0_66] : memref<27x8x4xbf16, #tpu.memory_space<vmem>>, vector<1x8x4xbf16>
    %96 = vector.shape_cast %95 : vector<1x8x4xbf16> to vector<8x4xbf16>
    %97 = vector.extract_strided_slice %2 {offsets = [0, 139], sizes = [4, 800], strides = [1, 1]} : vector<4x1152xbf16> to vector<4x800xbf16>
    %cst_67 = arith.constant dense<0.000000e+00> : vector<8x800xf32>
    %98 = tpu.matmul %96, %97, %cst_67 {dimension_numbers = #tpu.dot_dimension_numbers<[1], [0], [0], [1], [0, 0, 1, 1], [], []>} : vector<8x4xbf16>, vector<4x800xbf16>, vector<8x800xf32> -> vector<8x800xf32>
    %99 = arith.addf %94, %98 : vector<8x800xf32>
    %c18 = arith.constant 18 : index
    %c0_68 = arith.constant 0 : index
    %c0_69 = arith.constant 0 : index
    %100 = vector.load %arg4[%c18, %c0_68, %c0_69] : memref<27x8x4xbf16, #tpu.memory_space<vmem>>, vector<1x8x4xbf16>
    %101 = vector.shape_cast %100 : vector<1x8x4xbf16> to vector<8x4xbf16>
    %102 = vector.extract_strided_slice %2 {offsets = [0, 217], sizes = [4, 800], strides = [1, 1]} : vector<4x1152xbf16> to vector<4x800xbf16>
    %cst_70 = arith.constant dense<0.000000e+00> : vector<8x800xf32>
    %103 = tpu.matmul %101, %102, %cst_70 {dimension_numbers = #tpu.dot_dimension_numbers<[1], [0], [0], [1], [0, 0, 1, 1], [], []>} : vector<8x4xbf16>, vector<4x800xbf16>, vector<8x800xf32> -> vector<8x800xf32>
    %104 = arith.addf %99, %103 : vector<8x800xf32>
    %c19 = arith.constant 19 : index
    %c0_71 = arith.constant 0 : index
    %c0_72 = arith.constant 0 : index
    %105 = vector.load %arg4[%c19, %c0_71, %c0_72] : memref<27x8x4xbf16, #tpu.memory_space<vmem>>, vector<1x8x4xbf16>
    %106 = vector.shape_cast %105 : vector<1x8x4xbf16> to vector<8x4xbf16>
    %107 = vector.extract_strided_slice %2 {offsets = [0, 218], sizes = [4, 800], strides = [1, 1]} : vector<4x1152xbf16> to vector<4x800xbf16>
    %cst_73 = arith.constant dense<0.000000e+00> : vector<8x800xf32>
    %108 = tpu.matmul %106, %107, %cst_73 {dimension_numbers = #tpu.dot_dimension_numbers<[1], [0], [0], [1], [0, 0, 1, 1], [], []>} : vector<8x4xbf16>, vector<4x800xbf16>, vector<8x800xf32> -> vector<8x800xf32>
    %109 = arith.addf %104, %108 : vector<8x800xf32>
    %c20 = arith.constant 20 : index
    %c0_74 = arith.constant 0 : index
    %c0_75 = arith.constant 0 : index
    %110 = vector.load %arg4[%c20, %c0_74, %c0_75] : memref<27x8x4xbf16, #tpu.memory_space<vmem>>, vector<1x8x4xbf16>
    %111 = vector.shape_cast %110 : vector<1x8x4xbf16> to vector<8x4xbf16>
    %112 = vector.extract_strided_slice %2 {offsets = [0, 219], sizes = [4, 800], strides = [1, 1]} : vector<4x1152xbf16> to vector<4x800xbf16>
    %cst_76 = arith.constant dense<0.000000e+00> : vector<8x800xf32>
    %113 = tpu.matmul %111, %112, %cst_76 {dimension_numbers = #tpu.dot_dimension_numbers<[1], [0], [0], [1], [0, 0, 1, 1], [], []>} : vector<8x4xbf16>, vector<4x800xbf16>, vector<8x800xf32> -> vector<8x800xf32>
    %114 = arith.addf %109, %113 : vector<8x800xf32>
    %c21 = arith.constant 21 : index
    %c0_77 = arith.constant 0 : index
    %c0_78 = arith.constant 0 : index
    %115 = vector.load %arg4[%c21, %c0_77, %c0_78] : memref<27x8x4xbf16, #tpu.memory_space<vmem>>, vector<1x8x4xbf16>
    %116 = vector.shape_cast %115 : vector<1x8x4xbf16> to vector<8x4xbf16>
    %117 = vector.extract_strided_slice %2 {offsets = [0, 227], sizes = [4, 800], strides = [1, 1]} : vector<4x1152xbf16> to vector<4x800xbf16>
    %cst_79 = arith.constant dense<0.000000e+00> : vector<8x800xf32>
    %118 = tpu.matmul %116, %117, %cst_79 {dimension_numbers = #tpu.dot_dimension_numbers<[1], [0], [0], [1], [0, 0, 1, 1], [], []>} : vector<8x4xbf16>, vector<4x800xbf16>, vector<8x800xf32> -> vector<8x800xf32>
    %119 = arith.addf %114, %118 : vector<8x800xf32>
    %c22 = arith.constant 22 : index
    %c0_80 = arith.constant 0 : index
    %c0_81 = arith.constant 0 : index
    %120 = vector.load %arg4[%c22, %c0_80, %c0_81] : memref<27x8x4xbf16, #tpu.memory_space<vmem>>, vector<1x8x4xbf16>
    %121 = vector.shape_cast %120 : vector<1x8x4xbf16> to vector<8x4xbf16>
    %122 = vector.extract_strided_slice %2 {offsets = [0, 228], sizes = [4, 800], strides = [1, 1]} : vector<4x1152xbf16> to vector<4x800xbf16>
    %cst_82 = arith.constant dense<0.000000e+00> : vector<8x800xf32>
    %123 = tpu.matmul %121, %122, %cst_82 {dimension_numbers = #tpu.dot_dimension_numbers<[1], [0], [0], [1], [0, 0, 1, 1], [], []>} : vector<8x4xbf16>, vector<4x800xbf16>, vector<8x800xf32> -> vector<8x800xf32>
    %124 = arith.addf %119, %123 : vector<8x800xf32>
    %c23 = arith.constant 23 : index
    %c0_83 = arith.constant 0 : index
    %c0_84 = arith.constant 0 : index
    %125 = vector.load %arg4[%c23, %c0_83, %c0_84] : memref<27x8x4xbf16, #tpu.memory_space<vmem>>, vector<1x8x4xbf16>
    %126 = vector.shape_cast %125 : vector<1x8x4xbf16> to vector<8x4xbf16>
    %127 = vector.extract_strided_slice %2 {offsets = [0, 229], sizes = [4, 800], strides = [1, 1]} : vector<4x1152xbf16> to vector<4x800xbf16>
    %cst_85 = arith.constant dense<0.000000e+00> : vector<8x800xf32>
    %128 = tpu.matmul %126, %127, %cst_85 {dimension_numbers = #tpu.dot_dimension_numbers<[1], [0], [0], [1], [0, 0, 1, 1], [], []>} : vector<8x4xbf16>, vector<4x800xbf16>, vector<8x800xf32> -> vector<8x800xf32>
    %129 = arith.addf %124, %128 : vector<8x800xf32>
    %c24 = arith.constant 24 : index
    %c0_86 = arith.constant 0 : index
    %c0_87 = arith.constant 0 : index
    %130 = vector.load %arg4[%c24, %c0_86, %c0_87] : memref<27x8x4xbf16, #tpu.memory_space<vmem>>, vector<1x8x4xbf16>
    %131 = vector.shape_cast %130 : vector<1x8x4xbf16> to vector<8x4xbf16>
    %132 = vector.extract_strided_slice %2 {offsets = [0, 237], sizes = [4, 800], strides = [1, 1]} : vector<4x1152xbf16> to vector<4x800xbf16>
    %cst_88 = arith.constant dense<0.000000e+00> : vector<8x800xf32>
    %133 = tpu.matmul %131, %132, %cst_88 {dimension_numbers = #tpu.dot_dimension_numbers<[1], [0], [0], [1], [0, 0, 1, 1], [], []>} : vector<8x4xbf16>, vector<4x800xbf16>, vector<8x800xf32> -> vector<8x800xf32>
    %134 = arith.addf %129, %133 : vector<8x800xf32>
    %c25 = arith.constant 25 : index
    %c0_89 = arith.constant 0 : index
    %c0_90 = arith.constant 0 : index
    %135 = vector.load %arg4[%c25, %c0_89, %c0_90] : memref<27x8x4xbf16, #tpu.memory_space<vmem>>, vector<1x8x4xbf16>
    %136 = vector.shape_cast %135 : vector<1x8x4xbf16> to vector<8x4xbf16>
    %137 = vector.extract_strided_slice %2 {offsets = [0, 238], sizes = [4, 800], strides = [1, 1]} : vector<4x1152xbf16> to vector<4x800xbf16>
    %cst_91 = arith.constant dense<0.000000e+00> : vector<8x800xf32>
    %138 = tpu.matmul %136, %137, %cst_91 {dimension_numbers = #tpu.dot_dimension_numbers<[1], [0], [0], [1], [0, 0, 1, 1], [], []>} : vector<8x4xbf16>, vector<4x800xbf16>, vector<8x800xf32> -> vector<8x800xf32>
    %139 = arith.addf %134, %138 : vector<8x800xf32>
    %c26 = arith.constant 26 : index
    %c0_92 = arith.constant 0 : index
    %c0_93 = arith.constant 0 : index
    %140 = vector.load %arg4[%c26, %c0_92, %c0_93] : memref<27x8x4xbf16, #tpu.memory_space<vmem>>, vector<1x8x4xbf16>
    %141 = vector.shape_cast %140 : vector<1x8x4xbf16> to vector<8x4xbf16>
    %142 = vector.extract_strided_slice %2 {offsets = [0, 239], sizes = [4, 800], strides = [1, 1]} : vector<4x1152xbf16> to vector<4x800xbf16>
    %cst_94 = arith.constant dense<0.000000e+00> : vector<8x800xf32>
    %143 = tpu.matmul %141, %142, %cst_94 {dimension_numbers = #tpu.dot_dimension_numbers<[1], [0], [0], [1], [0, 0, 1, 1], [], []>} : vector<8x4xbf16>, vector<4x800xbf16>, vector<8x800xf32> -> vector<8x800xf32>
    %144 = arith.addf %139, %143 : vector<8x800xf32>
    %145 = arith.truncf %144 : vector<8x800xf32> to vector<8x800xbf16>
    %146 = vector.broadcast %0 : vector<1x800xbf16> to vector<8x800xbf16>
    %147 = arith.mulf %145, %146 : vector<8x800xbf16>
    %c0_95 = arith.constant 0 : index
    %c128 = arith.constant 128 : index
    %148 = vector.load %arg11[%c0_95, %c128] : memref<8x1152xbf16, #tpu.memory_space<vmem>>, vector<8x800xbf16>
    tpu.vector_store %arg11[%c0_95, %c128], %147 {strides = array<i32>} : memref<8x1152xbf16, #tpu.memory_space<vmem>>, vector<8x800xbf16>,
    %c0_96 = arith.constant 0 : index
    %c0_97 = arith.constant 0 : index
    %149 = vector.load %arg11[%c0_96, %c0_97] : memref<8x1152xbf16, #tpu.memory_space<vmem>>, vector<8x1152xbf16>
    %cst_98 = arith.constant 0.000000e+00 : f32
    %150 = vector.broadcast %cst_98 : f32 to vector<4x800xf32>
    %c0_99 = arith.constant 0 : index
    %c0_100 = arith.constant 0 : index
    %c0_101 = arith.constant 0 : index
    %151 = vector.load %arg5[%c0_99, %c0_100, %c0_101] : memref<27x4x8xbf16, #tpu.memory_space<vmem>>, vector<1x4x8xbf16>
    %152 = vector.shape_cast %151 : vector<1x4x8xbf16> to vector<4x8xbf16>
    %153 = vector.extract_strided_slice %149 {offsets = [0, 17], sizes = [8, 800], strides = [1, 1]} : vector<8x1152xbf16> to vector<8x800xbf16>
    %cst_102 = arith.constant dense<0.000000e+00> : vector<4x800xf32>
    %154 = tpu.matmul %152, %153, %cst_102 {dimension_numbers = #tpu.dot_dimension_numbers<[1], [0], [0], [1], [0, 0, 1, 1], [], []>} : vector<4x8xbf16>, vector<8x800xbf16>, vector<4x800xf32> -> vector<4x800xf32>
    %155 = arith.addf %150, %154 : vector<4x800xf32>
    %c1_103 = arith.constant 1 : index
    %c0_104 = arith.constant 0 : index
    %c0_105 = arith.constant 0 : index
    %156 = vector.load %arg5[%c1_103, %c0_104, %c0_105] : memref<27x4x8xbf16, #tpu.memory_space<vmem>>, vector<1x4x8xbf16>
    %157 = vector.shape_cast %156 : vector<1x4x8xbf16> to vector<4x8xbf16>
    %158 = vector.extract_strided_slice %149 {offsets = [0, 18], sizes = [8, 800], strides = [1, 1]} : vector<8x1152xbf16> to vector<8x800xbf16>
    %cst_106 = arith.constant dense<0.000000e+00> : vector<4x800xf32>
    %159 = tpu.matmul %157, %158, %cst_106 {dimension_numbers = #tpu.dot_dimension_numbers<[1], [0], [0], [1], [0, 0, 1, 1], [], []>} : vector<4x8xbf16>, vector<8x800xbf16>, vector<4x800xf32> -> vector<4x800xf32>
    %160 = arith.addf %155, %159 : vector<4x800xf32>
    %c2_107 = arith.constant 2 : index
    %c0_108 = arith.constant 0 : index
    %c0_109 = arith.constant 0 : index
    %161 = vector.load %arg5[%c2_107, %c0_108, %c0_109] : memref<27x4x8xbf16, #tpu.memory_space<vmem>>, vector<1x4x8xbf16>
    %162 = vector.shape_cast %161 : vector<1x4x8xbf16> to vector<4x8xbf16>
    %163 = vector.extract_strided_slice %149 {offsets = [0, 19], sizes = [8, 800], strides = [1, 1]} : vector<8x1152xbf16> to vector<8x800xbf16>
    %cst_110 = arith.constant dense<0.000000e+00> : vector<4x800xf32>
    %164 = tpu.matmul %162, %163, %cst_110 {dimension_numbers = #tpu.dot_dimension_numbers<[1], [0], [0], [1], [0, 0, 1, 1], [], []>} : vector<4x8xbf16>, vector<8x800xbf16>, vector<4x800xf32> -> vector<4x800xf32>
    %165 = arith.addf %160, %164 : vector<4x800xf32>
    %c3_111 = arith.constant 3 : index
    %c0_112 = arith.constant 0 : index
    %c0_113 = arith.constant 0 : index
    %166 = vector.load %arg5[%c3_111, %c0_112, %c0_113] : memref<27x4x8xbf16, #tpu.memory_space<vmem>>, vector<1x4x8xbf16>
    %167 = vector.shape_cast %166 : vector<1x4x8xbf16> to vector<4x8xbf16>
    %168 = vector.extract_strided_slice %149 {offsets = [0, 27], sizes = [8, 800], strides = [1, 1]} : vector<8x1152xbf16> to vector<8x800xbf16>
    %cst_114 = arith.constant dense<0.000000e+00> : vector<4x800xf32>
    %169 = tpu.matmul %167, %168, %cst_114 {dimension_numbers = #tpu.dot_dimension_numbers<[1], [0], [0], [1], [0, 0, 1, 1], [], []>} : vector<4x8xbf16>, vector<8x800xbf16>, vector<4x800xf32> -> vector<4x800xf32>
    %170 = arith.addf %165, %169 : vector<4x800xf32>
    %c4_115 = arith.constant 4 : index
    %c0_116 = arith.constant 0 : index
    %c0_117 = arith.constant 0 : index
    %171 = vector.load %arg5[%c4_115, %c0_116, %c0_117] : memref<27x4x8xbf16, #tpu.memory_space<vmem>>, vector<1x4x8xbf16>
    %172 = vector.shape_cast %171 : vector<1x4x8xbf16> to vector<4x8xbf16>
    %173 = vector.extract_strided_slice %149 {offsets = [0, 28], sizes = [8, 800], strides = [1, 1]} : vector<8x1152xbf16> to vector<8x800xbf16>
    %cst_118 = arith.constant dense<0.000000e+00> : vector<4x800xf32>
    %174 = tpu.matmul %172, %173, %cst_118 {dimension_numbers = #tpu.dot_dimension_numbers<[1], [0], [0], [1], [0, 0, 1, 1], [], []>} : vector<4x8xbf16>, vector<8x800xbf16>, vector<4x800xf32> -> vector<4x800xf32>
    %175 = arith.addf %170, %174 : vector<4x800xf32>
    %c5_119 = arith.constant 5 : index
    %c0_120 = arith.constant 0 : index
    %c0_121 = arith.constant 0 : index
    %176 = vector.load %arg5[%c5_119, %c0_120, %c0_121] : memref<27x4x8xbf16, #tpu.memory_space<vmem>>, vector<1x4x8xbf16>
    %177 = vector.shape_cast %176 : vector<1x4x8xbf16> to vector<4x8xbf16>
    %178 = vector.extract_strided_slice %149 {offsets = [0, 29], sizes = [8, 800], strides = [1, 1]} : vector<8x1152xbf16> to vector<8x800xbf16>
    %cst_122 = arith.constant dense<0.000000e+00> : vector<4x800xf32>
    %179 = tpu.matmul %177, %178, %cst_122 {dimension_numbers = #tpu.dot_dimension_numbers<[1], [0], [0], [1], [0, 0, 1, 1], [], []>} : vector<4x8xbf16>, vector<8x800xbf16>, vector<4x800xf32> -> vector<4x800xf32>
    %180 = arith.addf %175, %179 : vector<4x800xf32>
    %c6_123 = arith.constant 6 : index
    %c0_124 = arith.constant 0 : index
    %c0_125 = arith.constant 0 : index
    %181 = vector.load %arg5[%c6_123, %c0_124, %c0_125] : memref<27x4x8xbf16, #tpu.memory_space<vmem>>, vector<1x4x8xbf16>
    %182 = vector.shape_cast %181 : vector<1x4x8xbf16> to vector<4x8xbf16>
    %183 = vector.extract_strided_slice %149 {offsets = [0, 37], sizes = [8, 800], strides = [1, 1]} : vector<8x1152xbf16> to vector<8x800xbf16>
    %cst_126 = arith.constant dense<0.000000e+00> : vector<4x800xf32>
    %184 = tpu.matmul %182, %183, %cst_126 {dimension_numbers = #tpu.dot_dimension_numbers<[1], [0], [0], [1], [0, 0, 1, 1], [], []>} : vector<4x8xbf16>, vector<8x800xbf16>, vector<4x800xf32> -> vector<4x800xf32>
    %185 = arith.addf %180, %184 : vector<4x800xf32>
    %c7_127 = arith.constant 7 : index
    %c0_128 = arith.constant 0 : index
    %c0_129 = arith.constant 0 : index
    %186 = vector.load %arg5[%c7_127, %c0_128, %c0_129] : memref<27x4x8xbf16, #tpu.memory_space<vmem>>, vector<1x4x8xbf16>
    %187 = vector.shape_cast %186 : vector<1x4x8xbf16> to vector<4x8xbf16>
    %188 = vector.extract_strided_slice %149 {offsets = [0, 38], sizes = [8, 800], strides = [1, 1]} : vector<8x1152xbf16> to vector<8x800xbf16>
    %cst_130 = arith.constant dense<0.000000e+00> : vector<4x800xf32>
    %189 = tpu.matmul %187, %188, %cst_130 {dimension_numbers = #tpu.dot_dimension_numbers<[1], [0], [0], [1], [0, 0, 1, 1], [], []>} : vector<4x8xbf16>, vector<8x800xbf16>, vector<4x800xf32> -> vector<4x800xf32>
    %190 = arith.addf %185, %189 : vector<4x800xf32>
    %c8_131 = arith.constant 8 : index
    %c0_132 = arith.constant 0 : index
    %c0_133 = arith.constant 0 : index
    %191 = vector.load %arg5[%c8_131, %c0_132, %c0_133] : memref<27x4x8xbf16, #tpu.memory_space<vmem>>, vector<1x4x8xbf16>
    %192 = vector.shape_cast %191 : vector<1x4x8xbf16> to vector<4x8xbf16>
    %193 = vector.extract_strided_slice %149 {offsets = [0, 39], sizes = [8, 800], strides = [1, 1]} : vector<8x1152xbf16> to vector<8x800xbf16>
    %cst_134 = arith.constant dense<0.000000e+00> : vector<4x800xf32>
    %194 = tpu.matmul %192, %193, %cst_134 {dimension_numbers = #tpu.dot_dimension_numbers<[1], [0], [0], [1], [0, 0, 1, 1], [], []>} : vector<4x8xbf16>, vector<8x800xbf16>, vector<4x800xf32> -> vector<4x800xf32>
    %195 = arith.addf %190, %194 : vector<4x800xf32>
    %c9_135 = arith.constant 9 : index
    %c0_136 = arith.constant 0 : index
    %c0_137 = arith.constant 0 : index
    %196 = vector.load %arg5[%c9_135, %c0_136, %c0_137] : memref<27x4x8xbf16, #tpu.memory_space<vmem>>, vector<1x4x8xbf16>
    %197 = vector.shape_cast %196 : vector<1x4x8xbf16> to vector<4x8xbf16>
    %198 = vector.extract_strided_slice %149 {offsets = [0, 117], sizes = [8, 800], strides = [1, 1]} : vector<8x1152xbf16> to vector<8x800xbf16>
    %cst_138 = arith.constant dense<0.000000e+00> : vector<4x800xf32>
    %199 = tpu.matmul %197, %198, %cst_138 {dimension_numbers = #tpu.dot_dimension_numbers<[1], [0], [0], [1], [0, 0, 1, 1], [], []>} : vector<4x8xbf16>, vector<8x800xbf16>, vector<4x800xf32> -> vector<4x800xf32>
    %200 = arith.addf %195, %199 : vector<4x800xf32>
    %c10_139 = arith.constant 10 : index
    %c0_140 = arith.constant 0 : index
    %c0_141 = arith.constant 0 : index
    %201 = vector.load %arg5[%c10_139, %c0_140, %c0_141] : memref<27x4x8xbf16, #tpu.memory_space<vmem>>, vector<1x4x8xbf16>
    %202 = vector.shape_cast %201 : vector<1x4x8xbf16> to vector<4x8xbf16>
    %203 = vector.extract_strided_slice %149 {offsets = [0, 118], sizes = [8, 800], strides = [1, 1]} : vector<8x1152xbf16> to vector<8x800xbf16>
    %cst_142 = arith.constant dense<0.000000e+00> : vector<4x800xf32>
    %204 = tpu.matmul %202, %203, %cst_142 {dimension_numbers = #tpu.dot_dimension_numbers<[1], [0], [0], [1], [0, 0, 1, 1], [], []>} : vector<4x8xbf16>, vector<8x800xbf16>, vector<4x800xf32> -> vector<4x800xf32>
    %205 = arith.addf %200, %204 : vector<4x800xf32>
    %c11_143 = arith.constant 11 : index
    %c0_144 = arith.constant 0 : index
    %c0_145 = arith.constant 0 : index
    %206 = vector.load %arg5[%c11_143, %c0_144, %c0_145] : memref<27x4x8xbf16, #tpu.memory_space<vmem>>, vector<1x4x8xbf16>
    %207 = vector.shape_cast %206 : vector<1x4x8xbf16> to vector<4x8xbf16>
    %208 = vector.extract_strided_slice %149 {offsets = [0, 119], sizes = [8, 800], strides = [1, 1]} : vector<8x1152xbf16> to vector<8x800xbf16>
    %cst_146 = arith.constant dense<0.000000e+00> : vector<4x800xf32>
    %209 = tpu.matmul %207, %208, %cst_146 {dimension_numbers = #tpu.dot_dimension_numbers<[1], [0], [0], [1], [0, 0, 1, 1], [], []>} : vector<4x8xbf16>, vector<8x800xbf16>, vector<4x800xf32> -> vector<4x800xf32>
    %210 = arith.addf %205, %209 : vector<4x800xf32>
    %c12_147 = arith.constant 12 : index
    %c0_148 = arith.constant 0 : index
    %c0_149 = arith.constant 0 : index
    %211 = vector.load %arg5[%c12_147, %c0_148, %c0_149] : memref<27x4x8xbf16, #tpu.memory_space<vmem>>, vector<1x4x8xbf16>
    %212 = vector.shape_cast %211 : vector<1x4x8xbf16> to vector<4x8xbf16>
    %213 = vector.extract_strided_slice %149 {offsets = [0, 127], sizes = [8, 800], strides = [1, 1]} : vector<8x1152xbf16> to vector<8x800xbf16>
    %cst_150 = arith.constant dense<0.000000e+00> : vector<4x800xf32>
    %214 = tpu.matmul %212, %213, %cst_150 {dimension_numbers = #tpu.dot_dimension_numbers<[1], [0], [0], [1], [0, 0, 1, 1], [], []>} : vector<4x8xbf16>, vector<8x800xbf16>, vector<4x800xf32> -> vector<4x800xf32>
    %215 = arith.addf %210, %214 : vector<4x800xf32>
    %c13_151 = arith.constant 13 : index
    %c0_152 = arith.constant 0 : index
    %c0_153 = arith.constant 0 : index
    %216 = vector.load %arg5[%c13_151, %c0_152, %c0_153] : memref<27x4x8xbf16, #tpu.memory_space<vmem>>, vector<1x4x8xbf16>
    %217 = vector.shape_cast %216 : vector<1x4x8xbf16> to vector<4x8xbf16>
    %218 = vector.extract_strided_slice %149 {offsets = [0, 128], sizes = [8, 800], strides = [1, 1]} : vector<8x1152xbf16> to vector<8x800xbf16>
    %cst_154 = arith.constant dense<0.000000e+00> : vector<4x800xf32>
    %219 = tpu.matmul %217, %218, %cst_154 {dimension_numbers = #tpu.dot_dimension_numbers<[1], [0], [0], [1], [0, 0, 1, 1], [], []>} : vector<4x8xbf16>, vector<8x800xbf16>, vector<4x800xf32> -> vector<4x800xf32>
    %220 = arith.addf %215, %219 : vector<4x800xf32>
    %c14_155 = arith.constant 14 : index
    %c0_156 = arith.constant 0 : index
    %c0_157 = arith.constant 0 : index
    %221 = vector.load %arg5[%c14_155, %c0_156, %c0_157] : memref<27x4x8xbf16, #tpu.memory_space<vmem>>, vector<1x4x8xbf16>
    %222 = vector.shape_cast %221 : vector<1x4x8xbf16> to vector<4x8xbf16>
    %223 = vector.extract_strided_slice %149 {offsets = [0, 129], sizes = [8, 800], strides = [1, 1]} : vector<8x1152xbf16> to vector<8x800xbf16>
    %cst_158 = arith.constant dense<0.000000e+00> : vector<4x800xf32>
    %224 = tpu.matmul %222, %223, %cst_158 {dimension_numbers = #tpu.dot_dimension_numbers<[1], [0], [0], [1], [0, 0, 1, 1], [], []>} : vector<4x8xbf16>, vector<8x800xbf16>, vector<4x800xf32> -> vector<4x800xf32>
    %225 = arith.addf %220, %224 : vector<4x800xf32>
    %c15_159 = arith.constant 15 : index
    %c0_160 = arith.constant 0 : index
    %c0_161 = arith.constant 0 : index
    %226 = vector.load %arg5[%c15_159, %c0_160, %c0_161] : memref<27x4x8xbf16, #tpu.memory_space<vmem>>, vector<1x4x8xbf16>
    %227 = vector.shape_cast %226 : vector<1x4x8xbf16> to vector<4x8xbf16>
    %228 = vector.extract_strided_slice %149 {offsets = [0, 137], sizes = [8, 800], strides = [1, 1]} : vector<8x1152xbf16> to vector<8x800xbf16>
    %cst_162 = arith.constant dense<0.000000e+00> : vector<4x800xf32>
    %229 = tpu.matmul %227, %228, %cst_162 {dimension_numbers = #tpu.dot_dimension_numbers<[1], [0], [0], [1], [0, 0, 1, 1], [], []>} : vector<4x8xbf16>, vector<8x800xbf16>, vector<4x800xf32> -> vector<4x800xf32>
    %230 = arith.addf %225, %229 : vector<4x800xf32>
    %c16_163 = arith.constant 16 : index
    %c0_164 = arith.constant 0 : index
    %c0_165 = arith.constant 0 : index
    %231 = vector.load %arg5[%c16_163, %c0_164, %c0_165] : memref<27x4x8xbf16, #tpu.memory_space<vmem>>, vector<1x4x8xbf16>
    %232 = vector.shape_cast %231 : vector<1x4x8xbf16> to vector<4x8xbf16>
    %233 = vector.extract_strided_slice %149 {offsets = [0, 138], sizes = [8, 800], strides = [1, 1]} : vector<8x1152xbf16> to vector<8x800xbf16>
    %cst_166 = arith.constant dense<0.000000e+00> : vector<4x800xf32>
    %234 = tpu.matmul %232, %233, %cst_166 {dimension_numbers = #tpu.dot_dimension_numbers<[1], [0], [0], [1], [0, 0, 1, 1], [], []>} : vector<4x8xbf16>, vector<8x800xbf16>, vector<4x800xf32> -> vector<4x800xf32>
    %235 = arith.addf %230, %234 : vector<4x800xf32>
    %c17_167 = arith.constant 17 : index
    %c0_168 = arith.constant 0 : index
    %c0_169 = arith.constant 0 : index
    %236 = vector.load %arg5[%c17_167, %c0_168, %c0_169] : memref<27x4x8xbf16, #tpu.memory_space<vmem>>, vector<1x4x8xbf16>
    %237 = vector.shape_cast %236 : vector<1x4x8xbf16> to vector<4x8xbf16>
    %238 = vector.extract_strided_slice %149 {offsets = [0, 139], sizes = [8, 800], strides = [1, 1]} : vector<8x1152xbf16> to vector<8x800xbf16>
    %cst_170 = arith.constant dense<0.000000e+00> : vector<4x800xf32>
    %239 = tpu.matmul %237, %238, %cst_170 {dimension_numbers = #tpu.dot_dimension_numbers<[1], [0], [0], [1], [0, 0, 1, 1], [], []>} : vector<4x8xbf16>, vector<8x800xbf16>, vector<4x800xf32> -> vector<4x800xf32>
    %240 = arith.addf %235, %239 : vector<4x800xf32>
    %c18_171 = arith.constant 18 : index
    %c0_172 = arith.constant 0 : index
    %c0_173 = arith.constant 0 : index
    %241 = vector.load %arg5[%c18_171, %c0_172, %c0_173] : memref<27x4x8xbf16, #tpu.memory_space<vmem>>, vector<1x4x8xbf16>
    %242 = vector.shape_cast %241 : vector<1x4x8xbf16> to vector<4x8xbf16>
    %243 = vector.extract_strided_slice %149 {offsets = [0, 217], sizes = [8, 800], strides = [1, 1]} : vector<8x1152xbf16> to vector<8x800xbf16>
    %cst_174 = arith.constant dense<0.000000e+00> : vector<4x800xf32>
    %244 = tpu.matmul %242, %243, %cst_174 {dimension_numbers = #tpu.dot_dimension_numbers<[1], [0], [0], [1], [0, 0, 1, 1], [], []>} : vector<4x8xbf16>, vector<8x800xbf16>, vector<4x800xf32> -> vector<4x800xf32>
    %245 = arith.addf %240, %244 : vector<4x800xf32>
    %c19_175 = arith.constant 19 : index
    %c0_176 = arith.constant 0 : index
    %c0_177 = arith.constant 0 : index
    %246 = vector.load %arg5[%c19_175, %c0_176, %c0_177] : memref<27x4x8xbf16, #tpu.memory_space<vmem>>, vector<1x4x8xbf16>
    %247 = vector.shape_cast %246 : vector<1x4x8xbf16> to vector<4x8xbf16>
    %248 = vector.extract_strided_slice %149 {offsets = [0, 218], sizes = [8, 800], strides = [1, 1]} : vector<8x1152xbf16> to vector<8x800xbf16>
    %cst_178 = arith.constant dense<0.000000e+00> : vector<4x800xf32>
    %249 = tpu.matmul %247, %248, %cst_178 {dimension_numbers = #tpu.dot_dimension_numbers<[1], [0], [0], [1], [0, 0, 1, 1], [], []>} : vector<4x8xbf16>, vector<8x800xbf16>, vector<4x800xf32> -> vector<4x800xf32>
    %250 = arith.addf %245, %249 : vector<4x800xf32>
    %c20_179 = arith.constant 20 : index
    %c0_180 = arith.constant 0 : index
    %c0_181 = arith.constant 0 : index
    %251 = vector.load %arg5[%c20_179, %c0_180, %c0_181] : memref<27x4x8xbf16, #tpu.memory_space<vmem>>, vector<1x4x8xbf16>
    %252 = vector.shape_cast %251 : vector<1x4x8xbf16> to vector<4x8xbf16>
    %253 = vector.extract_strided_slice %149 {offsets = [0, 219], sizes = [8, 800], strides = [1, 1]} : vector<8x1152xbf16> to vector<8x800xbf16>
    %cst_182 = arith.constant dense<0.000000e+00> : vector<4x800xf32>
    %254 = tpu.matmul %252, %253, %cst_182 {dimension_numbers = #tpu.dot_dimension_numbers<[1], [0], [0], [1], [0, 0, 1, 1], [], []>} : vector<4x8xbf16>, vector<8x800xbf16>, vector<4x800xf32> -> vector<4x800xf32>
    %255 = arith.addf %250, %254 : vector<4x800xf32>
    %c21_183 = arith.constant 21 : index
    %c0_184 = arith.constant 0 : index
    %c0_185 = arith.constant 0 : index
    %256 = vector.load %arg5[%c21_183, %c0_184, %c0_185] : memref<27x4x8xbf16, #tpu.memory_space<vmem>>, vector<1x4x8xbf16>
    %257 = vector.shape_cast %256 : vector<1x4x8xbf16> to vector<4x8xbf16>
    %258 = vector.extract_strided_slice %149 {offsets = [0, 227], sizes = [8, 800], strides = [1, 1]} : vector<8x1152xbf16> to vector<8x800xbf16>
    %cst_186 = arith.constant dense<0.000000e+00> : vector<4x800xf32>
    %259 = tpu.matmul %257, %258, %cst_186 {dimension_numbers = #tpu.dot_dimension_numbers<[1], [0], [0], [1], [0, 0, 1, 1], [], []>} : vector<4x8xbf16>, vector<8x800xbf16>, vector<4x800xf32> -> vector<4x800xf32>
    %260 = arith.addf %255, %259 : vector<4x800xf32>
    %c22_187 = arith.constant 22 : index
    %c0_188 = arith.constant 0 : index
    %c0_189 = arith.constant 0 : index
    %261 = vector.load %arg5[%c22_187, %c0_188, %c0_189] : memref<27x4x8xbf16, #tpu.memory_space<vmem>>, vector<1x4x8xbf16>
    %262 = vector.shape_cast %261 : vector<1x4x8xbf16> to vector<4x8xbf16>
    %263 = vector.extract_strided_slice %149 {offsets = [0, 228], sizes = [8, 800], strides = [1, 1]} : vector<8x1152xbf16> to vector<8x800xbf16>
    %cst_190 = arith.constant dense<0.000000e+00> : vector<4x800xf32>
    %264 = tpu.matmul %262, %263, %cst_190 {dimension_numbers = #tpu.dot_dimension_numbers<[1], [0], [0], [1], [0, 0, 1, 1], [], []>} : vector<4x8xbf16>, vector<8x800xbf16>, vector<4x800xf32> -> vector<4x800xf32>
    %265 = arith.addf %260, %264 : vector<4x800xf32>
    %c23_191 = arith.constant 23 : index
    %c0_192 = arith.constant 0 : index
    %c0_193 = arith.constant 0 : index
    %266 = vector.load %arg5[%c23_191, %c0_192, %c0_193] : memref<27x4x8xbf16, #tpu.memory_space<vmem>>, vector<1x4x8xbf16>
    %267 = vector.shape_cast %266 : vector<1x4x8xbf16> to vector<4x8xbf16>
    %268 = vector.extract_strided_slice %149 {offsets = [0, 229], sizes = [8, 800], strides = [1, 1]} : vector<8x1152xbf16> to vector<8x800xbf16>
    %cst_194 = arith.constant dense<0.000000e+00> : vector<4x800xf32>
    %269 = tpu.matmul %267, %268, %cst_194 {dimension_numbers = #tpu.dot_dimension_numbers<[1], [0], [0], [1], [0, 0, 1, 1], [], []>} : vector<4x8xbf16>, vector<8x800xbf16>, vector<4x800xf32> -> vector<4x800xf32>
    %270 = arith.addf %265, %269 : vector<4x800xf32>
    %c24_195 = arith.constant 24 : index
    %c0_196 = arith.constant 0 : index
    %c0_197 = arith.constant 0 : index
    %271 = vector.load %arg5[%c24_195, %c0_196, %c0_197] : memref<27x4x8xbf16, #tpu.memory_space<vmem>>, vector<1x4x8xbf16>
    %272 = vector.shape_cast %271 : vector<1x4x8xbf16> to vector<4x8xbf16>
    %273 = vector.extract_strided_slice %149 {offsets = [0, 237], sizes = [8, 800], strides = [1, 1]} : vector<8x1152xbf16> to vector<8x800xbf16>
    %cst_198 = arith.constant dense<0.000000e+00> : vector<4x800xf32>
    %274 = tpu.matmul %272, %273, %cst_198 {dimension_numbers = #tpu.dot_dimension_numbers<[1], [0], [0], [1], [0, 0, 1, 1], [], []>} : vector<4x8xbf16>, vector<8x800xbf16>, vector<4x800xf32> -> vector<4x800xf32>
    %275 = arith.addf %270, %274 : vector<4x800xf32>
    %c25_199 = arith.constant 25 : index
    %c0_200 = arith.constant 0 : index
    %c0_201 = arith.constant 0 : index
    %276 = vector.load %arg5[%c25_199, %c0_200, %c0_201] : memref<27x4x8xbf16, #tpu.memory_space<vmem>>, vector<1x4x8xbf16>
    %277 = vector.shape_cast %276 : vector<1x4x8xbf16> to vector<4x8xbf16>
    %278 = vector.extract_strided_slice %149 {offsets = [0, 238], sizes = [8, 800], strides = [1, 1]} : vector<8x1152xbf16> to vector<8x800xbf16>
    %cst_202 = arith.constant dense<0.000000e+00> : vector<4x800xf32>
    %279 = tpu.matmul %277, %278, %cst_202 {dimension_numbers = #tpu.dot_dimension_numbers<[1], [0], [0], [1], [0, 0, 1, 1], [], []>} : vector<4x8xbf16>, vector<8x800xbf16>, vector<4x800xf32> -> vector<4x800xf32>
    %280 = arith.addf %275, %279 : vector<4x800xf32>
    %c26_203 = arith.constant 26 : index
    %c0_204 = arith.constant 0 : index
    %c0_205 = arith.constant 0 : index
    %281 = vector.load %arg5[%c26_203, %c0_204, %c0_205] : memref<27x4x8xbf16, #tpu.memory_space<vmem>>, vector<1x4x8xbf16>
    %282 = vector.shape_cast %281 : vector<1x4x8xbf16> to vector<4x8xbf16>
    %283 = vector.extract_strided_slice %149 {offsets = [0, 239], sizes = [8, 800], strides = [1, 1]} : vector<8x1152xbf16> to vector<8x800xbf16>
    %cst_206 = arith.constant dense<0.000000e+00> : vector<4x800xf32>
    %284 = tpu.matmul %282, %283, %cst_206 {dimension_numbers = #tpu.dot_dimension_numbers<[1], [0], [0], [1], [0, 0, 1, 1], [], []>} : vector<4x8xbf16>, vector<8x800xbf16>, vector<4x800xf32> -> vector<4x800xf32>
    %285 = arith.addf %280, %284 : vector<4x800xf32>
    %286 = arith.truncf %285 : vector<4x800xf32> to vector<4x800xbf16>
    %287 = vector.broadcast %0 : vector<1x800xbf16> to vector<4x800xbf16>
    %288 = arith.mulf %286, %287 : vector<4x800xbf16>
    %c0_207 = arith.constant 0 : index
    %c128_208 = arith.constant 128 : index
    %289 = vector.load %arg12[%c0_207, %c128_208] : memref<4x1152xbf16, #tpu.memory_space<vmem>>, vector<4x800xbf16>
    tpu.vector_store %arg12[%c0_207, %c128_208], %288 {strides = array<i32>} : memref<4x1152xbf16, #tpu.memory_space<vmem>>, vector<4x800xbf16>,
    %c0_209 = arith.constant 0 : index
    %c0_210 = arith.constant 0 : index
    %290 = vector.load %arg12[%c0_209, %c0_210] : memref<4x1152xbf16, #tpu.memory_space<vmem>>, vector<4x1152xbf16>
    %cst_211 = arith.constant 0.000000e+00 : f32
    %291 = vector.broadcast %cst_211 : f32 to vector<4x800xf32>
    %c0_212 = arith.constant 0 : index
    %c0_213 = arith.constant 0 : index
    %c0_214 = arith.constant 0 : index
    %292 = vector.load %arg6[%c0_212, %c0_213, %c0_214] : memref<27x4x4xbf16, #tpu.memory_space<vmem>>, vector<1x4x4xbf16>
    %293 = vector.shape_cast %292 : vector<1x4x4xbf16> to vector<4x4xbf16>
    %294 = vector.extract_strided_slice %290 {offsets = [0, 17], sizes = [4, 800], strides = [1, 1]} : vector<4x1152xbf16> to vector<4x800xbf16>
    %cst_215 = arith.constant dense<0.000000e+00> : vector<4x800xf32>
    %295 = tpu.matmul %293, %294, %cst_215 {dimension_numbers = #tpu.dot_dimension_numbers<[1], [0], [0], [1], [0, 0, 1, 1], [], []>} : vector<4x4xbf16>, vector<4x800xbf16>, vector<4x800xf32> -> vector<4x800xf32>
    %296 = arith.addf %291, %295 : vector<4x800xf32>
    %c1_216 = arith.constant 1 : index
    %c0_217 = arith.constant 0 : index
    %c0_218 = arith.constant 0 : index
    %297 = vector.load %arg6[%c1_216, %c0_217, %c0_218] : memref<27x4x4xbf16, #tpu.memory_space<vmem>>, vector<1x4x4xbf16>
    %298 = vector.shape_cast %297 : vector<1x4x4xbf16> to vector<4x4xbf16>
    %299 = vector.extract_strided_slice %290 {offsets = [0, 18], sizes = [4, 800], strides = [1, 1]} : vector<4x1152xbf16> to vector<4x800xbf16>
    %cst_219 = arith.constant dense<0.000000e+00> : vector<4x800xf32>
    %300 = tpu.matmul %298, %299, %cst_219 {dimension_numbers = #tpu.dot_dimension_numbers<[1], [0], [0], [1], [0, 0, 1, 1], [], []>} : vector<4x4xbf16>, vector<4x800xbf16>, vector<4x800xf32> -> vector<4x800xf32>
    %301 = arith.addf %296, %300 : vector<4x800xf32>
    %c2_220 = arith.constant 2 : index
    %c0_221 = arith.constant 0 : index
    %c0_222 = arith.constant 0 : index
    %302 = vector.load %arg6[%c2_220, %c0_221, %c0_222] : memref<27x4x4xbf16, #tpu.memory_space<vmem>>, vector<1x4x4xbf16>
    %303 = vector.shape_cast %302 : vector<1x4x4xbf16> to vector<4x4xbf16>
    %304 = vector.extract_strided_slice %290 {offsets = [0, 19], sizes = [4, 800], strides = [1, 1]} : vector<4x1152xbf16> to vector<4x800xbf16>
    %cst_223 = arith.constant dense<0.000000e+00> : vector<4x800xf32>
    %305 = tpu.matmul %303, %304, %cst_223 {dimension_numbers = #tpu.dot_dimension_numbers<[1], [0], [0], [1], [0, 0, 1, 1], [], []>} : vector<4x4xbf16>, vector<4x800xbf16>, vector<4x800xf32> -> vector<4x800xf32>
    %306 = arith.addf %301, %305 : vector<4x800xf32>
    %c3_224 = arith.constant 3 : index
    %c0_225 = arith.constant 0 : index
    %c0_226 = arith.constant 0 : index
    %307 = vector.load %arg6[%c3_224, %c0_225, %c0_226] : memref<27x4x4xbf16, #tpu.memory_space<vmem>>, vector<1x4x4xbf16>
    %308 = vector.shape_cast %307 : vector<1x4x4xbf16> to vector<4x4xbf16>
    %309 = vector.extract_strided_slice %290 {offsets = [0, 27], sizes = [4, 800], strides = [1, 1]} : vector<4x1152xbf16> to vector<4x800xbf16>
    %cst_227 = arith.constant dense<0.000000e+00> : vector<4x800xf32>
    %310 = tpu.matmul %308, %309, %cst_227 {dimension_numbers = #tpu.dot_dimension_numbers<[1], [0], [0], [1], [0, 0, 1, 1], [], []>} : vector<4x4xbf16>, vector<4x800xbf16>, vector<4x800xf32> -> vector<4x800xf32>
    %311 = arith.addf %306, %310 : vector<4x800xf32>
    %c4_228 = arith.constant 4 : index
    %c0_229 = arith.constant 0 : index
    %c0_230 = arith.constant 0 : index
    %312 = vector.load %arg6[%c4_228, %c0_229, %c0_230] : memref<27x4x4xbf16, #tpu.memory_space<vmem>>, vector<1x4x4xbf16>
    %313 = vector.shape_cast %312 : vector<1x4x4xbf16> to vector<4x4xbf16>
    %314 = vector.extract_strided_slice %290 {offsets = [0, 28], sizes = [4, 800], strides = [1, 1]} : vector<4x1152xbf16> to vector<4x800xbf16>
    %cst_231 = arith.constant dense<0.000000e+00> : vector<4x800xf32>
    %315 = tpu.matmul %313, %314, %cst_231 {dimension_numbers = #tpu.dot_dimension_numbers<[1], [0], [0], [1], [0, 0, 1, 1], [], []>} : vector<4x4xbf16>, vector<4x800xbf16>, vector<4x800xf32> -> vector<4x800xf32>
    %316 = arith.addf %311, %315 : vector<4x800xf32>
    %c5_232 = arith.constant 5 : index
    %c0_233 = arith.constant 0 : index
    %c0_234 = arith.constant 0 : index
    %317 = vector.load %arg6[%c5_232, %c0_233, %c0_234] : memref<27x4x4xbf16, #tpu.memory_space<vmem>>, vector<1x4x4xbf16>
    %318 = vector.shape_cast %317 : vector<1x4x4xbf16> to vector<4x4xbf16>
    %319 = vector.extract_strided_slice %290 {offsets = [0, 29], sizes = [4, 800], strides = [1, 1]} : vector<4x1152xbf16> to vector<4x800xbf16>
    %cst_235 = arith.constant dense<0.000000e+00> : vector<4x800xf32>
    %320 = tpu.matmul %318, %319, %cst_235 {dimension_numbers = #tpu.dot_dimension_numbers<[1], [0], [0], [1], [0, 0, 1, 1], [], []>} : vector<4x4xbf16>, vector<4x800xbf16>, vector<4x800xf32> -> vector<4x800xf32>
    %321 = arith.addf %316, %320 : vector<4x800xf32>
    %c6_236 = arith.constant 6 : index
    %c0_237 = arith.constant 0 : index
    %c0_238 = arith.constant 0 : index
    %322 = vector.load %arg6[%c6_236, %c0_237, %c0_238] : memref<27x4x4xbf16, #tpu.memory_space<vmem>>, vector<1x4x4xbf16>
    %323 = vector.shape_cast %322 : vector<1x4x4xbf16> to vector<4x4xbf16>
    %324 = vector.extract_strided_slice %290 {offsets = [0, 37], sizes = [4, 800], strides = [1, 1]} : vector<4x1152xbf16> to vector<4x800xbf16>
    %cst_239 = arith.constant dense<0.000000e+00> : vector<4x800xf32>
    %325 = tpu.matmul %323, %324, %cst_239 {dimension_numbers = #tpu.dot_dimension_numbers<[1], [0], [0], [1], [0, 0, 1, 1], [], []>} : vector<4x4xbf16>, vector<4x800xbf16>, vector<4x800xf32> -> vector<4x800xf32>
    %326 = arith.addf %321, %325 : vector<4x800xf32>
    %c7_240 = arith.constant 7 : index
    %c0_241 = arith.constant 0 : index
    %c0_242 = arith.constant 0 : index
    %327 = vector.load %arg6[%c7_240, %c0_241, %c0_242] : memref<27x4x4xbf16, #tpu.memory_space<vmem>>, vector<1x4x4xbf16>
    %328 = vector.shape_cast %327 : vector<1x4x4xbf16> to vector<4x4xbf16>
    %329 = vector.extract_strided_slice %290 {offsets = [0, 38], sizes = [4, 800], strides = [1, 1]} : vector<4x1152xbf16> to vector<4x800xbf16>
    %cst_243 = arith.constant dense<0.000000e+00> : vector<4x800xf32>
    %330 = tpu.matmul %328, %329, %cst_243 {dimension_numbers = #tpu.dot_dimension_numbers<[1], [0], [0], [1], [0, 0, 1, 1], [], []>} : vector<4x4xbf16>, vector<4x800xbf16>, vector<4x800xf32> -> vector<4x800xf32>
    %331 = arith.addf %326, %330 : vector<4x800xf32>
    %c8_244 = arith.constant 8 : index
    %c0_245 = arith.constant 0 : index
    %c0_246 = arith.constant 0 : index
    %332 = vector.load %arg6[%c8_244, %c0_245, %c0_246] : memref<27x4x4xbf16, #tpu.memory_space<vmem>>, vector<1x4x4xbf16>
    %333 = vector.shape_cast %332 : vector<1x4x4xbf16> to vector<4x4xbf16>
    %334 = vector.extract_strided_slice %290 {offsets = [0, 39], sizes = [4, 800], strides = [1, 1]} : vector<4x1152xbf16> to vector<4x800xbf16>
    %cst_247 = arith.constant dense<0.000000e+00> : vector<4x800xf32>
    %335 = tpu.matmul %333, %334, %cst_247 {dimension_numbers = #tpu.dot_dimension_numbers<[1], [0], [0], [1], [0, 0, 1, 1], [], []>} : vector<4x4xbf16>, vector<4x800xbf16>, vector<4x800xf32> -> vector<4x800xf32>
    %336 = arith.addf %331, %335 : vector<4x800xf32>
    %c9_248 = arith.constant 9 : index
    %c0_249 = arith.constant 0 : index
    %c0_250 = arith.constant 0 : index
    %337 = vector.load %arg6[%c9_248, %c0_249, %c0_250] : memref<27x4x4xbf16, #tpu.memory_space<vmem>>, vector<1x4x4xbf16>
    %338 = vector.shape_cast %337 : vector<1x4x4xbf16> to vector<4x4xbf16>
    %339 = vector.extract_strided_slice %290 {offsets = [0, 117], sizes = [4, 800], strides = [1, 1]} : vector<4x1152xbf16> to vector<4x800xbf16>
    %cst_251 = arith.constant dense<0.000000e+00> : vector<4x800xf32>
    %340 = tpu.matmul %338, %339, %cst_251 {dimension_numbers = #tpu.dot_dimension_numbers<[1], [0], [0], [1], [0, 0, 1, 1], [], []>} : vector<4x4xbf16>, vector<4x800xbf16>, vector<4x800xf32> -> vector<4x800xf32>
    %341 = arith.addf %336, %340 : vector<4x800xf32>
    %c10_252 = arith.constant 10 : index
    %c0_253 = arith.constant 0 : index
    %c0_254 = arith.constant 0 : index
    %342 = vector.load %arg6[%c10_252, %c0_253, %c0_254] : memref<27x4x4xbf16, #tpu.memory_space<vmem>>, vector<1x4x4xbf16>
    %343 = vector.shape_cast %342 : vector<1x4x4xbf16> to vector<4x4xbf16>
    %344 = vector.extract_strided_slice %290 {offsets = [0, 118], sizes = [4, 800], strides = [1, 1]} : vector<4x1152xbf16> to vector<4x800xbf16>
    %cst_255 = arith.constant dense<0.000000e+00> : vector<4x800xf32>
    %345 = tpu.matmul %343, %344, %cst_255 {dimension_numbers = #tpu.dot_dimension_numbers<[1], [0], [0], [1], [0, 0, 1, 1], [], []>} : vector<4x4xbf16>, vector<4x800xbf16>, vector<4x800xf32> -> vector<4x800xf32>
    %346 = arith.addf %341, %345 : vector<4x800xf32>
    %c11_256 = arith.constant 11 : index
    %c0_257 = arith.constant 0 : index
    %c0_258 = arith.constant 0 : index
    %347 = vector.load %arg6[%c11_256, %c0_257, %c0_258] : memref<27x4x4xbf16, #tpu.memory_space<vmem>>, vector<1x4x4xbf16>
    %348 = vector.shape_cast %347 : vector<1x4x4xbf16> to vector<4x4xbf16>
    %349 = vector.extract_strided_slice %290 {offsets = [0, 119], sizes = [4, 800], strides = [1, 1]} : vector<4x1152xbf16> to vector<4x800xbf16>
    %cst_259 = arith.constant dense<0.000000e+00> : vector<4x800xf32>
    %350 = tpu.matmul %348, %349, %cst_259 {dimension_numbers = #tpu.dot_dimension_numbers<[1], [0], [0], [1], [0, 0, 1, 1], [], []>} : vector<4x4xbf16>, vector<4x800xbf16>, vector<4x800xf32> -> vector<4x800xf32>
    %351 = arith.addf %346, %350 : vector<4x800xf32>
    %c12_260 = arith.constant 12 : index
    %c0_261 = arith.constant 0 : index
    %c0_262 = arith.constant 0 : index
    %352 = vector.load %arg6[%c12_260, %c0_261, %c0_262] : memref<27x4x4xbf16, #tpu.memory_space<vmem>>, vector<1x4x4xbf16>
    %353 = vector.shape_cast %352 : vector<1x4x4xbf16> to vector<4x4xbf16>
    %354 = vector.extract_strided_slice %290 {offsets = [0, 127], sizes = [4, 800], strides = [1, 1]} : vector<4x1152xbf16> to vector<4x800xbf16>
    %cst_263 = arith.constant dense<0.000000e+00> : vector<4x800xf32>
    %355 = tpu.matmul %353, %354, %cst_263 {dimension_numbers = #tpu.dot_dimension_numbers<[1], [0], [0], [1], [0, 0, 1, 1], [], []>} : vector<4x4xbf16>, vector<4x800xbf16>, vector<4x800xf32> -> vector<4x800xf32>
    %356 = arith.addf %351, %355 : vector<4x800xf32>
    %c13_264 = arith.constant 13 : index
    %c0_265 = arith.constant 0 : index
    %c0_266 = arith.constant 0 : index
    %357 = vector.load %arg6[%c13_264, %c0_265, %c0_266] : memref<27x4x4xbf16, #tpu.memory_space<vmem>>, vector<1x4x4xbf16>
    %358 = vector.shape_cast %357 : vector<1x4x4xbf16> to vector<4x4xbf16>
    %359 = vector.extract_strided_slice %290 {offsets = [0, 128], sizes = [4, 800], strides = [1, 1]} : vector<4x1152xbf16> to vector<4x800xbf16>
    %cst_267 = arith.constant dense<0.000000e+00> : vector<4x800xf32>
    %360 = tpu.matmul %358, %359, %cst_267 {dimension_numbers = #tpu.dot_dimension_numbers<[1], [0], [0], [1], [0, 0, 1, 1], [], []>} : vector<4x4xbf16>, vector<4x800xbf16>, vector<4x800xf32> -> vector<4x800xf32>
    %361 = arith.addf %356, %360 : vector<4x800xf32>
    %c14_268 = arith.constant 14 : index
    %c0_269 = arith.constant 0 : index
    %c0_270 = arith.constant 0 : index
    %362 = vector.load %arg6[%c14_268, %c0_269, %c0_270] : memref<27x4x4xbf16, #tpu.memory_space<vmem>>, vector<1x4x4xbf16>
    %363 = vector.shape_cast %362 : vector<1x4x4xbf16> to vector<4x4xbf16>
    %364 = vector.extract_strided_slice %290 {offsets = [0, 129], sizes = [4, 800], strides = [1, 1]} : vector<4x1152xbf16> to vector<4x800xbf16>
    %cst_271 = arith.constant dense<0.000000e+00> : vector<4x800xf32>
    %365 = tpu.matmul %363, %364, %cst_271 {dimension_numbers = #tpu.dot_dimension_numbers<[1], [0], [0], [1], [0, 0, 1, 1], [], []>} : vector<4x4xbf16>, vector<4x800xbf16>, vector<4x800xf32> -> vector<4x800xf32>
    %366 = arith.addf %361, %365 : vector<4x800xf32>
    %c15_272 = arith.constant 15 : index
    %c0_273 = arith.constant 0 : index
    %c0_274 = arith.constant 0 : index
    %367 = vector.load %arg6[%c15_272, %c0_273, %c0_274] : memref<27x4x4xbf16, #tpu.memory_space<vmem>>, vector<1x4x4xbf16>
    %368 = vector.shape_cast %367 : vector<1x4x4xbf16> to vector<4x4xbf16>
    %369 = vector.extract_strided_slice %290 {offsets = [0, 137], sizes = [4, 800], strides = [1, 1]} : vector<4x1152xbf16> to vector<4x800xbf16>
    %cst_275 = arith.constant dense<0.000000e+00> : vector<4x800xf32>
    %370 = tpu.matmul %368, %369, %cst_275 {dimension_numbers = #tpu.dot_dimension_numbers<[1], [0], [0], [1], [0, 0, 1, 1], [], []>} : vector<4x4xbf16>, vector<4x800xbf16>, vector<4x800xf32> -> vector<4x800xf32>
    %371 = arith.addf %366, %370 : vector<4x800xf32>
    %c16_276 = arith.constant 16 : index
    %c0_277 = arith.constant 0 : index
    %c0_278 = arith.constant 0 : index
    %372 = vector.load %arg6[%c16_276, %c0_277, %c0_278] : memref<27x4x4xbf16, #tpu.memory_space<vmem>>, vector<1x4x4xbf16>
    %373 = vector.shape_cast %372 : vector<1x4x4xbf16> to vector<4x4xbf16>
    %374 = vector.extract_strided_slice %290 {offsets = [0, 138], sizes = [4, 800], strides = [1, 1]} : vector<4x1152xbf16> to vector<4x800xbf16>
    %cst_279 = arith.constant dense<0.000000e+00> : vector<4x800xf32>
    %375 = tpu.matmul %373, %374, %cst_279 {dimension_numbers = #tpu.dot_dimension_numbers<[1], [0], [0], [1], [0, 0, 1, 1], [], []>} : vector<4x4xbf16>, vector<4x800xbf16>, vector<4x800xf32> -> vector<4x800xf32>
    %376 = arith.addf %371, %375 : vector<4x800xf32>
    %c17_280 = arith.constant 17 : index
    %c0_281 = arith.constant 0 : index
    %c0_282 = arith.constant 0 : index
    %377 = vector.load %arg6[%c17_280, %c0_281, %c0_282] : memref<27x4x4xbf16, #tpu.memory_space<vmem>>, vector<1x4x4xbf16>
    %378 = vector.shape_cast %377 : vector<1x4x4xbf16> to vector<4x4xbf16>
    %379 = vector.extract_strided_slice %290 {offsets = [0, 139], sizes = [4, 800], strides = [1, 1]} : vector<4x1152xbf16> to vector<4x800xbf16>
    %cst_283 = arith.constant dense<0.000000e+00> : vector<4x800xf32>
    %380 = tpu.matmul %378, %379, %cst_283 {dimension_numbers = #tpu.dot_dimension_numbers<[1], [0], [0], [1], [0, 0, 1, 1], [], []>} : vector<4x4xbf16>, vector<4x800xbf16>, vector<4x800xf32> -> vector<4x800xf32>
    %381 = arith.addf %376, %380 : vector<4x800xf32>
    %c18_284 = arith.constant 18 : index
    %c0_285 = arith.constant 0 : index
    %c0_286 = arith.constant 0 : index
    %382 = vector.load %arg6[%c18_284, %c0_285, %c0_286] : memref<27x4x4xbf16, #tpu.memory_space<vmem>>, vector<1x4x4xbf16>
    %383 = vector.shape_cast %382 : vector<1x4x4xbf16> to vector<4x4xbf16>
    %384 = vector.extract_strided_slice %290 {offsets = [0, 217], sizes = [4, 800], strides = [1, 1]} : vector<4x1152xbf16> to vector<4x800xbf16>
    %cst_287 = arith.constant dense<0.000000e+00> : vector<4x800xf32>
    %385 = tpu.matmul %383, %384, %cst_287 {dimension_numbers = #tpu.dot_dimension_numbers<[1], [0], [0], [1], [0, 0, 1, 1], [], []>} : vector<4x4xbf16>, vector<4x800xbf16>, vector<4x800xf32> -> vector<4x800xf32>
    %386 = arith.addf %381, %385 : vector<4x800xf32>
    %c19_288 = arith.constant 19 : index
    %c0_289 = arith.constant 0 : index
    %c0_290 = arith.constant 0 : index
    %387 = vector.load %arg6[%c19_288, %c0_289, %c0_290] : memref<27x4x4xbf16, #tpu.memory_space<vmem>>, vector<1x4x4xbf16>
    %388 = vector.shape_cast %387 : vector<1x4x4xbf16> to vector<4x4xbf16>
    %389 = vector.extract_strided_slice %290 {offsets = [0, 218], sizes = [4, 800], strides = [1, 1]} : vector<4x1152xbf16> to vector<4x800xbf16>
    %cst_291 = arith.constant dense<0.000000e+00> : vector<4x800xf32>
    %390 = tpu.matmul %388, %389, %cst_291 {dimension_numbers = #tpu.dot_dimension_numbers<[1], [0], [0], [1], [0, 0, 1, 1], [], []>} : vector<4x4xbf16>, vector<4x800xbf16>, vector<4x800xf32> -> vector<4x800xf32>
    %391 = arith.addf %386, %390 : vector<4x800xf32>
    %c20_292 = arith.constant 20 : index
    %c0_293 = arith.constant 0 : index
    %c0_294 = arith.constant 0 : index
    %392 = vector.load %arg6[%c20_292, %c0_293, %c0_294] : memref<27x4x4xbf16, #tpu.memory_space<vmem>>, vector<1x4x4xbf16>
    %393 = vector.shape_cast %392 : vector<1x4x4xbf16> to vector<4x4xbf16>
    %394 = vector.extract_strided_slice %290 {offsets = [0, 219], sizes = [4, 800], strides = [1, 1]} : vector<4x1152xbf16> to vector<4x800xbf16>
    %cst_295 = arith.constant dense<0.000000e+00> : vector<4x800xf32>
    %395 = tpu.matmul %393, %394, %cst_295 {dimension_numbers = #tpu.dot_dimension_numbers<[1], [0], [0], [1], [0, 0, 1, 1], [], []>} : vector<4x4xbf16>, vector<4x800xbf16>, vector<4x800xf32> -> vector<4x800xf32>
    %396 = arith.addf %391, %395 : vector<4x800xf32>
    %c21_296 = arith.constant 21 : index
    %c0_297 = arith.constant 0 : index
    %c0_298 = arith.constant 0 : index
    %397 = vector.load %arg6[%c21_296, %c0_297, %c0_298] : memref<27x4x4xbf16, #tpu.memory_space<vmem>>, vector<1x4x4xbf16>
    %398 = vector.shape_cast %397 : vector<1x4x4xbf16> to vector<4x4xbf16>
    %399 = vector.extract_strided_slice %290 {offsets = [0, 227], sizes = [4, 800], strides = [1, 1]} : vector<4x1152xbf16> to vector<4x800xbf16>
    %cst_299 = arith.constant dense<0.000000e+00> : vector<4x800xf32>
    %400 = tpu.matmul %398, %399, %cst_299 {dimension_numbers = #tpu.dot_dimension_numbers<[1], [0], [0], [1], [0, 0, 1, 1], [], []>} : vector<4x4xbf16>, vector<4x800xbf16>, vector<4x800xf32> -> vector<4x800xf32>
    %401 = arith.addf %396, %400 : vector<4x800xf32>
    %c22_300 = arith.constant 22 : index
    %c0_301 = arith.constant 0 : index
    %c0_302 = arith.constant 0 : index
    %402 = vector.load %arg6[%c22_300, %c0_301, %c0_302] : memref<27x4x4xbf16, #tpu.memory_space<vmem>>, vector<1x4x4xbf16>
    %403 = vector.shape_cast %402 : vector<1x4x4xbf16> to vector<4x4xbf16>
    %404 = vector.extract_strided_slice %290 {offsets = [0, 228], sizes = [4, 800], strides = [1, 1]} : vector<4x1152xbf16> to vector<4x800xbf16>
    %cst_303 = arith.constant dense<0.000000e+00> : vector<4x800xf32>
    %405 = tpu.matmul %403, %404, %cst_303 {dimension_numbers = #tpu.dot_dimension_numbers<[1], [0], [0], [1], [0, 0, 1, 1], [], []>} : vector<4x4xbf16>, vector<4x800xbf16>, vector<4x800xf32> -> vector<4x800xf32>
    %406 = arith.addf %401, %405 : vector<4x800xf32>
    %c23_304 = arith.constant 23 : index
    %c0_305 = arith.constant 0 : index
    %c0_306 = arith.constant 0 : index
    %407 = vector.load %arg6[%c23_304, %c0_305, %c0_306] : memref<27x4x4xbf16, #tpu.memory_space<vmem>>, vector<1x4x4xbf16>
    %408 = vector.shape_cast %407 : vector<1x4x4xbf16> to vector<4x4xbf16>
    %409 = vector.extract_strided_slice %290 {offsets = [0, 229], sizes = [4, 800], strides = [1, 1]} : vector<4x1152xbf16> to vector<4x800xbf16>
    %cst_307 = arith.constant dense<0.000000e+00> : vector<4x800xf32>
    %410 = tpu.matmul %408, %409, %cst_307 {dimension_numbers = #tpu.dot_dimension_numbers<[1], [0], [0], [1], [0, 0, 1, 1], [], []>} : vector<4x4xbf16>, vector<4x800xbf16>, vector<4x800xf32> -> vector<4x800xf32>
    %411 = arith.addf %406, %410 : vector<4x800xf32>
    %c24_308 = arith.constant 24 : index
    %c0_309 = arith.constant 0 : index
    %c0_310 = arith.constant 0 : index
    %412 = vector.load %arg6[%c24_308, %c0_309, %c0_310] : memref<27x4x4xbf16, #tpu.memory_space<vmem>>, vector<1x4x4xbf16>
    %413 = vector.shape_cast %412 : vector<1x4x4xbf16> to vector<4x4xbf16>
    %414 = vector.extract_strided_slice %290 {offsets = [0, 237], sizes = [4, 800], strides = [1, 1]} : vector<4x1152xbf16> to vector<4x800xbf16>
    %cst_311 = arith.constant dense<0.000000e+00> : vector<4x800xf32>
    %415 = tpu.matmul %413, %414, %cst_311 {dimension_numbers = #tpu.dot_dimension_numbers<[1], [0], [0], [1], [0, 0, 1, 1], [], []>} : vector<4x4xbf16>, vector<4x800xbf16>, vector<4x800xf32> -> vector<4x800xf32>
    %416 = arith.addf %411, %415 : vector<4x800xf32>
    %c25_312 = arith.constant 25 : index
    %c0_313 = arith.constant 0 : index
    %c0_314 = arith.constant 0 : index
    %417 = vector.load %arg6[%c25_312, %c0_313, %c0_314] : memref<27x4x4xbf16, #tpu.memory_space<vmem>>, vector<1x4x4xbf16>
    %418 = vector.shape_cast %417 : vector<1x4x4xbf16> to vector<4x4xbf16>
    %419 = vector.extract_strided_slice %290 {offsets = [0, 238], sizes = [4, 800], strides = [1, 1]} : vector<4x1152xbf16> to vector<4x800xbf16>
    %cst_315 = arith.constant dense<0.000000e+00> : vector<4x800xf32>
    %420 = tpu.matmul %418, %419, %cst_315 {dimension_numbers = #tpu.dot_dimension_numbers<[1], [0], [0], [1], [0, 0, 1, 1], [], []>} : vector<4x4xbf16>, vector<4x800xbf16>, vector<4x800xf32> -> vector<4x800xf32>
    %421 = arith.addf %416, %420 : vector<4x800xf32>
    %c26_316 = arith.constant 26 : index
    %c0_317 = arith.constant 0 : index
    %c0_318 = arith.constant 0 : index
    %422 = vector.load %arg6[%c26_316, %c0_317, %c0_318] : memref<27x4x4xbf16, #tpu.memory_space<vmem>>, vector<1x4x4xbf16>
    %423 = vector.shape_cast %422 : vector<1x4x4xbf16> to vector<4x4xbf16>
    %424 = vector.extract_strided_slice %290 {offsets = [0, 239], sizes = [4, 800], strides = [1, 1]} : vector<4x1152xbf16> to vector<4x800xbf16>
    %cst_319 = arith.constant dense<0.000000e+00> : vector<4x800xf32>
    %425 = tpu.matmul %423, %424, %cst_319 {dimension_numbers = #tpu.dot_dimension_numbers<[1], [0], [0], [1], [0, 0, 1, 1], [], []>} : vector<4x4xbf16>, vector<4x800xbf16>, vector<4x800xf32> -> vector<4x800xf32>
    %426 = arith.addf %421, %425 : vector<4x800xf32>
    %427 = arith.subf %4, %426 : vector<4x800xf32>
    %428 = arith.truncf %427 : vector<4x800xf32> to vector<4x800xbf16>
    %429 = vector.broadcast %0 : vector<1x800xbf16> to vector<4x800xbf16>
    %430 = arith.mulf %428, %429 : vector<4x800xbf16>
    %c0_320 = arith.constant 0 : index
    %c128_321 = arith.constant 128 : index
    %431 = vector.load %arg12[%c0_320, %c128_321] : memref<4x1152xbf16, #tpu.memory_space<vmem>>, vector<4x800xbf16>
    tpu.vector_store %arg12[%c0_320, %c128_321], %430 {strides = array<i32>} : memref<4x1152xbf16, #tpu.memory_space<vmem>>, vector<4x800xbf16>,
    %c0_322 = arith.constant 0 : index
    %c0_323 = arith.constant 0 : index
    %432 = vector.load %arg12[%c0_322, %c0_323] : memref<4x1152xbf16, #tpu.memory_space<vmem>>, vector<4x1152xbf16>
    %cst_324 = arith.constant 0.000000e+00 : f32
    %433 = vector.broadcast %cst_324 : f32 to vector<4x800xf32>
    %c0_325 = arith.constant 0 : index
    %c0_326 = arith.constant 0 : index
    %c0_327 = arith.constant 0 : index
    %434 = vector.load %arg7[%c0_325, %c0_326, %c0_327] : memref<27x4x4xbf16, #tpu.memory_space<vmem>>, vector<1x4x4xbf16>
    %435 = vector.shape_cast %434 : vector<1x4x4xbf16> to vector<4x4xbf16>
    %436 = vector.extract_strided_slice %432 {offsets = [0, 17], sizes = [4, 800], strides = [1, 1]} : vector<4x1152xbf16> to vector<4x800xbf16>
    %cst_328 = arith.constant dense<0.000000e+00> : vector<4x800xf32>
    %437 = tpu.matmul %435, %436, %cst_328 {dimension_numbers = #tpu.dot_dimension_numbers<[1], [0], [0], [1], [0, 0, 1, 1], [], []>} : vector<4x4xbf16>, vector<4x800xbf16>, vector<4x800xf32> -> vector<4x800xf32>
    %438 = arith.addf %433, %437 : vector<4x800xf32>
    %c1_329 = arith.constant 1 : index
    %c0_330 = arith.constant 0 : index
    %c0_331 = arith.constant 0 : index
    %439 = vector.load %arg7[%c1_329, %c0_330, %c0_331] : memref<27x4x4xbf16, #tpu.memory_space<vmem>>, vector<1x4x4xbf16>
    %440 = vector.shape_cast %439 : vector<1x4x4xbf16> to vector<4x4xbf16>
    %441 = vector.extract_strided_slice %432 {offsets = [0, 18], sizes = [4, 800], strides = [1, 1]} : vector<4x1152xbf16> to vector<4x800xbf16>
    %cst_332 = arith.constant dense<0.000000e+00> : vector<4x800xf32>
    %442 = tpu.matmul %440, %441, %cst_332 {dimension_numbers = #tpu.dot_dimension_numbers<[1], [0], [0], [1], [0, 0, 1, 1], [], []>} : vector<4x4xbf16>, vector<4x800xbf16>, vector<4x800xf32> -> vector<4x800xf32>
    %443 = arith.addf %438, %442 : vector<4x800xf32>
    %c2_333 = arith.constant 2 : index
    %c0_334 = arith.constant 0 : index
    %c0_335 = arith.constant 0 : index
    %444 = vector.load %arg7[%c2_333, %c0_334, %c0_335] : memref<27x4x4xbf16, #tpu.memory_space<vmem>>, vector<1x4x4xbf16>
    %445 = vector.shape_cast %444 : vector<1x4x4xbf16> to vector<4x4xbf16>
    %446 = vector.extract_strided_slice %432 {offsets = [0, 19], sizes = [4, 800], strides = [1, 1]} : vector<4x1152xbf16> to vector<4x800xbf16>
    %cst_336 = arith.constant dense<0.000000e+00> : vector<4x800xf32>
    %447 = tpu.matmul %445, %446, %cst_336 {dimension_numbers = #tpu.dot_dimension_numbers<[1], [0], [0], [1], [0, 0, 1, 1], [], []>} : vector<4x4xbf16>, vector<4x800xbf16>, vector<4x800xf32> -> vector<4x800xf32>
    %448 = arith.addf %443, %447 : vector<4x800xf32>
    %c3_337 = arith.constant 3 : index
    %c0_338 = arith.constant 0 : index
    %c0_339 = arith.constant 0 : index
    %449 = vector.load %arg7[%c3_337, %c0_338, %c0_339] : memref<27x4x4xbf16, #tpu.memory_space<vmem>>, vector<1x4x4xbf16>
    %450 = vector.shape_cast %449 : vector<1x4x4xbf16> to vector<4x4xbf16>
    %451 = vector.extract_strided_slice %432 {offsets = [0, 27], sizes = [4, 800], strides = [1, 1]} : vector<4x1152xbf16> to vector<4x800xbf16>
    %cst_340 = arith.constant dense<0.000000e+00> : vector<4x800xf32>
    %452 = tpu.matmul %450, %451, %cst_340 {dimension_numbers = #tpu.dot_dimension_numbers<[1], [0], [0], [1], [0, 0, 1, 1], [], []>} : vector<4x4xbf16>, vector<4x800xbf16>, vector<4x800xf32> -> vector<4x800xf32>
    %453 = arith.addf %448, %452 : vector<4x800xf32>
    %c4_341 = arith.constant 4 : index
    %c0_342 = arith.constant 0 : index
    %c0_343 = arith.constant 0 : index
    %454 = vector.load %arg7[%c4_341, %c0_342, %c0_343] : memref<27x4x4xbf16, #tpu.memory_space<vmem>>, vector<1x4x4xbf16>
    %455 = vector.shape_cast %454 : vector<1x4x4xbf16> to vector<4x4xbf16>
    %456 = vector.extract_strided_slice %432 {offsets = [0, 28], sizes = [4, 800], strides = [1, 1]} : vector<4x1152xbf16> to vector<4x800xbf16>
    %cst_344 = arith.constant dense<0.000000e+00> : vector<4x800xf32>
    %457 = tpu.matmul %455, %456, %cst_344 {dimension_numbers = #tpu.dot_dimension_numbers<[1], [0], [0], [1], [0, 0, 1, 1], [], []>} : vector<4x4xbf16>, vector<4x800xbf16>, vector<4x800xf32> -> vector<4x800xf32>
    %458 = arith.addf %453, %457 : vector<4x800xf32>
    %c5_345 = arith.constant 5 : index
    %c0_346 = arith.constant 0 : index
    %c0_347 = arith.constant 0 : index
    %459 = vector.load %arg7[%c5_345, %c0_346, %c0_347] : memref<27x4x4xbf16, #tpu.memory_space<vmem>>, vector<1x4x4xbf16>
    %460 = vector.shape_cast %459 : vector<1x4x4xbf16> to vector<4x4xbf16>
    %461 = vector.extract_strided_slice %432 {offsets = [0, 29], sizes = [4, 800], strides = [1, 1]} : vector<4x1152xbf16> to vector<4x800xbf16>
    %cst_348 = arith.constant dense<0.000000e+00> : vector<4x800xf32>
    %462 = tpu.matmul %460, %461, %cst_348 {dimension_numbers = #tpu.dot_dimension_numbers<[1], [0], [0], [1], [0, 0, 1, 1], [], []>} : vector<4x4xbf16>, vector<4x800xbf16>, vector<4x800xf32> -> vector<4x800xf32>
    %463 = arith.addf %458, %462 : vector<4x800xf32>
    %c6_349 = arith.constant 6 : index
    %c0_350 = arith.constant 0 : index
    %c0_351 = arith.constant 0 : index
    %464 = vector.load %arg7[%c6_349, %c0_350, %c0_351] : memref<27x4x4xbf16, #tpu.memory_space<vmem>>, vector<1x4x4xbf16>
    %465 = vector.shape_cast %464 : vector<1x4x4xbf16> to vector<4x4xbf16>
    %466 = vector.extract_strided_slice %432 {offsets = [0, 37], sizes = [4, 800], strides = [1, 1]} : vector<4x1152xbf16> to vector<4x800xbf16>
    %cst_352 = arith.constant dense<0.000000e+00> : vector<4x800xf32>
    %467 = tpu.matmul %465, %466, %cst_352 {dimension_numbers = #tpu.dot_dimension_numbers<[1], [0], [0], [1], [0, 0, 1, 1], [], []>} : vector<4x4xbf16>, vector<4x800xbf16>, vector<4x800xf32> -> vector<4x800xf32>
    %468 = arith.addf %463, %467 : vector<4x800xf32>
    %c7_353 = arith.constant 7 : index
    %c0_354 = arith.constant 0 : index
    %c0_355 = arith.constant 0 : index
    %469 = vector.load %arg7[%c7_353, %c0_354, %c0_355] : memref<27x4x4xbf16, #tpu.memory_space<vmem>>, vector<1x4x4xbf16>
    %470 = vector.shape_cast %469 : vector<1x4x4xbf16> to vector<4x4xbf16>
    %471 = vector.extract_strided_slice %432 {offsets = [0, 38], sizes = [4, 800], strides = [1, 1]} : vector<4x1152xbf16> to vector<4x800xbf16>
    %cst_356 = arith.constant dense<0.000000e+00> : vector<4x800xf32>
    %472 = tpu.matmul %470, %471, %cst_356 {dimension_numbers = #tpu.dot_dimension_numbers<[1], [0], [0], [1], [0, 0, 1, 1], [], []>} : vector<4x4xbf16>, vector<4x800xbf16>, vector<4x800xf32> -> vector<4x800xf32>
    %473 = arith.addf %468, %472 : vector<4x800xf32>
    %c8_357 = arith.constant 8 : index
    %c0_358 = arith.constant 0 : index
    %c0_359 = arith.constant 0 : index
    %474 = vector.load %arg7[%c8_357, %c0_358, %c0_359] : memref<27x4x4xbf16, #tpu.memory_space<vmem>>, vector<1x4x4xbf16>
    %475 = vector.shape_cast %474 : vector<1x4x4xbf16> to vector<4x4xbf16>
    %476 = vector.extract_strided_slice %432 {offsets = [0, 39], sizes = [4, 800], strides = [1, 1]} : vector<4x1152xbf16> to vector<4x800xbf16>
    %cst_360 = arith.constant dense<0.000000e+00> : vector<4x800xf32>
    %477 = tpu.matmul %475, %476, %cst_360 {dimension_numbers = #tpu.dot_dimension_numbers<[1], [0], [0], [1], [0, 0, 1, 1], [], []>} : vector<4x4xbf16>, vector<4x800xbf16>, vector<4x800xf32> -> vector<4x800xf32>
    %478 = arith.addf %473, %477 : vector<4x800xf32>
    %c9_361 = arith.constant 9 : index
    %c0_362 = arith.constant 0 : index
    %c0_363 = arith.constant 0 : index
    %479 = vector.load %arg7[%c9_361, %c0_362, %c0_363] : memref<27x4x4xbf16, #tpu.memory_space<vmem>>, vector<1x4x4xbf16>
    %480 = vector.shape_cast %479 : vector<1x4x4xbf16> to vector<4x4xbf16>
    %481 = vector.extract_strided_slice %432 {offsets = [0, 117], sizes = [4, 800], strides = [1, 1]} : vector<4x1152xbf16> to vector<4x800xbf16>
    %cst_364 = arith.constant dense<0.000000e+00> : vector<4x800xf32>
    %482 = tpu.matmul %480, %481, %cst_364 {dimension_numbers = #tpu.dot_dimension_numbers<[1], [0], [0], [1], [0, 0, 1, 1], [], []>} : vector<4x4xbf16>, vector<4x800xbf16>, vector<4x800xf32> -> vector<4x800xf32>
    %483 = arith.addf %478, %482 : vector<4x800xf32>
    %c10_365 = arith.constant 10 : index
    %c0_366 = arith.constant 0 : index
    %c0_367 = arith.constant 0 : index
    %484 = vector.load %arg7[%c10_365, %c0_366, %c0_367] : memref<27x4x4xbf16, #tpu.memory_space<vmem>>, vector<1x4x4xbf16>
    %485 = vector.shape_cast %484 : vector<1x4x4xbf16> to vector<4x4xbf16>
    %486 = vector.extract_strided_slice %432 {offsets = [0, 118], sizes = [4, 800], strides = [1, 1]} : vector<4x1152xbf16> to vector<4x800xbf16>
    %cst_368 = arith.constant dense<0.000000e+00> : vector<4x800xf32>
    %487 = tpu.matmul %485, %486, %cst_368 {dimension_numbers = #tpu.dot_dimension_numbers<[1], [0], [0], [1], [0, 0, 1, 1], [], []>} : vector<4x4xbf16>, vector<4x800xbf16>, vector<4x800xf32> -> vector<4x800xf32>
    %488 = arith.addf %483, %487 : vector<4x800xf32>
    %c11_369 = arith.constant 11 : index
    %c0_370 = arith.constant 0 : index
    %c0_371 = arith.constant 0 : index
    %489 = vector.load %arg7[%c11_369, %c0_370, %c0_371] : memref<27x4x4xbf16, #tpu.memory_space<vmem>>, vector<1x4x4xbf16>
    %490 = vector.shape_cast %489 : vector<1x4x4xbf16> to vector<4x4xbf16>
    %491 = vector.extract_strided_slice %432 {offsets = [0, 119], sizes = [4, 800], strides = [1, 1]} : vector<4x1152xbf16> to vector<4x800xbf16>
    %cst_372 = arith.constant dense<0.000000e+00> : vector<4x800xf32>
    %492 = tpu.matmul %490, %491, %cst_372 {dimension_numbers = #tpu.dot_dimension_numbers<[1], [0], [0], [1], [0, 0, 1, 1], [], []>} : vector<4x4xbf16>, vector<4x800xbf16>, vector<4x800xf32> -> vector<4x800xf32>
    %493 = arith.addf %488, %492 : vector<4x800xf32>
    %c12_373 = arith.constant 12 : index
    %c0_374 = arith.constant 0 : index
    %c0_375 = arith.constant 0 : index
    %494 = vector.load %arg7[%c12_373, %c0_374, %c0_375] : memref<27x4x4xbf16, #tpu.memory_space<vmem>>, vector<1x4x4xbf16>
    %495 = vector.shape_cast %494 : vector<1x4x4xbf16> to vector<4x4xbf16>
    %496 = vector.extract_strided_slice %432 {offsets = [0, 127], sizes = [4, 800], strides = [1, 1]} : vector<4x1152xbf16> to vector<4x800xbf16>
    %cst_376 = arith.constant dense<0.000000e+00> : vector<4x800xf32>
    %497 = tpu.matmul %495, %496, %cst_376 {dimension_numbers = #tpu.dot_dimension_numbers<[1], [0], [0], [1], [0, 0, 1, 1], [], []>} : vector<4x4xbf16>, vector<4x800xbf16>, vector<4x800xf32> -> vector<4x800xf32>
    %498 = arith.addf %493, %497 : vector<4x800xf32>
    %c13_377 = arith.constant 13 : index
    %c0_378 = arith.constant 0 : index
    %c0_379 = arith.constant 0 : index
    %499 = vector.load %arg7[%c13_377, %c0_378, %c0_379] : memref<27x4x4xbf16, #tpu.memory_space<vmem>>, vector<1x4x4xbf16>
    %500 = vector.shape_cast %499 : vector<1x4x4xbf16> to vector<4x4xbf16>
    %501 = vector.extract_strided_slice %432 {offsets = [0, 128], sizes = [4, 800], strides = [1, 1]} : vector<4x1152xbf16> to vector<4x800xbf16>
    %cst_380 = arith.constant dense<0.000000e+00> : vector<4x800xf32>
    %502 = tpu.matmul %500, %501, %cst_380 {dimension_numbers = #tpu.dot_dimension_numbers<[1], [0], [0], [1], [0, 0, 1, 1], [], []>} : vector<4x4xbf16>, vector<4x800xbf16>, vector<4x800xf32> -> vector<4x800xf32>
    %503 = arith.addf %498, %502 : vector<4x800xf32>
    %c14_381 = arith.constant 14 : index
    %c0_382 = arith.constant 0 : index
    %c0_383 = arith.constant 0 : index
    %504 = vector.load %arg7[%c14_381, %c0_382, %c0_383] : memref<27x4x4xbf16, #tpu.memory_space<vmem>>, vector<1x4x4xbf16>
    %505 = vector.shape_cast %504 : vector<1x4x4xbf16> to vector<4x4xbf16>
    %506 = vector.extract_strided_slice %432 {offsets = [0, 129], sizes = [4, 800], strides = [1, 1]} : vector<4x1152xbf16> to vector<4x800xbf16>
    %cst_384 = arith.constant dense<0.000000e+00> : vector<4x800xf32>
    %507 = tpu.matmul %505, %506, %cst_384 {dimension_numbers = #tpu.dot_dimension_numbers<[1], [0], [0], [1], [0, 0, 1, 1], [], []>} : vector<4x4xbf16>, vector<4x800xbf16>, vector<4x800xf32> -> vector<4x800xf32>
    %508 = arith.addf %503, %507 : vector<4x800xf32>
    %c15_385 = arith.constant 15 : index
    %c0_386 = arith.constant 0 : index
    %c0_387 = arith.constant 0 : index
    %509 = vector.load %arg7[%c15_385, %c0_386, %c0_387] : memref<27x4x4xbf16, #tpu.memory_space<vmem>>, vector<1x4x4xbf16>
    %510 = vector.shape_cast %509 : vector<1x4x4xbf16> to vector<4x4xbf16>
    %511 = vector.extract_strided_slice %432 {offsets = [0, 137], sizes = [4, 800], strides = [1, 1]} : vector<4x1152xbf16> to vector<4x800xbf16>
    %cst_388 = arith.constant dense<0.000000e+00> : vector<4x800xf32>
    %512 = tpu.matmul %510, %511, %cst_388 {dimension_numbers = #tpu.dot_dimension_numbers<[1], [0], [0], [1], [0, 0, 1, 1], [], []>} : vector<4x4xbf16>, vector<4x800xbf16>, vector<4x800xf32> -> vector<4x800xf32>
    %513 = arith.addf %508, %512 : vector<4x800xf32>
    %c16_389 = arith.constant 16 : index
    %c0_390 = arith.constant 0 : index
    %c0_391 = arith.constant 0 : index
    %514 = vector.load %arg7[%c16_389, %c0_390, %c0_391] : memref<27x4x4xbf16, #tpu.memory_space<vmem>>, vector<1x4x4xbf16>
    %515 = vector.shape_cast %514 : vector<1x4x4xbf16> to vector<4x4xbf16>
    %516 = vector.extract_strided_slice %432 {offsets = [0, 138], sizes = [4, 800], strides = [1, 1]} : vector<4x1152xbf16> to vector<4x800xbf16>
    %cst_392 = arith.constant dense<0.000000e+00> : vector<4x800xf32>
    %517 = tpu.matmul %515, %516, %cst_392 {dimension_numbers = #tpu.dot_dimension_numbers<[1], [0], [0], [1], [0, 0, 1, 1], [], []>} : vector<4x4xbf16>, vector<4x800xbf16>, vector<4x800xf32> -> vector<4x800xf32>
    %518 = arith.addf %513, %517 : vector<4x800xf32>
    %c17_393 = arith.constant 17 : index
    %c0_394 = arith.constant 0 : index
    %c0_395 = arith.constant 0 : index
    %519 = vector.load %arg7[%c17_393, %c0_394, %c0_395] : memref<27x4x4xbf16, #tpu.memory_space<vmem>>, vector<1x4x4xbf16>
    %520 = vector.shape_cast %519 : vector<1x4x4xbf16> to vector<4x4xbf16>
    %521 = vector.extract_strided_slice %432 {offsets = [0, 139], sizes = [4, 800], strides = [1, 1]} : vector<4x1152xbf16> to vector<4x800xbf16>
    %cst_396 = arith.constant dense<0.000000e+00> : vector<4x800xf32>
    %522 = tpu.matmul %520, %521, %cst_396 {dimension_numbers = #tpu.dot_dimension_numbers<[1], [0], [0], [1], [0, 0, 1, 1], [], []>} : vector<4x4xbf16>, vector<4x800xbf16>, vector<4x800xf32> -> vector<4x800xf32>
    %523 = arith.addf %518, %522 : vector<4x800xf32>
    %c18_397 = arith.constant 18 : index
    %c0_398 = arith.constant 0 : index
    %c0_399 = arith.constant 0 : index
    %524 = vector.load %arg7[%c18_397, %c0_398, %c0_399] : memref<27x4x4xbf16, #tpu.memory_space<vmem>>, vector<1x4x4xbf16>
    %525 = vector.shape_cast %524 : vector<1x4x4xbf16> to vector<4x4xbf16>
    %526 = vector.extract_strided_slice %432 {offsets = [0, 217], sizes = [4, 800], strides = [1, 1]} : vector<4x1152xbf16> to vector<4x800xbf16>
    %cst_400 = arith.constant dense<0.000000e+00> : vector<4x800xf32>
    %527 = tpu.matmul %525, %526, %cst_400 {dimension_numbers = #tpu.dot_dimension_numbers<[1], [0], [0], [1], [0, 0, 1, 1], [], []>} : vector<4x4xbf16>, vector<4x800xbf16>, vector<4x800xf32> -> vector<4x800xf32>
    %528 = arith.addf %523, %527 : vector<4x800xf32>
    %c19_401 = arith.constant 19 : index
    %c0_402 = arith.constant 0 : index
    %c0_403 = arith.constant 0 : index
    %529 = vector.load %arg7[%c19_401, %c0_402, %c0_403] : memref<27x4x4xbf16, #tpu.memory_space<vmem>>, vector<1x4x4xbf16>
    %530 = vector.shape_cast %529 : vector<1x4x4xbf16> to vector<4x4xbf16>
    %531 = vector.extract_strided_slice %432 {offsets = [0, 218], sizes = [4, 800], strides = [1, 1]} : vector<4x1152xbf16> to vector<4x800xbf16>
    %cst_404 = arith.constant dense<0.000000e+00> : vector<4x800xf32>
    %532 = tpu.matmul %530, %531, %cst_404 {dimension_numbers = #tpu.dot_dimension_numbers<[1], [0], [0], [1], [0, 0, 1, 1], [], []>} : vector<4x4xbf16>, vector<4x800xbf16>, vector<4x800xf32> -> vector<4x800xf32>
    %533 = arith.addf %528, %532 : vector<4x800xf32>
    %c20_405 = arith.constant 20 : index
    %c0_406 = arith.constant 0 : index
    %c0_407 = arith.constant 0 : index
    %534 = vector.load %arg7[%c20_405, %c0_406, %c0_407] : memref<27x4x4xbf16, #tpu.memory_space<vmem>>, vector<1x4x4xbf16>
    %535 = vector.shape_cast %534 : vector<1x4x4xbf16> to vector<4x4xbf16>
    %536 = vector.extract_strided_slice %432 {offsets = [0, 219], sizes = [4, 800], strides = [1, 1]} : vector<4x1152xbf16> to vector<4x800xbf16>
    %cst_408 = arith.constant dense<0.000000e+00> : vector<4x800xf32>
    %537 = tpu.matmul %535, %536, %cst_408 {dimension_numbers = #tpu.dot_dimension_numbers<[1], [0], [0], [1], [0, 0, 1, 1], [], []>} : vector<4x4xbf16>, vector<4x800xbf16>, vector<4x800xf32> -> vector<4x800xf32>
    %538 = arith.addf %533, %537 : vector<4x800xf32>
    %c21_409 = arith.constant 21 : index
    %c0_410 = arith.constant 0 : index
    %c0_411 = arith.constant 0 : index
    %539 = vector.load %arg7[%c21_409, %c0_410, %c0_411] : memref<27x4x4xbf16, #tpu.memory_space<vmem>>, vector<1x4x4xbf16>
    %540 = vector.shape_cast %539 : vector<1x4x4xbf16> to vector<4x4xbf16>
    %541 = vector.extract_strided_slice %432 {offsets = [0, 227], sizes = [4, 800], strides = [1, 1]} : vector<4x1152xbf16> to vector<4x800xbf16>
    %cst_412 = arith.constant dense<0.000000e+00> : vector<4x800xf32>
    %542 = tpu.matmul %540, %541, %cst_412 {dimension_numbers = #tpu.dot_dimension_numbers<[1], [0], [0], [1], [0, 0, 1, 1], [], []>} : vector<4x4xbf16>, vector<4x800xbf16>, vector<4x800xf32> -> vector<4x800xf32>
    %543 = arith.addf %538, %542 : vector<4x800xf32>
    %c22_413 = arith.constant 22 : index
    %c0_414 = arith.constant 0 : index
    %c0_415 = arith.constant 0 : index
    %544 = vector.load %arg7[%c22_413, %c0_414, %c0_415] : memref<27x4x4xbf16, #tpu.memory_space<vmem>>, vector<1x4x4xbf16>
    %545 = vector.shape_cast %544 : vector<1x4x4xbf16> to vector<4x4xbf16>
    %546 = vector.extract_strided_slice %432 {offsets = [0, 228], sizes = [4, 800], strides = [1, 1]} : vector<4x1152xbf16> to vector<4x800xbf16>
    %cst_416 = arith.constant dense<0.000000e+00> : vector<4x800xf32>
    %547 = tpu.matmul %545, %546, %cst_416 {dimension_numbers = #tpu.dot_dimension_numbers<[1], [0], [0], [1], [0, 0, 1, 1], [], []>} : vector<4x4xbf16>, vector<4x800xbf16>, vector<4x800xf32> -> vector<4x800xf32>
    %548 = arith.addf %543, %547 : vector<4x800xf32>
    %c23_417 = arith.constant 23 : index
    %c0_418 = arith.constant 0 : index
    %c0_419 = arith.constant 0 : index
    %549 = vector.load %arg7[%c23_417, %c0_418, %c0_419] : memref<27x4x4xbf16, #tpu.memory_space<vmem>>, vector<1x4x4xbf16>
    %550 = vector.shape_cast %549 : vector<1x4x4xbf16> to vector<4x4xbf16>
    %551 = vector.extract_strided_slice %432 {offsets = [0, 229], sizes = [4, 800], strides = [1, 1]} : vector<4x1152xbf16> to vector<4x800xbf16>
    %cst_420 = arith.constant dense<0.000000e+00> : vector<4x800xf32>
    %552 = tpu.matmul %550, %551, %cst_420 {dimension_numbers = #tpu.dot_dimension_numbers<[1], [0], [0], [1], [0, 0, 1, 1], [], []>} : vector<4x4xbf16>, vector<4x800xbf16>, vector<4x800xf32> -> vector<4x800xf32>
    %553 = arith.addf %548, %552 : vector<4x800xf32>
    %c24_421 = arith.constant 24 : index
    %c0_422 = arith.constant 0 : index
    %c0_423 = arith.constant 0 : index
    %554 = vector.load %arg7[%c24_421, %c0_422, %c0_423] : memref<27x4x4xbf16, #tpu.memory_space<vmem>>, vector<1x4x4xbf16>
    %555 = vector.shape_cast %554 : vector<1x4x4xbf16> to vector<4x4xbf16>
    %556 = vector.extract_strided_slice %432 {offsets = [0, 237], sizes = [4, 800], strides = [1, 1]} : vector<4x1152xbf16> to vector<4x800xbf16>
    %cst_424 = arith.constant dense<0.000000e+00> : vector<4x800xf32>
    %557 = tpu.matmul %555, %556, %cst_424 {dimension_numbers = #tpu.dot_dimension_numbers<[1], [0], [0], [1], [0, 0, 1, 1], [], []>} : vector<4x4xbf16>, vector<4x800xbf16>, vector<4x800xf32> -> vector<4x800xf32>
    %558 = arith.addf %553, %557 : vector<4x800xf32>
    %c25_425 = arith.constant 25 : index
    %c0_426 = arith.constant 0 : index
    %c0_427 = arith.constant 0 : index
    %559 = vector.load %arg7[%c25_425, %c0_426, %c0_427] : memref<27x4x4xbf16, #tpu.memory_space<vmem>>, vector<1x4x4xbf16>
    %560 = vector.shape_cast %559 : vector<1x4x4xbf16> to vector<4x4xbf16>
    %561 = vector.extract_strided_slice %432 {offsets = [0, 238], sizes = [4, 800], strides = [1, 1]} : vector<4x1152xbf16> to vector<4x800xbf16>
    %cst_428 = arith.constant dense<0.000000e+00> : vector<4x800xf32>
    %562 = tpu.matmul %560, %561, %cst_428 {dimension_numbers = #tpu.dot_dimension_numbers<[1], [0], [0], [1], [0, 0, 1, 1], [], []>} : vector<4x4xbf16>, vector<4x800xbf16>, vector<4x800xf32> -> vector<4x800xf32>
    %563 = arith.addf %558, %562 : vector<4x800xf32>
    %c26_429 = arith.constant 26 : index
    %c0_430 = arith.constant 0 : index
    %c0_431 = arith.constant 0 : index
    %564 = vector.load %arg7[%c26_429, %c0_430, %c0_431] : memref<27x4x4xbf16, #tpu.memory_space<vmem>>, vector<1x4x4xbf16>
    %565 = vector.shape_cast %564 : vector<1x4x4xbf16> to vector<4x4xbf16>
    %566 = vector.extract_strided_slice %432 {offsets = [0, 239], sizes = [4, 800], strides = [1, 1]} : vector<4x1152xbf16> to vector<4x800xbf16>
    %cst_432 = arith.constant dense<0.000000e+00> : vector<4x800xf32>
    %567 = tpu.matmul %565, %566, %cst_432 {dimension_numbers = #tpu.dot_dimension_numbers<[1], [0], [0], [1], [0, 0, 1, 1], [], []>} : vector<4x4xbf16>, vector<4x800xbf16>, vector<4x800xf32> -> vector<4x800xf32>
    %568 = arith.addf %563, %567 : vector<4x800xf32>
    %569 = arith.truncf %568 : vector<4x800xf32> to vector<4x800xbf16>
    %570 = vector.broadcast %0 : vector<1x800xbf16> to vector<4x800xbf16>
    %571 = arith.mulf %569, %570 : vector<4x800xbf16>
    %c0_433 = arith.constant 0 : index
    %c128_434 = arith.constant 128 : index
    %572 = vector.load %arg12[%c0_433, %c128_434] : memref<4x1152xbf16, #tpu.memory_space<vmem>>, vector<4x800xbf16>
    tpu.vector_store %arg12[%c0_433, %c128_434], %571 {strides = array<i32>} : memref<4x1152xbf16, #tpu.memory_space<vmem>>, vector<4x800xbf16>,
    %c0_435 = arith.constant 0 : index
    %c0_436 = arith.constant 0 : index
    %573 = vector.load %arg12[%c0_435, %c0_436] : memref<4x1152xbf16, #tpu.memory_space<vmem>>, vector<4x1152xbf16>
    %cst_437 = arith.constant 0.000000e+00 : f32
    %574 = vector.broadcast %cst_437 : f32 to vector<8x800xf32>
    %c0_438 = arith.constant 0 : index
    %c0_439 = arith.constant 0 : index
    %c0_440 = arith.constant 0 : index
    %575 = vector.load %arg8[%c0_438, %c0_439, %c0_440] : memref<27x8x4xbf16, #tpu.memory_space<vmem>>, vector<1x8x4xbf16>
    %576 = vector.shape_cast %575 : vector<1x8x4xbf16> to vector<8x4xbf16>
    %577 = vector.extract_strided_slice %573 {offsets = [0, 17], sizes = [4, 800], strides = [1, 1]} : vector<4x1152xbf16> to vector<4x800xbf16>
    %cst_441 = arith.constant dense<0.000000e+00> : vector<8x800xf32>
    %578 = tpu.matmul %576, %577, %cst_441 {dimension_numbers = #tpu.dot_dimension_numbers<[1], [0], [0], [1], [0, 0, 1, 1], [], []>} : vector<8x4xbf16>, vector<4x800xbf16>, vector<8x800xf32> -> vector<8x800xf32>
    %579 = arith.addf %574, %578 : vector<8x800xf32>
    %c1_442 = arith.constant 1 : index
    %c0_443 = arith.constant 0 : index
    %c0_444 = arith.constant 0 : index
    %580 = vector.load %arg8[%c1_442, %c0_443, %c0_444] : memref<27x8x4xbf16, #tpu.memory_space<vmem>>, vector<1x8x4xbf16>
    %581 = vector.shape_cast %580 : vector<1x8x4xbf16> to vector<8x4xbf16>
    %582 = vector.extract_strided_slice %573 {offsets = [0, 18], sizes = [4, 800], strides = [1, 1]} : vector<4x1152xbf16> to vector<4x800xbf16>
    %cst_445 = arith.constant dense<0.000000e+00> : vector<8x800xf32>
    %583 = tpu.matmul %581, %582, %cst_445 {dimension_numbers = #tpu.dot_dimension_numbers<[1], [0], [0], [1], [0, 0, 1, 1], [], []>} : vector<8x4xbf16>, vector<4x800xbf16>, vector<8x800xf32> -> vector<8x800xf32>
    %584 = arith.addf %579, %583 : vector<8x800xf32>
    %c2_446 = arith.constant 2 : index
    %c0_447 = arith.constant 0 : index
    %c0_448 = arith.constant 0 : index
    %585 = vector.load %arg8[%c2_446, %c0_447, %c0_448] : memref<27x8x4xbf16, #tpu.memory_space<vmem>>, vector<1x8x4xbf16>
    %586 = vector.shape_cast %585 : vector<1x8x4xbf16> to vector<8x4xbf16>
    %587 = vector.extract_strided_slice %573 {offsets = [0, 19], sizes = [4, 800], strides = [1, 1]} : vector<4x1152xbf16> to vector<4x800xbf16>
    %cst_449 = arith.constant dense<0.000000e+00> : vector<8x800xf32>
    %588 = tpu.matmul %586, %587, %cst_449 {dimension_numbers = #tpu.dot_dimension_numbers<[1], [0], [0], [1], [0, 0, 1, 1], [], []>} : vector<8x4xbf16>, vector<4x800xbf16>, vector<8x800xf32> -> vector<8x800xf32>
    %589 = arith.addf %584, %588 : vector<8x800xf32>
    %c3_450 = arith.constant 3 : index
    %c0_451 = arith.constant 0 : index
    %c0_452 = arith.constant 0 : index
    %590 = vector.load %arg8[%c3_450, %c0_451, %c0_452] : memref<27x8x4xbf16, #tpu.memory_space<vmem>>, vector<1x8x4xbf16>
    %591 = vector.shape_cast %590 : vector<1x8x4xbf16> to vector<8x4xbf16>
    %592 = vector.extract_strided_slice %573 {offsets = [0, 27], sizes = [4, 800], strides = [1, 1]} : vector<4x1152xbf16> to vector<4x800xbf16>
    %cst_453 = arith.constant dense<0.000000e+00> : vector<8x800xf32>
    %593 = tpu.matmul %591, %592, %cst_453 {dimension_numbers = #tpu.dot_dimension_numbers<[1], [0], [0], [1], [0, 0, 1, 1], [], []>} : vector<8x4xbf16>, vector<4x800xbf16>, vector<8x800xf32> -> vector<8x800xf32>
    %594 = arith.addf %589, %593 : vector<8x800xf32>
    %c4_454 = arith.constant 4 : index
    %c0_455 = arith.constant 0 : index
    %c0_456 = arith.constant 0 : index
    %595 = vector.load %arg8[%c4_454, %c0_455, %c0_456] : memref<27x8x4xbf16, #tpu.memory_space<vmem>>, vector<1x8x4xbf16>
    %596 = vector.shape_cast %595 : vector<1x8x4xbf16> to vector<8x4xbf16>
    %597 = vector.extract_strided_slice %573 {offsets = [0, 28], sizes = [4, 800], strides = [1, 1]} : vector<4x1152xbf16> to vector<4x800xbf16>
    %cst_457 = arith.constant dense<0.000000e+00> : vector<8x800xf32>
    %598 = tpu.matmul %596, %597, %cst_457 {dimension_numbers = #tpu.dot_dimension_numbers<[1], [0], [0], [1], [0, 0, 1, 1], [], []>} : vector<8x4xbf16>, vector<4x800xbf16>, vector<8x800xf32> -> vector<8x800xf32>
    %599 = arith.addf %594, %598 : vector<8x800xf32>
    %c5_458 = arith.constant 5 : index
    %c0_459 = arith.constant 0 : index
    %c0_460 = arith.constant 0 : index
    %600 = vector.load %arg8[%c5_458, %c0_459, %c0_460] : memref<27x8x4xbf16, #tpu.memory_space<vmem>>, vector<1x8x4xbf16>
    %601 = vector.shape_cast %600 : vector<1x8x4xbf16> to vector<8x4xbf16>
    %602 = vector.extract_strided_slice %573 {offsets = [0, 29], sizes = [4, 800], strides = [1, 1]} : vector<4x1152xbf16> to vector<4x800xbf16>
    %cst_461 = arith.constant dense<0.000000e+00> : vector<8x800xf32>
    %603 = tpu.matmul %601, %602, %cst_461 {dimension_numbers = #tpu.dot_dimension_numbers<[1], [0], [0], [1], [0, 0, 1, 1], [], []>} : vector<8x4xbf16>, vector<4x800xbf16>, vector<8x800xf32> -> vector<8x800xf32>
    %604 = arith.addf %599, %603 : vector<8x800xf32>
    %c6_462 = arith.constant 6 : index
    %c0_463 = arith.constant 0 : index
    %c0_464 = arith.constant 0 : index
    %605 = vector.load %arg8[%c6_462, %c0_463, %c0_464] : memref<27x8x4xbf16, #tpu.memory_space<vmem>>, vector<1x8x4xbf16>
    %606 = vector.shape_cast %605 : vector<1x8x4xbf16> to vector<8x4xbf16>
    %607 = vector.extract_strided_slice %573 {offsets = [0, 37], sizes = [4, 800], strides = [1, 1]} : vector<4x1152xbf16> to vector<4x800xbf16>
    %cst_465 = arith.constant dense<0.000000e+00> : vector<8x800xf32>
    %608 = tpu.matmul %606, %607, %cst_465 {dimension_numbers = #tpu.dot_dimension_numbers<[1], [0], [0], [1], [0, 0, 1, 1], [], []>} : vector<8x4xbf16>, vector<4x800xbf16>, vector<8x800xf32> -> vector<8x800xf32>
    %609 = arith.addf %604, %608 : vector<8x800xf32>
    %c7_466 = arith.constant 7 : index
    %c0_467 = arith.constant 0 : index
    %c0_468 = arith.constant 0 : index
    %610 = vector.load %arg8[%c7_466, %c0_467, %c0_468] : memref<27x8x4xbf16, #tpu.memory_space<vmem>>, vector<1x8x4xbf16>
    %611 = vector.shape_cast %610 : vector<1x8x4xbf16> to vector<8x4xbf16>
    %612 = vector.extract_strided_slice %573 {offsets = [0, 38], sizes = [4, 800], strides = [1, 1]} : vector<4x1152xbf16> to vector<4x800xbf16>
    %cst_469 = arith.constant dense<0.000000e+00> : vector<8x800xf32>
    %613 = tpu.matmul %611, %612, %cst_469 {dimension_numbers = #tpu.dot_dimension_numbers<[1], [0], [0], [1], [0, 0, 1, 1], [], []>} : vector<8x4xbf16>, vector<4x800xbf16>, vector<8x800xf32> -> vector<8x800xf32>
    %614 = arith.addf %609, %613 : vector<8x800xf32>
    %c8_470 = arith.constant 8 : index
    %c0_471 = arith.constant 0 : index
    %c0_472 = arith.constant 0 : index
    %615 = vector.load %arg8[%c8_470, %c0_471, %c0_472] : memref<27x8x4xbf16, #tpu.memory_space<vmem>>, vector<1x8x4xbf16>
    %616 = vector.shape_cast %615 : vector<1x8x4xbf16> to vector<8x4xbf16>
    %617 = vector.extract_strided_slice %573 {offsets = [0, 39], sizes = [4, 800], strides = [1, 1]} : vector<4x1152xbf16> to vector<4x800xbf16>
    %cst_473 = arith.constant dense<0.000000e+00> : vector<8x800xf32>
    %618 = tpu.matmul %616, %617, %cst_473 {dimension_numbers = #tpu.dot_dimension_numbers<[1], [0], [0], [1], [0, 0, 1, 1], [], []>} : vector<8x4xbf16>, vector<4x800xbf16>, vector<8x800xf32> -> vector<8x800xf32>
    %619 = arith.addf %614, %618 : vector<8x800xf32>
    %c9_474 = arith.constant 9 : index
    %c0_475 = arith.constant 0 : index
    %c0_476 = arith.constant 0 : index
    %620 = vector.load %arg8[%c9_474, %c0_475, %c0_476] : memref<27x8x4xbf16, #tpu.memory_space<vmem>>, vector<1x8x4xbf16>
    %621 = vector.shape_cast %620 : vector<1x8x4xbf16> to vector<8x4xbf16>
    %622 = vector.extract_strided_slice %573 {offsets = [0, 117], sizes = [4, 800], strides = [1, 1]} : vector<4x1152xbf16> to vector<4x800xbf16>
    %cst_477 = arith.constant dense<0.000000e+00> : vector<8x800xf32>
    %623 = tpu.matmul %621, %622, %cst_477 {dimension_numbers = #tpu.dot_dimension_numbers<[1], [0], [0], [1], [0, 0, 1, 1], [], []>} : vector<8x4xbf16>, vector<4x800xbf16>, vector<8x800xf32> -> vector<8x800xf32>
    %624 = arith.addf %619, %623 : vector<8x800xf32>
    %c10_478 = arith.constant 10 : index
    %c0_479 = arith.constant 0 : index
    %c0_480 = arith.constant 0 : index
    %625 = vector.load %arg8[%c10_478, %c0_479, %c0_480] : memref<27x8x4xbf16, #tpu.memory_space<vmem>>, vector<1x8x4xbf16>
    %626 = vector.shape_cast %625 : vector<1x8x4xbf16> to vector<8x4xbf16>
    %627 = vector.extract_strided_slice %573 {offsets = [0, 118], sizes = [4, 800], strides = [1, 1]} : vector<4x1152xbf16> to vector<4x800xbf16>
    %cst_481 = arith.constant dense<0.000000e+00> : vector<8x800xf32>
    %628 = tpu.matmul %626, %627, %cst_481 {dimension_numbers = #tpu.dot_dimension_numbers<[1], [0], [0], [1], [0, 0, 1, 1], [], []>} : vector<8x4xbf16>, vector<4x800xbf16>, vector<8x800xf32> -> vector<8x800xf32>
    %629 = arith.addf %624, %628 : vector<8x800xf32>
    %c11_482 = arith.constant 11 : index
    %c0_483 = arith.constant 0 : index
    %c0_484 = arith.constant 0 : index
    %630 = vector.load %arg8[%c11_482, %c0_483, %c0_484] : memref<27x8x4xbf16, #tpu.memory_space<vmem>>, vector<1x8x4xbf16>
    %631 = vector.shape_cast %630 : vector<1x8x4xbf16> to vector<8x4xbf16>
    %632 = vector.extract_strided_slice %573 {offsets = [0, 119], sizes = [4, 800], strides = [1, 1]} : vector<4x1152xbf16> to vector<4x800xbf16>
    %cst_485 = arith.constant dense<0.000000e+00> : vector<8x800xf32>
    %633 = tpu.matmul %631, %632, %cst_485 {dimension_numbers = #tpu.dot_dimension_numbers<[1], [0], [0], [1], [0, 0, 1, 1], [], []>} : vector<8x4xbf16>, vector<4x800xbf16>, vector<8x800xf32> -> vector<8x800xf32>
    %634 = arith.addf %629, %633 : vector<8x800xf32>
    %c12_486 = arith.constant 12 : index
    %c0_487 = arith.constant 0 : index
    %c0_488 = arith.constant 0 : index
    %635 = vector.load %arg8[%c12_486, %c0_487, %c0_488] : memref<27x8x4xbf16, #tpu.memory_space<vmem>>, vector<1x8x4xbf16>
    %636 = vector.shape_cast %635 : vector<1x8x4xbf16> to vector<8x4xbf16>
    %637 = vector.extract_strided_slice %573 {offsets = [0, 127], sizes = [4, 800], strides = [1, 1]} : vector<4x1152xbf16> to vector<4x800xbf16>
    %cst_489 = arith.constant dense<0.000000e+00> : vector<8x800xf32>
    %638 = tpu.matmul %636, %637, %cst_489 {dimension_numbers = #tpu.dot_dimension_numbers<[1], [0], [0], [1], [0, 0, 1, 1], [], []>} : vector<8x4xbf16>, vector<4x800xbf16>, vector<8x800xf32> -> vector<8x800xf32>
    %639 = arith.addf %634, %638 : vector<8x800xf32>
    %c13_490 = arith.constant 13 : index
    %c0_491 = arith.constant 0 : index
    %c0_492 = arith.constant 0 : index
    %640 = vector.load %arg8[%c13_490, %c0_491, %c0_492] : memref<27x8x4xbf16, #tpu.memory_space<vmem>>, vector<1x8x4xbf16>
    %641 = vector.shape_cast %640 : vector<1x8x4xbf16> to vector<8x4xbf16>
    %642 = vector.extract_strided_slice %573 {offsets = [0, 128], sizes = [4, 800], strides = [1, 1]} : vector<4x1152xbf16> to vector<4x800xbf16>
    %cst_493 = arith.constant dense<0.000000e+00> : vector<8x800xf32>
    %643 = tpu.matmul %641, %642, %cst_493 {dimension_numbers = #tpu.dot_dimension_numbers<[1], [0], [0], [1], [0, 0, 1, 1], [], []>} : vector<8x4xbf16>, vector<4x800xbf16>, vector<8x800xf32> -> vector<8x800xf32>
    %644 = arith.addf %639, %643 : vector<8x800xf32>
    %c14_494 = arith.constant 14 : index
    %c0_495 = arith.constant 0 : index
    %c0_496 = arith.constant 0 : index
    %645 = vector.load %arg8[%c14_494, %c0_495, %c0_496] : memref<27x8x4xbf16, #tpu.memory_space<vmem>>, vector<1x8x4xbf16>
    %646 = vector.shape_cast %645 : vector<1x8x4xbf16> to vector<8x4xbf16>
    %647 = vector.extract_strided_slice %573 {offsets = [0, 129], sizes = [4, 800], strides = [1, 1]} : vector<4x1152xbf16> to vector<4x800xbf16>
    %cst_497 = arith.constant dense<0.000000e+00> : vector<8x800xf32>
    %648 = tpu.matmul %646, %647, %cst_497 {dimension_numbers = #tpu.dot_dimension_numbers<[1], [0], [0], [1], [0, 0, 1, 1], [], []>} : vector<8x4xbf16>, vector<4x800xbf16>, vector<8x800xf32> -> vector<8x800xf32>
    %649 = arith.addf %644, %648 : vector<8x800xf32>
    %c15_498 = arith.constant 15 : index
    %c0_499 = arith.constant 0 : index
    %c0_500 = arith.constant 0 : index
    %650 = vector.load %arg8[%c15_498, %c0_499, %c0_500] : memref<27x8x4xbf16, #tpu.memory_space<vmem>>, vector<1x8x4xbf16>
    %651 = vector.shape_cast %650 : vector<1x8x4xbf16> to vector<8x4xbf16>
    %652 = vector.extract_strided_slice %573 {offsets = [0, 137], sizes = [4, 800], strides = [1, 1]} : vector<4x1152xbf16> to vector<4x800xbf16>
    %cst_501 = arith.constant dense<0.000000e+00> : vector<8x800xf32>
    %653 = tpu.matmul %651, %652, %cst_501 {dimension_numbers = #tpu.dot_dimension_numbers<[1], [0], [0], [1], [0, 0, 1, 1], [], []>} : vector<8x4xbf16>, vector<4x800xbf16>, vector<8x800xf32> -> vector<8x800xf32>
    %654 = arith.addf %649, %653 : vector<8x800xf32>
    %c16_502 = arith.constant 16 : index
    %c0_503 = arith.constant 0 : index
    %c0_504 = arith.constant 0 : index
    %655 = vector.load %arg8[%c16_502, %c0_503, %c0_504] : memref<27x8x4xbf16, #tpu.memory_space<vmem>>, vector<1x8x4xbf16>
    %656 = vector.shape_cast %655 : vector<1x8x4xbf16> to vector<8x4xbf16>
    %657 = vector.extract_strided_slice %573 {offsets = [0, 138], sizes = [4, 800], strides = [1, 1]} : vector<4x1152xbf16> to vector<4x800xbf16>
    %cst_505 = arith.constant dense<0.000000e+00> : vector<8x800xf32>
    %658 = tpu.matmul %656, %657, %cst_505 {dimension_numbers = #tpu.dot_dimension_numbers<[1], [0], [0], [1], [0, 0, 1, 1], [], []>} : vector<8x4xbf16>, vector<4x800xbf16>, vector<8x800xf32> -> vector<8x800xf32>
    %659 = arith.addf %654, %658 : vector<8x800xf32>
    %c17_506 = arith.constant 17 : index
    %c0_507 = arith.constant 0 : index
    %c0_508 = arith.constant 0 : index
    %660 = vector.load %arg8[%c17_506, %c0_507, %c0_508] : memref<27x8x4xbf16, #tpu.memory_space<vmem>>, vector<1x8x4xbf16>
    %661 = vector.shape_cast %660 : vector<1x8x4xbf16> to vector<8x4xbf16>
    %662 = vector.extract_strided_slice %573 {offsets = [0, 139], sizes = [4, 800], strides = [1, 1]} : vector<4x1152xbf16> to vector<4x800xbf16>
    %cst_509 = arith.constant dense<0.000000e+00> : vector<8x800xf32>
    %663 = tpu.matmul %661, %662, %cst_509 {dimension_numbers = #tpu.dot_dimension_numbers<[1], [0], [0], [1], [0, 0, 1, 1], [], []>} : vector<8x4xbf16>, vector<4x800xbf16>, vector<8x800xf32> -> vector<8x800xf32>
    %664 = arith.addf %659, %663 : vector<8x800xf32>
    %c18_510 = arith.constant 18 : index
    %c0_511 = arith.constant 0 : index
    %c0_512 = arith.constant 0 : index
    %665 = vector.load %arg8[%c18_510, %c0_511, %c0_512] : memref<27x8x4xbf16, #tpu.memory_space<vmem>>, vector<1x8x4xbf16>
    %666 = vector.shape_cast %665 : vector<1x8x4xbf16> to vector<8x4xbf16>
    %667 = vector.extract_strided_slice %573 {offsets = [0, 217], sizes = [4, 800], strides = [1, 1]} : vector<4x1152xbf16> to vector<4x800xbf16>
    %cst_513 = arith.constant dense<0.000000e+00> : vector<8x800xf32>
    %668 = tpu.matmul %666, %667, %cst_513 {dimension_numbers = #tpu.dot_dimension_numbers<[1], [0], [0], [1], [0, 0, 1, 1], [], []>} : vector<8x4xbf16>, vector<4x800xbf16>, vector<8x800xf32> -> vector<8x800xf32>
    %669 = arith.addf %664, %668 : vector<8x800xf32>
    %c19_514 = arith.constant 19 : index
    %c0_515 = arith.constant 0 : index
    %c0_516 = arith.constant 0 : index
    %670 = vector.load %arg8[%c19_514, %c0_515, %c0_516] : memref<27x8x4xbf16, #tpu.memory_space<vmem>>, vector<1x8x4xbf16>
    %671 = vector.shape_cast %670 : vector<1x8x4xbf16> to vector<8x4xbf16>
    %672 = vector.extract_strided_slice %573 {offsets = [0, 218], sizes = [4, 800], strides = [1, 1]} : vector<4x1152xbf16> to vector<4x800xbf16>
    %cst_517 = arith.constant dense<0.000000e+00> : vector<8x800xf32>
    %673 = tpu.matmul %671, %672, %cst_517 {dimension_numbers = #tpu.dot_dimension_numbers<[1], [0], [0], [1], [0, 0, 1, 1], [], []>} : vector<8x4xbf16>, vector<4x800xbf16>, vector<8x800xf32> -> vector<8x800xf32>
    %674 = arith.addf %669, %673 : vector<8x800xf32>
    %c20_518 = arith.constant 20 : index
    %c0_519 = arith.constant 0 : index
    %c0_520 = arith.constant 0 : index
    %675 = vector.load %arg8[%c20_518, %c0_519, %c0_520] : memref<27x8x4xbf16, #tpu.memory_space<vmem>>, vector<1x8x4xbf16>
    %676 = vector.shape_cast %675 : vector<1x8x4xbf16> to vector<8x4xbf16>
    %677 = vector.extract_strided_slice %573 {offsets = [0, 219], sizes = [4, 800], strides = [1, 1]} : vector<4x1152xbf16> to vector<4x800xbf16>
    %cst_521 = arith.constant dense<0.000000e+00> : vector<8x800xf32>
    %678 = tpu.matmul %676, %677, %cst_521 {dimension_numbers = #tpu.dot_dimension_numbers<[1], [0], [0], [1], [0, 0, 1, 1], [], []>} : vector<8x4xbf16>, vector<4x800xbf16>, vector<8x800xf32> -> vector<8x800xf32>
    %679 = arith.addf %674, %678 : vector<8x800xf32>
    %c21_522 = arith.constant 21 : index
    %c0_523 = arith.constant 0 : index
    %c0_524 = arith.constant 0 : index
    %680 = vector.load %arg8[%c21_522, %c0_523, %c0_524] : memref<27x8x4xbf16, #tpu.memory_space<vmem>>, vector<1x8x4xbf16>
    %681 = vector.shape_cast %680 : vector<1x8x4xbf16> to vector<8x4xbf16>
    %682 = vector.extract_strided_slice %573 {offsets = [0, 227], sizes = [4, 800], strides = [1, 1]} : vector<4x1152xbf16> to vector<4x800xbf16>
    %cst_525 = arith.constant dense<0.000000e+00> : vector<8x800xf32>
    %683 = tpu.matmul %681, %682, %cst_525 {dimension_numbers = #tpu.dot_dimension_numbers<[1], [0], [0], [1], [0, 0, 1, 1], [], []>} : vector<8x4xbf16>, vector<4x800xbf16>, vector<8x800xf32> -> vector<8x800xf32>
    %684 = arith.addf %679, %683 : vector<8x800xf32>
    %c22_526 = arith.constant 22 : index
    %c0_527 = arith.constant 0 : index
    %c0_528 = arith.constant 0 : index
    %685 = vector.load %arg8[%c22_526, %c0_527, %c0_528] : memref<27x8x4xbf16, #tpu.memory_space<vmem>>, vector<1x8x4xbf16>
    %686 = vector.shape_cast %685 : vector<1x8x4xbf16> to vector<8x4xbf16>
    %687 = vector.extract_strided_slice %573 {offsets = [0, 228], sizes = [4, 800], strides = [1, 1]} : vector<4x1152xbf16> to vector<4x800xbf16>
    %cst_529 = arith.constant dense<0.000000e+00> : vector<8x800xf32>
    %688 = tpu.matmul %686, %687, %cst_529 {dimension_numbers = #tpu.dot_dimension_numbers<[1], [0], [0], [1], [0, 0, 1, 1], [], []>} : vector<8x4xbf16>, vector<4x800xbf16>, vector<8x800xf32> -> vector<8x800xf32>
    %689 = arith.addf %684, %688 : vector<8x800xf32>
    %c23_530 = arith.constant 23 : index
    %c0_531 = arith.constant 0 : index
    %c0_532 = arith.constant 0 : index
    %690 = vector.load %arg8[%c23_530, %c0_531, %c0_532] : memref<27x8x4xbf16, #tpu.memory_space<vmem>>, vector<1x8x4xbf16>
    %691 = vector.shape_cast %690 : vector<1x8x4xbf16> to vector<8x4xbf16>
    %692 = vector.extract_strided_slice %573 {offsets = [0, 229], sizes = [4, 800], strides = [1, 1]} : vector<4x1152xbf16> to vector<4x800xbf16>
    %cst_533 = arith.constant dense<0.000000e+00> : vector<8x800xf32>
    %693 = tpu.matmul %691, %692, %cst_533 {dimension_numbers = #tpu.dot_dimension_numbers<[1], [0], [0], [1], [0, 0, 1, 1], [], []>} : vector<8x4xbf16>, vector<4x800xbf16>, vector<8x800xf32> -> vector<8x800xf32>
    %694 = arith.addf %689, %693 : vector<8x800xf32>
    %c24_534 = arith.constant 24 : index
    %c0_535 = arith.constant 0 : index
    %c0_536 = arith.constant 0 : index
    %695 = vector.load %arg8[%c24_534, %c0_535, %c0_536] : memref<27x8x4xbf16, #tpu.memory_space<vmem>>, vector<1x8x4xbf16>
    %696 = vector.shape_cast %695 : vector<1x8x4xbf16> to vector<8x4xbf16>
    %697 = vector.extract_strided_slice %573 {offsets = [0, 237], sizes = [4, 800], strides = [1, 1]} : vector<4x1152xbf16> to vector<4x800xbf16>
    %cst_537 = arith.constant dense<0.000000e+00> : vector<8x800xf32>
    %698 = tpu.matmul %696, %697, %cst_537 {dimension_numbers = #tpu.dot_dimension_numbers<[1], [0], [0], [1], [0, 0, 1, 1], [], []>} : vector<8x4xbf16>, vector<4x800xbf16>, vector<8x800xf32> -> vector<8x800xf32>
    %699 = arith.addf %694, %698 : vector<8x800xf32>
    %c25_538 = arith.constant 25 : index
    %c0_539 = arith.constant 0 : index
    %c0_540 = arith.constant 0 : index
    %700 = vector.load %arg8[%c25_538, %c0_539, %c0_540] : memref<27x8x4xbf16, #tpu.memory_space<vmem>>, vector<1x8x4xbf16>
    %701 = vector.shape_cast %700 : vector<1x8x4xbf16> to vector<8x4xbf16>
    %702 = vector.extract_strided_slice %573 {offsets = [0, 238], sizes = [4, 800], strides = [1, 1]} : vector<4x1152xbf16> to vector<4x800xbf16>
    %cst_541 = arith.constant dense<0.000000e+00> : vector<8x800xf32>
    %703 = tpu.matmul %701, %702, %cst_541 {dimension_numbers = #tpu.dot_dimension_numbers<[1], [0], [0], [1], [0, 0, 1, 1], [], []>} : vector<8x4xbf16>, vector<4x800xbf16>, vector<8x800xf32> -> vector<8x800xf32>
    %704 = arith.addf %699, %703 : vector<8x800xf32>
    %c26_542 = arith.constant 26 : index
    %c0_543 = arith.constant 0 : index
    %c0_544 = arith.constant 0 : index
    %705 = vector.load %arg8[%c26_542, %c0_543, %c0_544] : memref<27x8x4xbf16, #tpu.memory_space<vmem>>, vector<1x8x4xbf16>
    %706 = vector.shape_cast %705 : vector<1x8x4xbf16> to vector<8x4xbf16>
    %707 = vector.extract_strided_slice %573 {offsets = [0, 239], sizes = [4, 800], strides = [1, 1]} : vector<4x1152xbf16> to vector<4x800xbf16>
    %cst_545 = arith.constant dense<0.000000e+00> : vector<8x800xf32>
    %708 = tpu.matmul %706, %707, %cst_545 {dimension_numbers = #tpu.dot_dimension_numbers<[1], [0], [0], [1], [0, 0, 1, 1], [], []>} : vector<8x4xbf16>, vector<4x800xbf16>, vector<8x800xf32> -> vector<8x800xf32>
    %709 = arith.addf %704, %708 : vector<8x800xf32>
    %710 = arith.truncf %709 : vector<8x800xf32> to vector<8x800xbf16>
    %711 = vector.broadcast %0 : vector<1x800xbf16> to vector<8x800xbf16>
    %712 = arith.mulf %710, %711 : vector<8x800xbf16>
    %c0_546 = arith.constant 0 : index
    %c128_547 = arith.constant 128 : index
    %713 = vector.load %arg11[%c0_546, %c128_547] : memref<8x1152xbf16, #tpu.memory_space<vmem>>, vector<8x800xbf16>
    tpu.vector_store %arg11[%c0_546, %c128_547], %712 {strides = array<i32>} : memref<8x1152xbf16, #tpu.memory_space<vmem>>, vector<8x800xbf16>,
    %c0_548 = arith.constant 0 : index
    %c0_549 = arith.constant 0 : index
    %714 = vector.load %arg11[%c0_548, %c0_549] : memref<8x1152xbf16, #tpu.memory_space<vmem>>, vector<8x1152xbf16>
    %cst_550 = arith.constant 0.000000e+00 : f32
    %715 = vector.broadcast %cst_550 : f32 to vector<8x800xf32>
    %c0_551 = arith.constant 0 : index
    %c0_552 = arith.constant 0 : index
    %c0_553 = arith.constant 0 : index
    %716 = vector.load %arg9[%c0_551, %c0_552, %c0_553] : memref<27x8x8xbf16, #tpu.memory_space<vmem>>, vector<1x8x8xbf16>
    %717 = vector.shape_cast %716 : vector<1x8x8xbf16> to vector<8x8xbf16>
    %718 = vector.extract_strided_slice %714 {offsets = [0, 17], sizes = [8, 800], strides = [1, 1]} : vector<8x1152xbf16> to vector<8x800xbf16>
    %cst_554 = arith.constant dense<0.000000e+00> : vector<8x800xf32>
    %719 = tpu.matmul %717, %718, %cst_554 {dimension_numbers = #tpu.dot_dimension_numbers<[1], [0], [0], [1], [0, 0, 1, 1], [], []>} : vector<8x8xbf16>, vector<8x800xbf16>, vector<8x800xf32> -> vector<8x800xf32>
    %720 = arith.addf %715, %719 : vector<8x800xf32>
    %c1_555 = arith.constant 1 : index
    %c0_556 = arith.constant 0 : index
    %c0_557 = arith.constant 0 : index
    %721 = vector.load %arg9[%c1_555, %c0_556, %c0_557] : memref<27x8x8xbf16, #tpu.memory_space<vmem>>, vector<1x8x8xbf16>
    %722 = vector.shape_cast %721 : vector<1x8x8xbf16> to vector<8x8xbf16>
    %723 = vector.extract_strided_slice %714 {offsets = [0, 18], sizes = [8, 800], strides = [1, 1]} : vector<8x1152xbf16> to vector<8x800xbf16>
    %cst_558 = arith.constant dense<0.000000e+00> : vector<8x800xf32>
    %724 = tpu.matmul %722, %723, %cst_558 {dimension_numbers = #tpu.dot_dimension_numbers<[1], [0], [0], [1], [0, 0, 1, 1], [], []>} : vector<8x8xbf16>, vector<8x800xbf16>, vector<8x800xf32> -> vector<8x800xf32>
    %725 = arith.addf %720, %724 : vector<8x800xf32>
    %c2_559 = arith.constant 2 : index
    %c0_560 = arith.constant 0 : index
    %c0_561 = arith.constant 0 : index
    %726 = vector.load %arg9[%c2_559, %c0_560, %c0_561] : memref<27x8x8xbf16, #tpu.memory_space<vmem>>, vector<1x8x8xbf16>
    %727 = vector.shape_cast %726 : vector<1x8x8xbf16> to vector<8x8xbf16>
    %728 = vector.extract_strided_slice %714 {offsets = [0, 19], sizes = [8, 800], strides = [1, 1]} : vector<8x1152xbf16> to vector<8x800xbf16>
    %cst_562 = arith.constant dense<0.000000e+00> : vector<8x800xf32>
    %729 = tpu.matmul %727, %728, %cst_562 {dimension_numbers = #tpu.dot_dimension_numbers<[1], [0], [0], [1], [0, 0, 1, 1], [], []>} : vector<8x8xbf16>, vector<8x800xbf16>, vector<8x800xf32> -> vector<8x800xf32>
    %730 = arith.addf %725, %729 : vector<8x800xf32>
    %c3_563 = arith.constant 3 : index
    %c0_564 = arith.constant 0 : index
    %c0_565 = arith.constant 0 : index
    %731 = vector.load %arg9[%c3_563, %c0_564, %c0_565] : memref<27x8x8xbf16, #tpu.memory_space<vmem>>, vector<1x8x8xbf16>
    %732 = vector.shape_cast %731 : vector<1x8x8xbf16> to vector<8x8xbf16>
    %733 = vector.extract_strided_slice %714 {offsets = [0, 27], sizes = [8, 800], strides = [1, 1]} : vector<8x1152xbf16> to vector<8x800xbf16>
    %cst_566 = arith.constant dense<0.000000e+00> : vector<8x800xf32>
    %734 = tpu.matmul %732, %733, %cst_566 {dimension_numbers = #tpu.dot_dimension_numbers<[1], [0], [0], [1], [0, 0, 1, 1], [], []>} : vector<8x8xbf16>, vector<8x800xbf16>, vector<8x800xf32> -> vector<8x800xf32>
    %735 = arith.addf %730, %734 : vector<8x800xf32>
    %c4_567 = arith.constant 4 : index
    %c0_568 = arith.constant 0 : index
    %c0_569 = arith.constant 0 : index
    %736 = vector.load %arg9[%c4_567, %c0_568, %c0_569] : memref<27x8x8xbf16, #tpu.memory_space<vmem>>, vector<1x8x8xbf16>
    %737 = vector.shape_cast %736 : vector<1x8x8xbf16> to vector<8x8xbf16>
    %738 = vector.extract_strided_slice %714 {offsets = [0, 28], sizes = [8, 800], strides = [1, 1]} : vector<8x1152xbf16> to vector<8x800xbf16>
    %cst_570 = arith.constant dense<0.000000e+00> : vector<8x800xf32>
    %739 = tpu.matmul %737, %738, %cst_570 {dimension_numbers = #tpu.dot_dimension_numbers<[1], [0], [0], [1], [0, 0, 1, 1], [], []>} : vector<8x8xbf16>, vector<8x800xbf16>, vector<8x800xf32> -> vector<8x800xf32>
    %740 = arith.addf %735, %739 : vector<8x800xf32>
    %c5_571 = arith.constant 5 : index
    %c0_572 = arith.constant 0 : index
    %c0_573 = arith.constant 0 : index
    %741 = vector.load %arg9[%c5_571, %c0_572, %c0_573] : memref<27x8x8xbf16, #tpu.memory_space<vmem>>, vector<1x8x8xbf16>
    %742 = vector.shape_cast %741 : vector<1x8x8xbf16> to vector<8x8xbf16>
    %743 = vector.extract_strided_slice %714 {offsets = [0, 29], sizes = [8, 800], strides = [1, 1]} : vector<8x1152xbf16> to vector<8x800xbf16>
    %cst_574 = arith.constant dense<0.000000e+00> : vector<8x800xf32>
    %744 = tpu.matmul %742, %743, %cst_574 {dimension_numbers = #tpu.dot_dimension_numbers<[1], [0], [0], [1], [0, 0, 1, 1], [], []>} : vector<8x8xbf16>, vector<8x800xbf16>, vector<8x800xf32> -> vector<8x800xf32>
    %745 = arith.addf %740, %744 : vector<8x800xf32>
    %c6_575 = arith.constant 6 : index
    %c0_576 = arith.constant 0 : index
    %c0_577 = arith.constant 0 : index
    %746 = vector.load %arg9[%c6_575, %c0_576, %c0_577] : memref<27x8x8xbf16, #tpu.memory_space<vmem>>, vector<1x8x8xbf16>
    %747 = vector.shape_cast %746 : vector<1x8x8xbf16> to vector<8x8xbf16>
    %748 = vector.extract_strided_slice %714 {offsets = [0, 37], sizes = [8, 800], strides = [1, 1]} : vector<8x1152xbf16> to vector<8x800xbf16>
    %cst_578 = arith.constant dense<0.000000e+00> : vector<8x800xf32>
    %749 = tpu.matmul %747, %748, %cst_578 {dimension_numbers = #tpu.dot_dimension_numbers<[1], [0], [0], [1], [0, 0, 1, 1], [], []>} : vector<8x8xbf16>, vector<8x800xbf16>, vector<8x800xf32> -> vector<8x800xf32>
    %750 = arith.addf %745, %749 : vector<8x800xf32>
    %c7_579 = arith.constant 7 : index
    %c0_580 = arith.constant 0 : index
    %c0_581 = arith.constant 0 : index
    %751 = vector.load %arg9[%c7_579, %c0_580, %c0_581] : memref<27x8x8xbf16, #tpu.memory_space<vmem>>, vector<1x8x8xbf16>
    %752 = vector.shape_cast %751 : vector<1x8x8xbf16> to vector<8x8xbf16>
    %753 = vector.extract_strided_slice %714 {offsets = [0, 38], sizes = [8, 800], strides = [1, 1]} : vector<8x1152xbf16> to vector<8x800xbf16>
    %cst_582 = arith.constant dense<0.000000e+00> : vector<8x800xf32>
    %754 = tpu.matmul %752, %753, %cst_582 {dimension_numbers = #tpu.dot_dimension_numbers<[1], [0], [0], [1], [0, 0, 1, 1], [], []>} : vector<8x8xbf16>, vector<8x800xbf16>, vector<8x800xf32> -> vector<8x800xf32>
    %755 = arith.addf %750, %754 : vector<8x800xf32>
    %c8_583 = arith.constant 8 : index
    %c0_584 = arith.constant 0 : index
    %c0_585 = arith.constant 0 : index
    %756 = vector.load %arg9[%c8_583, %c0_584, %c0_585] : memref<27x8x8xbf16, #tpu.memory_space<vmem>>, vector<1x8x8xbf16>
    %757 = vector.shape_cast %756 : vector<1x8x8xbf16> to vector<8x8xbf16>
    %758 = vector.extract_strided_slice %714 {offsets = [0, 39], sizes = [8, 800], strides = [1, 1]} : vector<8x1152xbf16> to vector<8x800xbf16>
    %cst_586 = arith.constant dense<0.000000e+00> : vector<8x800xf32>
    %759 = tpu.matmul %757, %758, %cst_586 {dimension_numbers = #tpu.dot_dimension_numbers<[1], [0], [0], [1], [0, 0, 1, 1], [], []>} : vector<8x8xbf16>, vector<8x800xbf16>, vector<8x800xf32> -> vector<8x800xf32>
    %760 = arith.addf %755, %759 : vector<8x800xf32>
    %c9_587 = arith.constant 9 : index
    %c0_588 = arith.constant 0 : index
    %c0_589 = arith.constant 0 : index
    %761 = vector.load %arg9[%c9_587, %c0_588, %c0_589] : memref<27x8x8xbf16, #tpu.memory_space<vmem>>, vector<1x8x8xbf16>
    %762 = vector.shape_cast %761 : vector<1x8x8xbf16> to vector<8x8xbf16>
    %763 = vector.extract_strided_slice %714 {offsets = [0, 117], sizes = [8, 800], strides = [1, 1]} : vector<8x1152xbf16> to vector<8x800xbf16>
    %cst_590 = arith.constant dense<0.000000e+00> : vector<8x800xf32>
    %764 = tpu.matmul %762, %763, %cst_590 {dimension_numbers = #tpu.dot_dimension_numbers<[1], [0], [0], [1], [0, 0, 1, 1], [], []>} : vector<8x8xbf16>, vector<8x800xbf16>, vector<8x800xf32> -> vector<8x800xf32>
    %765 = arith.addf %760, %764 : vector<8x800xf32>
    %c10_591 = arith.constant 10 : index
    %c0_592 = arith.constant 0 : index
    %c0_593 = arith.constant 0 : index
    %766 = vector.load %arg9[%c10_591, %c0_592, %c0_593] : memref<27x8x8xbf16, #tpu.memory_space<vmem>>, vector<1x8x8xbf16>
    %767 = vector.shape_cast %766 : vector<1x8x8xbf16> to vector<8x8xbf16>
    %768 = vector.extract_strided_slice %714 {offsets = [0, 118], sizes = [8, 800], strides = [1, 1]} : vector<8x1152xbf16> to vector<8x800xbf16>
    %cst_594 = arith.constant dense<0.000000e+00> : vector<8x800xf32>
    %769 = tpu.matmul %767, %768, %cst_594 {dimension_numbers = #tpu.dot_dimension_numbers<[1], [0], [0], [1], [0, 0, 1, 1], [], []>} : vector<8x8xbf16>, vector<8x800xbf16>, vector<8x800xf32> -> vector<8x800xf32>
    %770 = arith.addf %765, %769 : vector<8x800xf32>
    %c11_595 = arith.constant 11 : index
    %c0_596 = arith.constant 0 : index
    %c0_597 = arith.constant 0 : index
    %771 = vector.load %arg9[%c11_595, %c0_596, %c0_597] : memref<27x8x8xbf16, #tpu.memory_space<vmem>>, vector<1x8x8xbf16>
    %772 = vector.shape_cast %771 : vector<1x8x8xbf16> to vector<8x8xbf16>
    %773 = vector.extract_strided_slice %714 {offsets = [0, 119], sizes = [8, 800], strides = [1, 1]} : vector<8x1152xbf16> to vector<8x800xbf16>
    %cst_598 = arith.constant dense<0.000000e+00> : vector<8x800xf32>
    %774 = tpu.matmul %772, %773, %cst_598 {dimension_numbers = #tpu.dot_dimension_numbers<[1], [0], [0], [1], [0, 0, 1, 1], [], []>} : vector<8x8xbf16>, vector<8x800xbf16>, vector<8x800xf32> -> vector<8x800xf32>
    %775 = arith.addf %770, %774 : vector<8x800xf32>
    %c12_599 = arith.constant 12 : index
    %c0_600 = arith.constant 0 : index
    %c0_601 = arith.constant 0 : index
    %776 = vector.load %arg9[%c12_599, %c0_600, %c0_601] : memref<27x8x8xbf16, #tpu.memory_space<vmem>>, vector<1x8x8xbf16>
    %777 = vector.shape_cast %776 : vector<1x8x8xbf16> to vector<8x8xbf16>
    %778 = vector.extract_strided_slice %714 {offsets = [0, 127], sizes = [8, 800], strides = [1, 1]} : vector<8x1152xbf16> to vector<8x800xbf16>
    %cst_602 = arith.constant dense<0.000000e+00> : vector<8x800xf32>
    %779 = tpu.matmul %777, %778, %cst_602 {dimension_numbers = #tpu.dot_dimension_numbers<[1], [0], [0], [1], [0, 0, 1, 1], [], []>} : vector<8x8xbf16>, vector<8x800xbf16>, vector<8x800xf32> -> vector<8x800xf32>
    %780 = arith.addf %775, %779 : vector<8x800xf32>
    %c13_603 = arith.constant 13 : index
    %c0_604 = arith.constant 0 : index
    %c0_605 = arith.constant 0 : index
    %781 = vector.load %arg9[%c13_603, %c0_604, %c0_605] : memref<27x8x8xbf16, #tpu.memory_space<vmem>>, vector<1x8x8xbf16>
    %782 = vector.shape_cast %781 : vector<1x8x8xbf16> to vector<8x8xbf16>
    %783 = vector.extract_strided_slice %714 {offsets = [0, 128], sizes = [8, 800], strides = [1, 1]} : vector<8x1152xbf16> to vector<8x800xbf16>
    %cst_606 = arith.constant dense<0.000000e+00> : vector<8x800xf32>
    %784 = tpu.matmul %782, %783, %cst_606 {dimension_numbers = #tpu.dot_dimension_numbers<[1], [0], [0], [1], [0, 0, 1, 1], [], []>} : vector<8x8xbf16>, vector<8x800xbf16>, vector<8x800xf32> -> vector<8x800xf32>
    %785 = arith.addf %780, %784 : vector<8x800xf32>
    %c14_607 = arith.constant 14 : index
    %c0_608 = arith.constant 0 : index
    %c0_609 = arith.constant 0 : index
    %786 = vector.load %arg9[%c14_607, %c0_608, %c0_609] : memref<27x8x8xbf16, #tpu.memory_space<vmem>>, vector<1x8x8xbf16>
    %787 = vector.shape_cast %786 : vector<1x8x8xbf16> to vector<8x8xbf16>
    %788 = vector.extract_strided_slice %714 {offsets = [0, 129], sizes = [8, 800], strides = [1, 1]} : vector<8x1152xbf16> to vector<8x800xbf16>
    %cst_610 = arith.constant dense<0.000000e+00> : vector<8x800xf32>
    %789 = tpu.matmul %787, %788, %cst_610 {dimension_numbers = #tpu.dot_dimension_numbers<[1], [0], [0], [1], [0, 0, 1, 1], [], []>} : vector<8x8xbf16>, vector<8x800xbf16>, vector<8x800xf32> -> vector<8x800xf32>
    %790 = arith.addf %785, %789 : vector<8x800xf32>
    %c15_611 = arith.constant 15 : index
    %c0_612 = arith.constant 0 : index
    %c0_613 = arith.constant 0 : index
    %791 = vector.load %arg9[%c15_611, %c0_612, %c0_613] : memref<27x8x8xbf16, #tpu.memory_space<vmem>>, vector<1x8x8xbf16>
    %792 = vector.shape_cast %791 : vector<1x8x8xbf16> to vector<8x8xbf16>
    %793 = vector.extract_strided_slice %714 {offsets = [0, 137], sizes = [8, 800], strides = [1, 1]} : vector<8x1152xbf16> to vector<8x800xbf16>
    %cst_614 = arith.constant dense<0.000000e+00> : vector<8x800xf32>
    %794 = tpu.matmul %792, %793, %cst_614 {dimension_numbers = #tpu.dot_dimension_numbers<[1], [0], [0], [1], [0, 0, 1, 1], [], []>} : vector<8x8xbf16>, vector<8x800xbf16>, vector<8x800xf32> -> vector<8x800xf32>
    %795 = arith.addf %790, %794 : vector<8x800xf32>
    %c16_615 = arith.constant 16 : index
    %c0_616 = arith.constant 0 : index
    %c0_617 = arith.constant 0 : index
    %796 = vector.load %arg9[%c16_615, %c0_616, %c0_617] : memref<27x8x8xbf16, #tpu.memory_space<vmem>>, vector<1x8x8xbf16>
    %797 = vector.shape_cast %796 : vector<1x8x8xbf16> to vector<8x8xbf16>
    %798 = vector.extract_strided_slice %714 {offsets = [0, 138], sizes = [8, 800], strides = [1, 1]} : vector<8x1152xbf16> to vector<8x800xbf16>
    %cst_618 = arith.constant dense<0.000000e+00> : vector<8x800xf32>
    %799 = tpu.matmul %797, %798, %cst_618 {dimension_numbers = #tpu.dot_dimension_numbers<[1], [0], [0], [1], [0, 0, 1, 1], [], []>} : vector<8x8xbf16>, vector<8x800xbf16>, vector<8x800xf32> -> vector<8x800xf32>
    %800 = arith.addf %795, %799 : vector<8x800xf32>
    %c17_619 = arith.constant 17 : index
    %c0_620 = arith.constant 0 : index
    %c0_621 = arith.constant 0 : index
    %801 = vector.load %arg9[%c17_619, %c0_620, %c0_621] : memref<27x8x8xbf16, #tpu.memory_space<vmem>>, vector<1x8x8xbf16>
    %802 = vector.shape_cast %801 : vector<1x8x8xbf16> to vector<8x8xbf16>
    %803 = vector.extract_strided_slice %714 {offsets = [0, 139], sizes = [8, 800], strides = [1, 1]} : vector<8x1152xbf16> to vector<8x800xbf16>
    %cst_622 = arith.constant dense<0.000000e+00> : vector<8x800xf32>
    %804 = tpu.matmul %802, %803, %cst_622 {dimension_numbers = #tpu.dot_dimension_numbers<[1], [0], [0], [1], [0, 0, 1, 1], [], []>} : vector<8x8xbf16>, vector<8x800xbf16>, vector<8x800xf32> -> vector<8x800xf32>
    %805 = arith.addf %800, %804 : vector<8x800xf32>
    %c18_623 = arith.constant 18 : index
    %c0_624 = arith.constant 0 : index
    %c0_625 = arith.constant 0 : index
    %806 = vector.load %arg9[%c18_623, %c0_624, %c0_625] : memref<27x8x8xbf16, #tpu.memory_space<vmem>>, vector<1x8x8xbf16>
    %807 = vector.shape_cast %806 : vector<1x8x8xbf16> to vector<8x8xbf16>
    %808 = vector.extract_strided_slice %714 {offsets = [0, 217], sizes = [8, 800], strides = [1, 1]} : vector<8x1152xbf16> to vector<8x800xbf16>
    %cst_626 = arith.constant dense<0.000000e+00> : vector<8x800xf32>
    %809 = tpu.matmul %807, %808, %cst_626 {dimension_numbers = #tpu.dot_dimension_numbers<[1], [0], [0], [1], [0, 0, 1, 1], [], []>} : vector<8x8xbf16>, vector<8x800xbf16>, vector<8x800xf32> -> vector<8x800xf32>
    %810 = arith.addf %805, %809 : vector<8x800xf32>
    %c19_627 = arith.constant 19 : index
    %c0_628 = arith.constant 0 : index
    %c0_629 = arith.constant 0 : index
    %811 = vector.load %arg9[%c19_627, %c0_628, %c0_629] : memref<27x8x8xbf16, #tpu.memory_space<vmem>>, vector<1x8x8xbf16>
    %812 = vector.shape_cast %811 : vector<1x8x8xbf16> to vector<8x8xbf16>
    %813 = vector.extract_strided_slice %714 {offsets = [0, 218], sizes = [8, 800], strides = [1, 1]} : vector<8x1152xbf16> to vector<8x800xbf16>
    %cst_630 = arith.constant dense<0.000000e+00> : vector<8x800xf32>
    %814 = tpu.matmul %812, %813, %cst_630 {dimension_numbers = #tpu.dot_dimension_numbers<[1], [0], [0], [1], [0, 0, 1, 1], [], []>} : vector<8x8xbf16>, vector<8x800xbf16>, vector<8x800xf32> -> vector<8x800xf32>
    %815 = arith.addf %810, %814 : vector<8x800xf32>
    %c20_631 = arith.constant 20 : index
    %c0_632 = arith.constant 0 : index
    %c0_633 = arith.constant 0 : index
    %816 = vector.load %arg9[%c20_631, %c0_632, %c0_633] : memref<27x8x8xbf16, #tpu.memory_space<vmem>>, vector<1x8x8xbf16>
    %817 = vector.shape_cast %816 : vector<1x8x8xbf16> to vector<8x8xbf16>
    %818 = vector.extract_strided_slice %714 {offsets = [0, 219], sizes = [8, 800], strides = [1, 1]} : vector<8x1152xbf16> to vector<8x800xbf16>
    %cst_634 = arith.constant dense<0.000000e+00> : vector<8x800xf32>
    %819 = tpu.matmul %817, %818, %cst_634 {dimension_numbers = #tpu.dot_dimension_numbers<[1], [0], [0], [1], [0, 0, 1, 1], [], []>} : vector<8x8xbf16>, vector<8x800xbf16>, vector<8x800xf32> -> vector<8x800xf32>
    %820 = arith.addf %815, %819 : vector<8x800xf32>
    %c21_635 = arith.constant 21 : index
    %c0_636 = arith.constant 0 : index
    %c0_637 = arith.constant 0 : index
    %821 = vector.load %arg9[%c21_635, %c0_636, %c0_637] : memref<27x8x8xbf16, #tpu.memory_space<vmem>>, vector<1x8x8xbf16>
    %822 = vector.shape_cast %821 : vector<1x8x8xbf16> to vector<8x8xbf16>
    %823 = vector.extract_strided_slice %714 {offsets = [0, 227], sizes = [8, 800], strides = [1, 1]} : vector<8x1152xbf16> to vector<8x800xbf16>
    %cst_638 = arith.constant dense<0.000000e+00> : vector<8x800xf32>
    %824 = tpu.matmul %822, %823, %cst_638 {dimension_numbers = #tpu.dot_dimension_numbers<[1], [0], [0], [1], [0, 0, 1, 1], [], []>} : vector<8x8xbf16>, vector<8x800xbf16>, vector<8x800xf32> -> vector<8x800xf32>
    %825 = arith.addf %820, %824 : vector<8x800xf32>
    %c22_639 = arith.constant 22 : index
    %c0_640 = arith.constant 0 : index
    %c0_641 = arith.constant 0 : index
    %826 = vector.load %arg9[%c22_639, %c0_640, %c0_641] : memref<27x8x8xbf16, #tpu.memory_space<vmem>>, vector<1x8x8xbf16>
    %827 = vector.shape_cast %826 : vector<1x8x8xbf16> to vector<8x8xbf16>
    %828 = vector.extract_strided_slice %714 {offsets = [0, 228], sizes = [8, 800], strides = [1, 1]} : vector<8x1152xbf16> to vector<8x800xbf16>
    %cst_642 = arith.constant dense<0.000000e+00> : vector<8x800xf32>
    %829 = tpu.matmul %827, %828, %cst_642 {dimension_numbers = #tpu.dot_dimension_numbers<[1], [0], [0], [1], [0, 0, 1, 1], [], []>} : vector<8x8xbf16>, vector<8x800xbf16>, vector<8x800xf32> -> vector<8x800xf32>
    %830 = arith.addf %825, %829 : vector<8x800xf32>
    %c23_643 = arith.constant 23 : index
    %c0_644 = arith.constant 0 : index
    %c0_645 = arith.constant 0 : index
    %831 = vector.load %arg9[%c23_643, %c0_644, %c0_645] : memref<27x8x8xbf16, #tpu.memory_space<vmem>>, vector<1x8x8xbf16>
    %832 = vector.shape_cast %831 : vector<1x8x8xbf16> to vector<8x8xbf16>
    %833 = vector.extract_strided_slice %714 {offsets = [0, 229], sizes = [8, 800], strides = [1, 1]} : vector<8x1152xbf16> to vector<8x800xbf16>
    %cst_646 = arith.constant dense<0.000000e+00> : vector<8x800xf32>
    %834 = tpu.matmul %832, %833, %cst_646 {dimension_numbers = #tpu.dot_dimension_numbers<[1], [0], [0], [1], [0, 0, 1, 1], [], []>} : vector<8x8xbf16>, vector<8x800xbf16>, vector<8x800xf32> -> vector<8x800xf32>
    %835 = arith.addf %830, %834 : vector<8x800xf32>
    %c24_647 = arith.constant 24 : index
    %c0_648 = arith.constant 0 : index
    %c0_649 = arith.constant 0 : index
    %836 = vector.load %arg9[%c24_647, %c0_648, %c0_649] : memref<27x8x8xbf16, #tpu.memory_space<vmem>>, vector<1x8x8xbf16>
    %837 = vector.shape_cast %836 : vector<1x8x8xbf16> to vector<8x8xbf16>
    %838 = vector.extract_strided_slice %714 {offsets = [0, 237], sizes = [8, 800], strides = [1, 1]} : vector<8x1152xbf16> to vector<8x800xbf16>
    %cst_650 = arith.constant dense<0.000000e+00> : vector<8x800xf32>
    %839 = tpu.matmul %837, %838, %cst_650 {dimension_numbers = #tpu.dot_dimension_numbers<[1], [0], [0], [1], [0, 0, 1, 1], [], []>} : vector<8x8xbf16>, vector<8x800xbf16>, vector<8x800xf32> -> vector<8x800xf32>
    %840 = arith.addf %835, %839 : vector<8x800xf32>
    %c25_651 = arith.constant 25 : index
    %c0_652 = arith.constant 0 : index
    %c0_653 = arith.constant 0 : index
    %841 = vector.load %arg9[%c25_651, %c0_652, %c0_653] : memref<27x8x8xbf16, #tpu.memory_space<vmem>>, vector<1x8x8xbf16>
    %842 = vector.shape_cast %841 : vector<1x8x8xbf16> to vector<8x8xbf16>
    %843 = vector.extract_strided_slice %714 {offsets = [0, 238], sizes = [8, 800], strides = [1, 1]} : vector<8x1152xbf16> to vector<8x800xbf16>
    %cst_654 = arith.constant dense<0.000000e+00> : vector<8x800xf32>
    %844 = tpu.matmul %842, %843, %cst_654 {dimension_numbers = #tpu.dot_dimension_numbers<[1], [0], [0], [1], [0, 0, 1, 1], [], []>} : vector<8x8xbf16>, vector<8x800xbf16>, vector<8x800xf32> -> vector<8x800xf32>
    %845 = arith.addf %840, %844 : vector<8x800xf32>
    %c26_655 = arith.constant 26 : index
    %c0_656 = arith.constant 0 : index
    %c0_657 = arith.constant 0 : index
    %846 = vector.load %arg9[%c26_655, %c0_656, %c0_657] : memref<27x8x8xbf16, #tpu.memory_space<vmem>>, vector<1x8x8xbf16>
    %847 = vector.shape_cast %846 : vector<1x8x8xbf16> to vector<8x8xbf16>
    %848 = vector.extract_strided_slice %714 {offsets = [0, 239], sizes = [8, 800], strides = [1, 1]} : vector<8x1152xbf16> to vector<8x800xbf16>
    %cst_658 = arith.constant dense<0.000000e+00> : vector<8x800xf32>
    %849 = tpu.matmul %847, %848, %cst_658 {dimension_numbers = #tpu.dot_dimension_numbers<[1], [0], [0], [1], [0, 0, 1, 1], [], []>} : vector<8x8xbf16>, vector<8x800xbf16>, vector<8x800xf32> -> vector<8x800xf32>
    %850 = arith.addf %845, %849 : vector<8x800xf32>
    %851 = tpu.concatenate %4, %4 in 0 : vector<4x800xf32>, vector<4x800xf32> -> vector<8x800xf32>
    %852 = arith.addf %851, %850 : vector<8x800xf32>
    %c0_659 = arith.constant 0 : index
    %c0_660 = arith.constant 0 : index
    %c0_661 = arith.constant 0 : index
    %853 = vector.load %arg10[%c0_659, %c0_660, %c0_661] : memref<1x8x800xf32, #tpu.memory_space<vmem>>, vector<1x8x800xf32>
    %854 = vector.shape_cast %853 : vector<1x8x800xf32> to vector<8x800xf32>
    %855 = vector.shape_cast %852 : vector<8x800xf32> to vector<1x8x800xf32>
    tpu.vector_store %arg10[%c0_659, %c0_660, %c0_661], %855 {strides = array<i32>} : memref<1x8x800xf32, #tpu.memory_space<vmem>>, vector<1x8x800xf32>,
    return
  }
  func.func @transform_0(%arg0: i32) -> (i32, i32, i32) {
    %c0_i32 = arith.constant 0 : i32
    %c0_i32_0 = arith.constant 0 : i32
    %c0_i32_1 = arith.constant 0 : i32
    return %arg0, %c0_i32, %c0_i32_0 : i32, i32, i32
  }
  func.func @transform_1(%arg0: i32) -> (i32, i32, i32) {
    %c0_i32 = arith.constant 0 : i32
    %c0_i32_0 = arith.constant 0 : i32
    %c0_i32_1 = arith.constant 0 : i32
    return %arg0, %c0_i32, %c0_i32_0 : i32, i32, i32
  }
  func.func @transform_2(%arg0: i32) -> (i32, i32) {
    %c0_i32 = arith.constant 0 : i32
    %c0_i32_0 = arith.constant 0 : i32
    %c0_i32_1 = arith.constant 0 : i32
    return %c0_i32, %c0_i32_0 : i32, i32
  }
  func.func @transform_3(%arg0: i32) -> (i32, i32, i32) {
    %c0_i32 = arith.constant 0 : i32
    %c0_i32_0 = arith.constant 0 : i32
    %c0_i32_1 = arith.constant 0 : i32
    %c0_i32_2 = arith.constant 0 : i32
    return %c0_i32, %c0_i32_0, %c0_i32_1 : i32, i32, i32
  }
  func.func @transform_4(%arg0: i32) -> (i32, i32, i32) {
    %c0_i32 = arith.constant 0 : i32
    %c0_i32_0 = arith.constant 0 : i32
    %c0_i32_1 = arith.constant 0 : i32
    %c0_i32_2 = arith.constant 0 : i32
    return %c0_i32, %c0_i32_0, %c0_i32_1 : i32, i32, i32
  }
  func.func @transform_5(%arg0: i32) -> (i32, i32, i32) {
    %c0_i32 = arith.constant 0 : i32
    %c0_i32_0 = arith.constant 0 : i32
    %c0_i32_1 = arith.constant 0 : i32
    %c0_i32_2 = arith.constant 0 : i32
    return %c0_i32, %c0_i32_0, %c0_i32_1 : i32, i32, i32
  }
  func.func @transform_6(%arg0: i32) -> (i32, i32, i32) {
    %c0_i32 = arith.constant 0 : i32
    %c0_i32_0 = arith.constant 0 : i32
    %c0_i32_1 = arith.constant 0 : i32
    %c0_i32_2 = arith.constant 0 : i32
    return %c0_i32, %c0_i32_0, %c0_i32_1 : i32, i32, i32
  }
  func.func @transform_7(%arg0: i32) -> (i32, i32, i32) {
    %c0_i32 = arith.constant 0 : i32
    %c0_i32_0 = arith.constant 0 : i32
    %c0_i32_1 = arith.constant 0 : i32
    %c0_i32_2 = arith.constant 0 : i32
    return %c0_i32, %c0_i32_0, %c0_i32_1 : i32, i32, i32
  }
  func.func @transform_8(%arg0: i32) -> (i32, i32, i32) {
    %c0_i32 = arith.constant 0 : i32
    %c0_i32_0 = arith.constant 0 : i32
    %c0_i32_1 = arith.constant 0 : i32
    %c0_i32_2 = arith.constant 0 : i32
    return %c0_i32, %c0_i32_0, %c0_i32_1 : i32, i32, i32
  }
  func.func @transform_9(%arg0: i32) -> (i32, i32, i32) {
    %c0_i32 = arith.constant 0 : i32
    %c0_i32_0 = arith.constant 0 : i32
    %c0_i32_1 = arith.constant 0 : i32
    return %arg0, %c0_i32, %c0_i32_0 : i32, i32, i32
  }
}

</mosaic_0001>

<llo_original>
// kernel: tile.6
$region0: #{tile.6}
  #allocation0 [shape = 's32[1]{0}', space=sflag, size = 0x4, scoped, tag = 'scoped memory for tile.6']
  %s0 = inlined_call_operand.vmem [shape: bf16[100], index: 0, kind: input, shape index: {}]
  %s1 = inlined_call_operand.vmem [shape: bf16[8,100], index: 1, kind: output, shape index: {}]
  // Predicated region
  $region2: #{tile.6} parent=0 // pred_check
    _
  $region3: #{tile.6} parent=0 // pred_check_branch
    %3 = sbr.rel (0) target = $region5
  $region4: #{tile.6} parent=0 // pred_region
    _
  $region5: #{tile.6} parent=0 // pred_fallthru
    _
  %v4 = vld [vmem:[%s0] ss:$0 sm:$0xff]
  %v5 = vunpack.i.l.bf16 %v4
  %v7 = vunpack.i.h.bf16 %v4
  %v9 = vpack.c.bf16 0.0, %v5
  %10 = vst [vmem:[%s1] sm:$0xf] %v9

// kernel: tile.5
$region0: #{tile.5}
  %s0 = inlined_call_operand.vmem [shape: bf16[10,10], index: 0, kind: input, shape index: {}]
  %s1 = inlined_call_operand.vmem [shape: bf16[100], index: 1, kind: output, shape index: {}]
  $region1: #{tile.5} parent=0
    #allocation0 [shape = 'u8[4096]{0}', space=vmem, size = 0x1000, scoped, tag = 'scoped mem for output reshape']
    #allocation1 [shape = 'u8[8192]{0}', space=vmem, size = 0x2000, scoped, tag = 'scoped mem for input reshape']
    %s3 = smul.u32 4, 2
    %s4 = sshllo.u32 0, %s3
    %s5 = scalar_lea.vmem %s0, 4
    %s6 = sshrl.u32 %s4, 1
    %s7 = sor.u32 %s4, %s6
    %s8 = sand.u32 %s7, 85
    %s9 = sshrl.u32 %s8, 1
    %s10 = sor.u32 %s8, %s9
    %s11 = sand.u32 51, %s10
    %s12 = sshrl.u32 %s11, 2
    %s13 = sor.u32 %s11, %s12
    %s14 = sand.u32 15, %s13
    %v15 = vld [vmem:[%s5] sm:%s14]
    %v16 = vunpack.c.l.bf16 %v15
    %v17 = vunpack.c.h.bf16 %v15
    %s18 = scalar_lea.vmem [#allocation1], 8
    %19 = vst [vmem:[%s18] sm:%s4] %v16
    %s20 = sshrl.u32 %s4, 1
    %s21 = sor.u32 %s4, %s20
    %s22 = sand.u32 %s21, 85
    %s23 = sshrl.u32 %s22, 1
    %s24 = sor.u32 %s22, %s23
    %s25 = sand.u32 51, %s24
    %s26 = sshrl.u32 %s25, 2
    %s27 = sor.u32 %s25, %s26
    %s28 = sand.u32 15, %s27
    %v29 = vld [vmem:[%s0] sm:%s28]
    %v30 = vunpack.c.l.bf16 %v29
    %v31 = vunpack.c.h.bf16 %v29
    %32 = vst [vmem:[#allocation1] sm:%s4] %v30
    %v33 = vld [vmem:[#allocation1] sm:$0x1]
    %vm34 = vcmask 80896
    %35 = vst.msk [vmem:[#allocation0] sm:$0x1] %vm34, %v33
    %s36 = scalar_lea.vmem [#allocation1], 9
    %v37 = vld [vmem:[%s36] sm:$0x1]
    %38 = vrot.lane.b32.xlu0 %v37, 90
    %v39 = vpop.permute.xlu0 %38
    %vm40 = vcmask 818896
    %41 = vst.msk [vmem:[#allocation0] sm:$0x1] %vm40, %v39
    %s42 = scalar_lea.vmem [#allocation1], 8
    %v43 = vld [vmem:[%s42] sm:$0x1]
    %44 = vrot.lane.b32.xlu0 %v43, 80
    %v45 = vpop.permute.xlu0 %44
    %vm46 = vcmask 736896
    %47 = vst.msk [vmem:[#allocation0] sm:$0x1] %vm46, %v45
    %s48 = scalar_lea.vmem [#allocation1], 7
    %v49 = vld [vmem:[%s48] sm:$0x1]
    %50 = vrot.lane.b32.xlu0 %v49, 70
    %v51 = vpop.permute.xlu0 %50
    %vm52 = vcmask 654896
    %53 = vst.msk [vmem:[#allocation0] sm:$0x1] %vm52, %v51
    %s54 = scalar_lea.vmem [#allocation1], 6
    %v55 = vld [vmem:[%s54] sm:$0x1]
    %56 = vrot.lane.b32.xlu0 %v55, 60
    %v57 = vpop.permute.xlu0 %56
    %vm58 = vcmask 572896
    %59 = vst.msk [vmem:[#allocation0] sm:$0x1] %vm58, %v57
    %s60 = scalar_lea.vmem [#allocation1], 5
    %v61 = vld [vmem:[%s60] sm:$0x1]
    %62 = vrot.lane.b32.xlu0 %v61, 50
    %v63 = vpop.permute.xlu0 %62
    %vm64 = vcmask 490896
    %65 = vst.msk [vmem:[#allocation0] sm:$0x1] %vm64, %v63
    %s66 = scalar_lea.vmem [#allocation1], 4
    %v67 = vld [vmem:[%s66] sm:$0x1]
    %68 = vrot.lane.b32.xlu0 %v67, 40
    %v69 = vpop.permute.xlu0 %68
    %vm70 = vcmask 408896
    %71 = vst.msk [vmem:[#allocation0] sm:$0x1] %vm70, %v69
    %s72 = scalar_lea.vmem [#allocation1], 3
    %v73 = vld [vmem:[%s72] sm:$0x1]
    %74 = vrot.lane.b32.xlu0 %v73, 30
    %v75 = vpop.permute.xlu0 %74
    %vm76 = vcmask 326896
    %77 = vst.msk [vmem:[#allocation0] sm:$0x1] %vm76, %v75
    %s78 = scalar_lea.vmem [#allocation1], 2
    %v79 = vld [vmem:[%s78] sm:$0x1]
    %80 = vrot.lane.b32.xlu0 %v79, 20
    %v81 = vpop.permute.xlu0 %80
    %vm82 = vcmask 244896
    %83 = vst.msk [vmem:[#allocation0] sm:$0x1] %vm82, %v81
    %s84 = scalar_lea.vmem [#allocation1], 1
    %v85 = vld [vmem:[%s84] sm:$0x1]
    %86 = vrot.lane.b32.xlu0 %v85, 10
    %v87 = vpop.permute.xlu0 %86
    %vm88 = vcmask 162896
    %89 = vst.msk [vmem:[#allocation0] sm:$0x1] %vm88, %v87
    %s91 = smul.u32 1, 2
    %s92 = sshllo.u32 0, %s91
    %s93 = sshrl.u32 %s91, 1
    %v94 = vld [vmem:[#allocation0] sm:%s92]
    %v95 = vpack.c.bf16 0.0, %v94
    %s96 = sshllo.u32 0, %s93
    %97 = vst [vmem:[%s1] sm:%s96] %v95

// kernel: tile.7
$region0: #{tile.7}
  %s0 = inlined_call_operand.vmem [shape: bf16[8,100], index: 0, kind: input, shape index: {}]
  %s1 = inlined_call_operand.vmem [shape: bf16[1,800], index: 1, kind: output, shape index: {}]
  $region1: #{tile.7} parent=0
    #allocation0 [shape = 'u8[28672]{0}', space=vmem, size = 0x7000, scoped, tag = 'scoped mem for output reshape']
    #allocation1 [shape = 'u8[4096]{0}', space=vmem, size = 0x1000, scoped, tag = 'scoped mem for input reshape']
    %s3 = smul.u32 4, 2
    %s4 = sshllo.u32 0, %s3
    %s5 = sshrl.u32 %s4, 1
    %s6 = sor.u32 %s4, %s5
    %s7 = sand.u32 %s6, 85
    %s8 = sshrl.u32 %s7, 1
    %s9 = sor.u32 %s7, %s8
    %s10 = sand.u32 51, %s9
    %s11 = sshrl.u32 %s10, 2
    %s12 = sor.u32 %s10, %s11
    %s13 = sand.u32 15, %s12
    %v14 = vld [vmem:[%s0] sm:%s13]
    %v15 = vunpack.c.l.bf16 %v14
    %v16 = vunpack.c.h.bf16 %v14
    %17 = vst [vmem:[#allocation1] sm:%s4] %v15
    %v18 = vld [vmem:[#allocation1] sm:$0x1]
    %vm19 = vcmask 818176
    %20 = vst.msk [vmem:[#allocation0] sm:$0x1] %vm19, %v18
    %s21 = scalar_lea.vmem [#allocation1], 5
    %v22 = vld [vmem:[%s21] sm:$0x1]
    %s23 = scalar_lea.vmem [#allocation1], 5
    %v24 = vld [vmem:[%s23] sm:$0x1]
    %vm25 = vcmask 97280
    %v26 = vsel %vm25, %v24, %v22
    %27 = vrot.lane.b32.xlu0 %v26, 116
    %v28 = vpop.permute.xlu0 %27
    %vm29 = vcmask 719872
    %s30 = scalar_lea.vmem [#allocation0], 32
    %31 = vst.msk [vmem:[%s30] sm:$0x1] %vm29, %v28
    %vm32 = vcmask 1048480
    %s33 = scalar_lea.vmem [#allocation0], 24
    %34 = vst.msk [vmem:[%s33] sm:$0x1] %vm32, %v28
    %s35 = scalar_lea.vmem [#allocation1], 1
    %v36 = vld [vmem:[%s35] sm:$0x1]
    %s37 = scalar_lea.vmem [#allocation1], 1
    %v38 = vld [vmem:[%s37] sm:$0x1]
    %vm39 = vcmask 228352
    %v40 = vsel %vm39, %v38, %v36
    %41 = vrot.lane.b32.xlu0 %v40, 100
    %v42 = vpop.permute.xlu0 %41
    %vm43 = vcmask 588800
    %s44 = scalar_lea.vmem [#allocation0], 8
    %45 = vst.msk [vmem:[%s44] sm:$0x1] %vm43, %v42
    %vm46 = vcmask 1048352
    %47 = vst.msk [vmem:[#allocation0] sm:$0x1] %vm46, %v42
    %s48 = scalar_lea.vmem [#allocation1], 6
    %v49 = vld [vmem:[%s48] sm:$0x1]
    %s50 = scalar_lea.vmem [#allocation1], 6
    %v51 = vld [vmem:[%s50] sm:$0x1]
    %vm52 = vcmask 326656
    %v53 = vsel %vm52, %v51, %v49
    %54 = vrot.lane.b32.xlu0 %v53, 88
    %v55 = vpop.permute.xlu0 %54
    %vm56 = vcmask 490496
    %s57 = scalar_lea.vmem [#allocation0], 40
    %58 = vst.msk [vmem:[%s57] sm:$0x1] %vm56, %v55
    %vm59 = vcmask 1048256
    %s60 = scalar_lea.vmem [#allocation0], 32
    %61 = vst.msk [vmem:[%s60] sm:$0x1] %vm59, %v55
    %s62 = scalar_lea.vmem [#allocation1], 2
    %v63 = vld [vmem:[%s62] sm:$0x1]
    %s64 = scalar_lea.vmem [#allocation1], 2
    %v65 = vld [vmem:[%s64] sm:$0x1]
    %vm66 = vcmask 457728
    %v67 = vsel %vm66, %v65, %v63
    %68 = vrot.lane.b32.xlu0 %v67, 72
    %v69 = vpop.permute.xlu0 %68
    %vm70 = vcmask 359424
    %s71 = scalar_lea.vmem [#allocation0], 16
    %72 = vst.msk [vmem:[%s71] sm:$0x1] %vm70, %v69
    %vm73 = vcmask 1048128
    %s74 = scalar_lea.vmem [#allocation0], 8
    %75 = vst.msk [vmem:[%s74] sm:$0x1] %vm73, %v69
    %s76 = scalar_lea.vmem [#allocation1], 7
    %v77 = vld [vmem:[%s76] sm:$0x1]
    %s78 = scalar_lea.vmem [#allocation1], 7
    %v79 = vld [vmem:[%s78] sm:$0x1]
    %vm80 = vcmask 556032
    %v81 = vsel %vm80, %v79, %v77
    %82 = vrot.lane.b32.xlu0 %v81, 60
    %v83 = vpop.permute.xlu0 %82
    %vm84 = vcmask 261120
    %s85 = scalar_lea.vmem [#allocation0], 48
    %86 = vst.msk [vmem:[%s85] sm:$0x1] %vm84, %v83
    %vm87 = vcmask 1048032
    %s88 = scalar_lea.vmem [#allocation0], 40
    %89 = vst.msk [vmem:[%s88] sm:$0x1] %vm87, %v83
    %s90 = scalar_lea.vmem [#allocation1], 3
    %v91 = vld [vmem:[%s90] sm:$0x1]
    %s92 = scalar_lea.vmem [#allocation1], 3
    %v93 = vld [vmem:[%s92] sm:$0x1]
    %vm94 = vcmask 687104
    %v95 = vsel %vm94, %v93, %v91
    %96 = vrot.lane.b32.xlu0 %v95, 44
    %v97 = vpop.permute.xlu0 %96
    %vm98 = vcmask 130048
    %s99 = scalar_lea.vmem [#allocation0], 24
    %100 = vst.msk [vmem:[%s99] sm:$0x1] %vm98, %v97
    %vm101 = vcmask 1047904
    %s102 = scalar_lea.vmem [#allocation0], 16
    %103 = vst.msk [vmem:[%s102] sm:$0x1] %vm101, %v97
    %s104 = scalar_lea.vmem [#allocation1], 4
    %v105 = vld [vmem:[%s104] sm:$0x1]
    %106 = vrot.lane.b32.xlu0 %v105, 16
    %v107 = vpop.permute.xlu0 %106
    %vm108 = vcmask 949376
    %s109 = scalar_lea.vmem [#allocation0], 24
    %110 = vst.msk [vmem:[%s109] sm:$0x1] %vm108, %v107
    %s112 = smul.u32 1, 2
    %s113 = sshllo.u32 0, %s112
    %s114 = sshrl.u32 %s112, 1
    %v115 = vld [vmem:[#allocation0] sm:%s113]
    %v116 = vpack.c.bf16 0.0, %v115
    %s117 = sshllo.u32 0, %s114
    %118 = vst [vmem:[%s1] sm:%s117] %v116
    %s119 = scalar_lea.vmem [#allocation0], 8
    %v120 = vld [vmem:[%s119] sm:%s113]
    %v121 = vpack.c.bf16 0.0, %v120
    %s122 = sshllo.u32 0, %s114
    %s123 = scalar_lea.vmem %s1, 1
    %124 = vst [vmem:[%s123] sm:%s122] %v121
    %s125 = scalar_lea.vmem [#allocation0], 16
    %v126 = vld [vmem:[%s125] sm:%s113]
    %v127 = vpack.c.bf16 0.0, %v126
    %s128 = sshllo.u32 0, %s114
    %s129 = smul.addr 1, 2
    %s130 = scalar_lea.vmem %s1, %s129
    %131 = vst [vmem:[%s130] sm:%s128] %v127
    %s132 = scalar_lea.vmem [#allocation0], 24
    %v133 = vld [vmem:[%s132] sm:%s113]
    %v134 = vpack.c.bf16 0.0, %v133
    %s135 = sshllo.u32 0, %s114
    %s136 = smul.addr 1, 3
    %s137 = scalar_lea.vmem %s1, %s136
    %138 = vst [vmem:[%s137] sm:%s135] %v134
    %s139 = scalar_lea.vmem [#allocation0], 32
    %v140 = vld [vmem:[%s139] sm:%s113]
    %v141 = vpack.c.bf16 0.0, %v140
    %s142 = sshllo.u32 0, %s114
    %s143 = smul.addr 1, 4
    %s144 = scalar_lea.vmem %s1, %s143
    %145 = vst [vmem:[%s144] sm:%s142] %v141
    %s146 = scalar_lea.vmem [#allocation0], 40
    %v147 = vld [vmem:[%s146] sm:%s113]
    %v148 = vpack.c.bf16 0.0, %v147
    %s149 = sshllo.u32 0, %s114
    %s150 = smul.addr 1, 5
    %s151 = scalar_lea.vmem %s1, %s150
    %152 = vst [vmem:[%s151] sm:%s149] %v148
    %s153 = scalar_lea.vmem [#allocation0], 48
    %v154 = vld [vmem:[%s153] sm:%s113]
    %v155 = vpack.c.bf16 0.0, %v154
    %s156 = sshllo.u32 0, %s114
    %s157 = smul.addr 1, 6
    %s158 = scalar_lea.vmem %s1, %s157
    %159 = vst [vmem:[%s158] sm:%s156] %v155

</llo_original>
